<compile_context>
chip_gen: v7x
topology: tpu7x:2x2x1
jax: 0.10.0
libtpu: 0.0.40
codegen_flags: <defaults>
</compile_context>

<pallas_src>
import jax
import jax.numpy as jnp
from jax import lax
from jax.experimental import pallas as pl
from jax.experimental.pallas import tpu as pltpu


def _block_kernel(xpad_ref, x_ref, w_ref, b_ref, out_ref, buf_ref):
    # xpad_ref: (Dp, Hp, Wp*C)      zero-padded input, channels folded into lanes
    # x_ref   : (D,  H,  W*C)       unpadded input (residual)
    # w_ref   : (4, 9, Wp*C, Wp*C)  block-Toeplitz conv matrices (kw + Cin fused)
    # b_ref   : (4, Wp*C)           biases tiled over W (zero on W-halo columns)
    # out_ref : (D,  H,  W*C)
    # buf_ref : (Dp, Hp, Wp*C)      padded activation scratch
    D, H, WC = out_ref.shape
    Dp, Hp, WpC = buf_ref.shape
    C = (WpC - WC) // 2

    # Zero only the thin D/H halo faces of the scratch.  Interior rows are
    # fully rewritten every layer at padded width and their W-halo columns are
    # exact zeros by construction, so no full-buffer re-init / staging copy.
    buf_ref[0:1, :, :] = jnp.zeros((1, Hp, WpC), buf_ref.dtype)
    buf_ref[Dp - 1:Dp, :, :] = jnp.zeros((1, Hp, WpC), buf_ref.dtype)
    buf_ref[1:1 + D, 0:1, :] = jnp.zeros((D, 1, WpC), buf_ref.dtype)
    buf_ref[1:1 + D, Hp - 1:Hp, :] = jnp.zeros((D, 1, WpC), buf_ref.dtype)

    act = None
    for layer in range(4):
        src = xpad_ref if layer == 0 else buf_ref   # layer 0 reads input directly
        acc = None
        for t in range(9):                          # 9 (kd, kh) tap pairs
            kd, kh = divmod(t, 3)
            slab = src[kd:kd + D, kh:kh + H, :].reshape(D * H, WpC)
            part = jnp.dot(slab, w_ref[layer, t, :, :],
                           preferred_element_type=jnp.float32)
            acc = part if acc is None else acc + part
        act = jnp.maximum(acc + b_ref[layer:layer + 1, :], 0.0)   # bias once + ReLU
        if layer < 3:
            # re-pad for the next conv: full-width interior-row store only
            buf_ref[1:1 + D, 1:1 + H, :] = act.reshape(D, H, WpC)

    # Final epilogue: W-interior columns + residual, single full-width store.
    res = x_ref[...].reshape(D * H, WC)
    out = act[:, C:C + WC] + res
    out_ref[...] = out.reshape(D, H, WC).astype(out_ref.dtype)


def _round_up(v, m):
    return -(-v // m) * m


def _vmem_block_bytes(shape, itemsize=4):
    s = list(shape)
    if len(s) >= 2:
        s[-2] = _round_up(s[-2], 8)
    s[-1] = _round_up(s[-1], 128)
    n = 1
    for d in s:
        n *= d
    return n * itemsize


def basic_block_inv_pool(x_ncdhw, weights, biases, downsample=False):
    """Forward pass of BasicBlockInv_Pool_constant_noBN_n4_inplace.

    x_ncdhw : (N, C, D, H, W) float32   (PyTorch NCDHW convention)
    weights : list of 4 arrays (C, C, 3, 3, 3)
    biases  : list of 4 arrays (C,)
    Returns (N, C, D, H, W) (halved spatial dims if downsample=True).
    """
    if downsample:
        # MaxPool3d(kernel_size=2, stride=2) — plain-JAX glue before the kernel.
        x_ncdhw = lax.reduce_window(
            x_ncdhw, -jnp.inf, lax.max,
            window_dimensions=(1, 1, 2, 2, 2),
            window_strides=(1, 1, 2, 2, 2),
            padding="VALID")

    N, C, D, H, W = x_ncdhw.shape
    Dp, Hp, Wp = D + 2, H + 2, W + 2
    WC, WpC = W * C, Wp * C

    xt = jnp.transpose(x_ncdhw, (0, 2, 3, 4, 1)).astype(jnp.float32)   # N,D,H,W,C
    x_fold = xt.reshape(N, D, H, WC)                                   # residual input
    xpad = jnp.pad(xt, ((0, 0), (1, 1), (1, 1), (1, 1), (0, 0)))
    xpad = xpad.reshape(N, Dp, Hp, WpC)

    # Block-Toeplitz repack: fold the 3 kw taps and the Cin contraction into a
    # (Wp*C, Wp*C) matrix per (layer, kd, kh).  Output columns belonging to the
    # W halo are identically zero so the per-layer store keeps a zero W halo.
    colmask = jnp.zeros((Wp,), jnp.float32).at[1:1 + W].set(1.0)
    taps = jnp.stack([jnp.eye(Wp, k=1 - kw, dtype=jnp.float32) for kw in range(3)])
    taps = taps * colmask[None, None, :]                               # (3, Wp, Wp)

    w_mats, b_vecs = [], []
    for w_l, b_l in zip(weights, biases):
        w_l = w_l.astype(jnp.float32)                                  # (Co,Ci,3,3,3)
        bm = jnp.einsum("kxy,oidhk->dhxiyo", taps, w_l)                # (3,3,Wp,C,Wp,C)
        w_mats.append(bm.reshape(9, WpC, WpC))
        b_vecs.append((colmask[:, None]
                       * b_l.astype(jnp.float32)[None, :]).reshape(WpC))
    w_all = jnp.stack(w_mats)                                          # (4,9,WpC,WpC)
    b_all = jnp.stack(b_vecs)                                          # (4,WpC)

    # VMEM budget: double-buffered inputs/outputs + persistent scratch.
    vmem_bytes = (2 * (_vmem_block_bytes((Dp, Hp, WpC))
                       + 2 * _vmem_block_bytes((D, H, WC))
                       + _vmem_block_bytes((4, 9, WpC, WpC))
                       + _vmem_block_bytes((4, WpC)))
                  + _vmem_block_bytes((Dp, Hp, WpC)))
    vmem_limit = int(min(max(2 * vmem_bytes, 16 * 1024 * 1024), 64 * 1024 * 1024))

    out = pl.pallas_call(
        _block_kernel,
        out_shape=jax.ShapeDtypeStruct((N, D, H, WC), jnp.float32),
        grid_spec=pltpu.PrefetchScalarGridSpec(
            num_scalar_prefetch=0,
            grid=(N,),
            in_specs=[
                pl.BlockSpec((None, Dp, Hp, WpC), lambda n: (n, 0, 0, 0)),
                pl.BlockSpec((None, D, H, WC), lambda n: (n, 0, 0, 0)),
                pl.BlockSpec((4, 9, WpC, WpC), lambda n: (0, 0, 0, 0)),
                pl.BlockSpec((4, WpC), lambda n: (0, 0)),
            ],
            out_specs=pl.BlockSpec((None, D, H, WC), lambda n: (n, 0, 0, 0)),
            scratch_shapes=[pltpu.VMEM((Dp, Hp, WpC), jnp.float32)],
        ),
        compiler_params=pltpu.CompilerParams(
            dimension_semantics=("parallel",),
            vmem_limit_bytes=vmem_limit),
    )(xpad, x_fold, w_all, b_all)

    out = out.reshape(N, D, H, W, C)
    return jnp.transpose(out, (0, 4, 1, 2, 3))                         # back to NCDHW


def ref_forward(x_ncdhw, weights, biases, downsample=False):
    """Pure-JAX reference (matches the PyTorch module semantics)."""
    if downsample:
        x_ncdhw = lax.reduce_window(
            x_ncdhw, -jnp.inf, lax.max,
            window_dimensions=(1, 1, 2, 2, 2),
            window_strides=(1, 1, 2, 2, 2),
            padding="VALID")
    out = x_ncdhw
    for w, b in zip(weights, biases):
        out = lax.conv_general_dilated(
            out, w, window_strides=(1, 1, 1),
            padding=((1, 1), (1, 1), (1, 1)),
            dimension_numbers=("NCDHW", "OIDHW", "NCDHW"))
        out = jnp.maximum(out + b[None, :, None, None, None], 0.0)
    return out + x_ncdhw


if __name__ == "__main__":
    key = jax.random.PRNGKey(0)
    N, C, D, H, W = 2, 4, 8, 8, 8
    key, kx = jax.random.split(key)
    x = jax.random.normal(kx, (N, C, D, H, W), jnp.float32)

    # Deterministic parameter init mirroring PyTorch Conv3d defaults:
    # uniform(-1/sqrt(fan_in), 1/sqrt(fan_in)) with fan_in = C * 3*3*3.
    fan_in = C * 27
    bound = float(1.0 / (fan_in ** 0.5))
    weights, biases = [], []
    for _ in range(4):
        key, kw, kb = jax.random.split(key, 3)
        weights.append(jax.random.uniform(kw, (C, C, 3, 3, 3), jnp.float32,
                                          minval=-bound, maxval=bound))
        biases.append(jax.random.uniform(kb, (C,), jnp.float32,
                                         minval=-bound, maxval=bound))

    ok = True
    for downsample in (False, True):   # module default is downsample=False
        out = basic_block_inv_pool(x, weights, biases, downsample=downsample)
        out = jax.block_until_ready(out)
        ref = ref_forward(x, weights, biases, downsample=downsample)
        ok = ok and bool(jnp.allclose(out, ref, rtol=1e-4, atol=1e-4))

    if ok:
        print("KERNEL_OK")
    else:
        print("MISMATCH")
</pallas_src>

<mosaic_0001>
module attributes {stable_mosaic.version = 11 : i64} {
  func.func @_block_kernel(%arg0: i32, %arg1: memref<1x10x10x40xf32, #tpu.memory_space<vmem>>, %arg2: memref<1x8x8x32xf32, #tpu.memory_space<vmem>>, %arg3: memref<4x9x40x40xf32, #tpu.memory_space<vmem>>, %arg4: memref<4x40xf32, #tpu.memory_space<vmem>>, %arg5: memref<1x8x8x32xf32, #tpu.memory_space<vmem>>, %arg6: memref<10x10x40xf32, #tpu.memory_space<vmem>>) attributes {dimension_semantics = [#tpu.dimension_semantics<parallel>], iteration_bounds = array<i64: 2>, scalar_prefetch = 0 : i64, scratch_operands = 1 : i64, tpu.core_type = #tpu.core_type<tc>, window_params = [{transform_indices = @transform_0, window_bounds = array<i64: 1, 10, 10, 40>}, {transform_indices = @transform_1, window_bounds = array<i64: 1, 8, 8, 32>}, {pipeline_mode = #tpu.pipeline_mode<synchronous>, transform_indices = @transform_2, window_bounds = array<i64: 4, 9, 40, 40>}, {pipeline_mode = #tpu.pipeline_mode<synchronous>, transform_indices = @transform_3, window_bounds = array<i64: 4, 40>}, {transform_indices = @transform_4, window_bounds = array<i64: 1, 8, 8, 32>}]} {
    %cst = arith.constant 0.000000e+00 : f32
    %0 = vector.broadcast %cst : f32 to vector<1x10x40xf32>
    %c0 = arith.constant 0 : index
    %c0_0 = arith.constant 0 : index
    %c0_1 = arith.constant 0 : index
    %1 = vector.load %arg6[%c0, %c0_0, %c0_1] : memref<10x10x40xf32, #tpu.memory_space<vmem>>, vector<1x10x40xf32>
    tpu.vector_store %arg6[%c0, %c0_0, %c0_1], %0 {strides = array<i32>} : memref<10x10x40xf32, #tpu.memory_space<vmem>>, vector<1x10x40xf32>,
    %cst_2 = arith.constant 0.000000e+00 : f32
    %2 = vector.broadcast %cst_2 : f32 to vector<1x10x40xf32>
    %c9 = arith.constant 9 : index
    %c0_3 = arith.constant 0 : index
    %c0_4 = arith.constant 0 : index
    %3 = vector.load %arg6[%c9, %c0_3, %c0_4] : memref<10x10x40xf32, #tpu.memory_space<vmem>>, vector<1x10x40xf32>
    tpu.vector_store %arg6[%c9, %c0_3, %c0_4], %2 {strides = array<i32>} : memref<10x10x40xf32, #tpu.memory_space<vmem>>, vector<1x10x40xf32>,
    %cst_5 = arith.constant 0.000000e+00 : f32
    %4 = vector.broadcast %cst_5 : f32 to vector<8x1x40xf32>
    %c1 = arith.constant 1 : index
    %c0_6 = arith.constant 0 : index
    %c0_7 = arith.constant 0 : index
    %5 = vector.load %arg6[%c1, %c0_6, %c0_7] : memref<10x10x40xf32, #tpu.memory_space<vmem>>, vector<8x1x40xf32>
    tpu.vector_store %arg6[%c1, %c0_6, %c0_7], %4 {strides = array<i32>} : memref<10x10x40xf32, #tpu.memory_space<vmem>>, vector<8x1x40xf32>,
    %cst_8 = arith.constant 0.000000e+00 : f32
    %6 = vector.broadcast %cst_8 : f32 to vector<8x1x40xf32>
    %c1_9 = arith.constant 1 : index
    %c9_10 = arith.constant 9 : index
    %c0_11 = arith.constant 0 : index
    %7 = vector.load %arg6[%c1_9, %c9_10, %c0_11] : memref<10x10x40xf32, #tpu.memory_space<vmem>>, vector<8x1x40xf32>
    tpu.vector_store %arg6[%c1_9, %c9_10, %c0_11], %6 {strides = array<i32>} : memref<10x10x40xf32, #tpu.memory_space<vmem>>, vector<8x1x40xf32>,
    %c0_12 = arith.constant 0 : index
    %c0_13 = arith.constant 0 : index
    %c0_14 = arith.constant 0 : index
    %c0_15 = arith.constant 0 : index
    %8 = vector.load %arg1[%c0_12, %c0_13, %c0_14, %c0_15] : memref<1x10x10x40xf32, #tpu.memory_space<vmem>>, vector<1x8x8x40xf32>
    %9 = vector.shape_cast %8 : vector<1x8x8x40xf32> to vector<8x8x40xf32>
    %10 = vector.shape_cast %9 : vector<8x8x40xf32> to vector<64x40xf32>
    %c0_16 = arith.constant 0 : index
    %c0_17 = arith.constant 0 : index
    %c0_18 = arith.constant 0 : index
    %c0_19 = arith.constant 0 : index
    %11 = vector.load %arg3[%c0_16, %c0_17, %c0_18, %c0_19] : memref<4x9x40x40xf32, #tpu.memory_space<vmem>>, vector<1x1x40x40xf32>
    %12 = vector.shape_cast %11 : vector<1x1x40x40xf32> to vector<40x40xf32>
    %cst_20 = arith.constant dense<0.000000e+00> : vector<64x40xf32>
    %13 = tpu.matmul %10, %12, %cst_20 {dimension_numbers = #tpu.dot_dimension_numbers<[1], [0], [0], [1], [0, 0, 1, 1], [], []>} : vector<64x40xf32>, vector<40x40xf32>, vector<64x40xf32> -> vector<64x40xf32>
    %c0_21 = arith.constant 0 : index
    %c0_22 = arith.constant 0 : index
    %c1_23 = arith.constant 1 : index
    %c0_24 = arith.constant 0 : index
    %14 = vector.load %arg1[%c0_21, %c0_22, %c1_23, %c0_24] : memref<1x10x10x40xf32, #tpu.memory_space<vmem>>, vector<1x8x8x40xf32>
    %15 = vector.shape_cast %14 : vector<1x8x8x40xf32> to vector<8x8x40xf32>
    %16 = vector.shape_cast %15 : vector<8x8x40xf32> to vector<64x40xf32>
    %c0_25 = arith.constant 0 : index
    %c1_26 = arith.constant 1 : index
    %c0_27 = arith.constant 0 : index
    %c0_28 = arith.constant 0 : index
    %17 = vector.load %arg3[%c0_25, %c1_26, %c0_27, %c0_28] : memref<4x9x40x40xf32, #tpu.memory_space<vmem>>, vector<1x1x40x40xf32>
    %18 = vector.shape_cast %17 : vector<1x1x40x40xf32> to vector<40x40xf32>
    %cst_29 = arith.constant dense<0.000000e+00> : vector<64x40xf32>
    %19 = tpu.matmul %16, %18, %cst_29 {dimension_numbers = #tpu.dot_dimension_numbers<[1], [0], [0], [1], [0, 0, 1, 1], [], []>} : vector<64x40xf32>, vector<40x40xf32>, vector<64x40xf32> -> vector<64x40xf32>
    %20 = arith.addf %13, %19 : vector<64x40xf32>
    %c0_30 = arith.constant 0 : index
    %c0_31 = arith.constant 0 : index
    %c2 = arith.constant 2 : index
    %c0_32 = arith.constant 0 : index
    %21 = vector.load %arg1[%c0_30, %c0_31, %c2, %c0_32] : memref<1x10x10x40xf32, #tpu.memory_space<vmem>>, vector<1x8x8x40xf32>
    %22 = vector.shape_cast %21 : vector<1x8x8x40xf32> to vector<8x8x40xf32>
    %23 = vector.shape_cast %22 : vector<8x8x40xf32> to vector<64x40xf32>
    %c0_33 = arith.constant 0 : index
    %c2_34 = arith.constant 2 : index
    %c0_35 = arith.constant 0 : index
    %c0_36 = arith.constant 0 : index
    %24 = vector.load %arg3[%c0_33, %c2_34, %c0_35, %c0_36] : memref<4x9x40x40xf32, #tpu.memory_space<vmem>>, vector<1x1x40x40xf32>
    %25 = vector.shape_cast %24 : vector<1x1x40x40xf32> to vector<40x40xf32>
    %cst_37 = arith.constant dense<0.000000e+00> : vector<64x40xf32>
    %26 = tpu.matmul %23, %25, %cst_37 {dimension_numbers = #tpu.dot_dimension_numbers<[1], [0], [0], [1], [0, 0, 1, 1], [], []>} : vector<64x40xf32>, vector<40x40xf32>, vector<64x40xf32> -> vector<64x40xf32>
    %27 = arith.addf %20, %26 : vector<64x40xf32>
    %c0_38 = arith.constant 0 : index
    %c1_39 = arith.constant 1 : index
    %c0_40 = arith.constant 0 : index
    %c0_41 = arith.constant 0 : index
    %28 = vector.load %arg1[%c0_38, %c1_39, %c0_40, %c0_41] : memref<1x10x10x40xf32, #tpu.memory_space<vmem>>, vector<1x8x8x40xf32>
    %29 = vector.shape_cast %28 : vector<1x8x8x40xf32> to vector<8x8x40xf32>
    %30 = vector.shape_cast %29 : vector<8x8x40xf32> to vector<64x40xf32>
    %c0_42 = arith.constant 0 : index
    %c3 = arith.constant 3 : index
    %c0_43 = arith.constant 0 : index
    %c0_44 = arith.constant 0 : index
    %31 = vector.load %arg3[%c0_42, %c3, %c0_43, %c0_44] : memref<4x9x40x40xf32, #tpu.memory_space<vmem>>, vector<1x1x40x40xf32>
    %32 = vector.shape_cast %31 : vector<1x1x40x40xf32> to vector<40x40xf32>
    %cst_45 = arith.constant dense<0.000000e+00> : vector<64x40xf32>
    %33 = tpu.matmul %30, %32, %cst_45 {dimension_numbers = #tpu.dot_dimension_numbers<[1], [0], [0], [1], [0, 0, 1, 1], [], []>} : vector<64x40xf32>, vector<40x40xf32>, vector<64x40xf32> -> vector<64x40xf32>
    %34 = arith.addf %27, %33 : vector<64x40xf32>
    %c0_46 = arith.constant 0 : index
    %c1_47 = arith.constant 1 : index
    %c1_48 = arith.constant 1 : index
    %c0_49 = arith.constant 0 : index
    %35 = vector.load %arg1[%c0_46, %c1_47, %c1_48, %c0_49] : memref<1x10x10x40xf32, #tpu.memory_space<vmem>>, vector<1x8x8x40xf32>
    %36 = vector.shape_cast %35 : vector<1x8x8x40xf32> to vector<8x8x40xf32>
    %37 = vector.shape_cast %36 : vector<8x8x40xf32> to vector<64x40xf32>
    %c0_50 = arith.constant 0 : index
    %c4 = arith.constant 4 : index
    %c0_51 = arith.constant 0 : index
    %c0_52 = arith.constant 0 : index
    %38 = vector.load %arg3[%c0_50, %c4, %c0_51, %c0_52] : memref<4x9x40x40xf32, #tpu.memory_space<vmem>>, vector<1x1x40x40xf32>
    %39 = vector.shape_cast %38 : vector<1x1x40x40xf32> to vector<40x40xf32>
    %cst_53 = arith.constant dense<0.000000e+00> : vector<64x40xf32>
    %40 = tpu.matmul %37, %39, %cst_53 {dimension_numbers = #tpu.dot_dimension_numbers<[1], [0], [0], [1], [0, 0, 1, 1], [], []>} : vector<64x40xf32>, vector<40x40xf32>, vector<64x40xf32> -> vector<64x40xf32>
    %41 = arith.addf %34, %40 : vector<64x40xf32>
    %c0_54 = arith.constant 0 : index
    %c1_55 = arith.constant 1 : index
    %c2_56 = arith.constant 2 : index
    %c0_57 = arith.constant 0 : index
    %42 = vector.load %arg1[%c0_54, %c1_55, %c2_56, %c0_57] : memref<1x10x10x40xf32, #tpu.memory_space<vmem>>, vector<1x8x8x40xf32>
    %43 = vector.shape_cast %42 : vector<1x8x8x40xf32> to vector<8x8x40xf32>
    %44 = vector.shape_cast %43 : vector<8x8x40xf32> to vector<64x40xf32>
    %c0_58 = arith.constant 0 : index
    %c5 = arith.constant 5 : index
    %c0_59 = arith.constant 0 : index
    %c0_60 = arith.constant 0 : index
    %45 = vector.load %arg3[%c0_58, %c5, %c0_59, %c0_60] : memref<4x9x40x40xf32, #tpu.memory_space<vmem>>, vector<1x1x40x40xf32>
    %46 = vector.shape_cast %45 : vector<1x1x40x40xf32> to vector<40x40xf32>
    %cst_61 = arith.constant dense<0.000000e+00> : vector<64x40xf32>
    %47 = tpu.matmul %44, %46, %cst_61 {dimension_numbers = #tpu.dot_dimension_numbers<[1], [0], [0], [1], [0, 0, 1, 1], [], []>} : vector<64x40xf32>, vector<40x40xf32>, vector<64x40xf32> -> vector<64x40xf32>
    %48 = arith.addf %41, %47 : vector<64x40xf32>
    %c0_62 = arith.constant 0 : index
    %c2_63 = arith.constant 2 : index
    %c0_64 = arith.constant 0 : index
    %c0_65 = arith.constant 0 : index
    %49 = vector.load %arg1[%c0_62, %c2_63, %c0_64, %c0_65] : memref<1x10x10x40xf32, #tpu.memory_space<vmem>>, vector<1x8x8x40xf32>
    %50 = vector.shape_cast %49 : vector<1x8x8x40xf32> to vector<8x8x40xf32>
    %51 = vector.shape_cast %50 : vector<8x8x40xf32> to vector<64x40xf32>
    %c0_66 = arith.constant 0 : index
    %c6 = arith.constant 6 : index
    %c0_67 = arith.constant 0 : index
    %c0_68 = arith.constant 0 : index
    %52 = vector.load %arg3[%c0_66, %c6, %c0_67, %c0_68] : memref<4x9x40x40xf32, #tpu.memory_space<vmem>>, vector<1x1x40x40xf32>
    %53 = vector.shape_cast %52 : vector<1x1x40x40xf32> to vector<40x40xf32>
    %cst_69 = arith.constant dense<0.000000e+00> : vector<64x40xf32>
    %54 = tpu.matmul %51, %53, %cst_69 {dimension_numbers = #tpu.dot_dimension_numbers<[1], [0], [0], [1], [0, 0, 1, 1], [], []>} : vector<64x40xf32>, vector<40x40xf32>, vector<64x40xf32> -> vector<64x40xf32>
    %55 = arith.addf %48, %54 : vector<64x40xf32>
    %c0_70 = arith.constant 0 : index
    %c2_71 = arith.constant 2 : index
    %c1_72 = arith.constant 1 : index
    %c0_73 = arith.constant 0 : index
    %56 = vector.load %arg1[%c0_70, %c2_71, %c1_72, %c0_73] : memref<1x10x10x40xf32, #tpu.memory_space<vmem>>, vector<1x8x8x40xf32>
    %57 = vector.shape_cast %56 : vector<1x8x8x40xf32> to vector<8x8x40xf32>
    %58 = vector.shape_cast %57 : vector<8x8x40xf32> to vector<64x40xf32>
    %c0_74 = arith.constant 0 : index
    %c7 = arith.constant 7 : index
    %c0_75 = arith.constant 0 : index
    %c0_76 = arith.constant 0 : index
    %59 = vector.load %arg3[%c0_74, %c7, %c0_75, %c0_76] : memref<4x9x40x40xf32, #tpu.memory_space<vmem>>, vector<1x1x40x40xf32>
    %60 = vector.shape_cast %59 : vector<1x1x40x40xf32> to vector<40x40xf32>
    %cst_77 = arith.constant dense<0.000000e+00> : vector<64x40xf32>
    %61 = tpu.matmul %58, %60, %cst_77 {dimension_numbers = #tpu.dot_dimension_numbers<[1], [0], [0], [1], [0, 0, 1, 1], [], []>} : vector<64x40xf32>, vector<40x40xf32>, vector<64x40xf32> -> vector<64x40xf32>
    %62 = arith.addf %55, %61 : vector<64x40xf32>
    %c0_78 = arith.constant 0 : index
    %c2_79 = arith.constant 2 : index
    %c2_80 = arith.constant 2 : index
    %c0_81 = arith.constant 0 : index
    %63 = vector.load %arg1[%c0_78, %c2_79, %c2_80, %c0_81] : memref<1x10x10x40xf32, #tpu.memory_space<vmem>>, vector<1x8x8x40xf32>
    %64 = vector.shape_cast %63 : vector<1x8x8x40xf32> to vector<8x8x40xf32>
    %65 = vector.shape_cast %64 : vector<8x8x40xf32> to vector<64x40xf32>
    %c0_82 = arith.constant 0 : index
    %c8 = arith.constant 8 : index
    %c0_83 = arith.constant 0 : index
    %c0_84 = arith.constant 0 : index
    %66 = vector.load %arg3[%c0_82, %c8, %c0_83, %c0_84] : memref<4x9x40x40xf32, #tpu.memory_space<vmem>>, vector<1x1x40x40xf32>
    %67 = vector.shape_cast %66 : vector<1x1x40x40xf32> to vector<40x40xf32>
    %cst_85 = arith.constant dense<0.000000e+00> : vector<64x40xf32>
    %68 = tpu.matmul %65, %67, %cst_85 {dimension_numbers = #tpu.dot_dimension_numbers<[1], [0], [0], [1], [0, 0, 1, 1], [], []>} : vector<64x40xf32>, vector<40x40xf32>, vector<64x40xf32> -> vector<64x40xf32>
    %69 = arith.addf %62, %68 : vector<64x40xf32>
    %c0_86 = arith.constant 0 : index
    %c0_87 = arith.constant 0 : index
    %70 = vector.load %arg4[%c0_86, %c0_87] : memref<4x40xf32, #tpu.memory_space<vmem>>, vector<1x40xf32>
    %71 = vector.broadcast %70 : vector<1x40xf32> to vector<64x40xf32>
    %72 = arith.addf %69, %71 : vector<64x40xf32>
    %cst_88 = arith.constant 0.000000e+00 : f32
    %73 = vector.broadcast %cst_88 : f32 to vector<64x40xf32>
    %74 = arith.maximumf %72, %73 : vector<64x40xf32>
    %75 = vector.shape_cast %74 : vector<64x40xf32> to vector<8x8x40xf32>
    %c1_89 = arith.constant 1 : index
    %c1_90 = arith.constant 1 : index
    %c0_91 = arith.constant 0 : index
    %76 = vector.load %arg6[%c1_89, %c1_90, %c0_91] : memref<10x10x40xf32, #tpu.memory_space<vmem>>, vector<8x8x40xf32>
    tpu.vector_store %arg6[%c1_89, %c1_90, %c0_91], %75 {strides = array<i32>} : memref<10x10x40xf32, #tpu.memory_space<vmem>>, vector<8x8x40xf32>,
    %c0_92 = arith.constant 0 : index
    %c0_93 = arith.constant 0 : index
    %c0_94 = arith.constant 0 : index
    %77 = vector.load %arg6[%c0_92, %c0_93, %c0_94] : memref<10x10x40xf32, #tpu.memory_space<vmem>>, vector<8x8x40xf32>
    %78 = vector.shape_cast %77 : vector<8x8x40xf32> to vector<64x40xf32>
    %c1_95 = arith.constant 1 : index
    %c0_96 = arith.constant 0 : index
    %c0_97 = arith.constant 0 : index
    %c0_98 = arith.constant 0 : index
    %79 = vector.load %arg3[%c1_95, %c0_96, %c0_97, %c0_98] : memref<4x9x40x40xf32, #tpu.memory_space<vmem>>, vector<1x1x40x40xf32>
    %80 = vector.shape_cast %79 : vector<1x1x40x40xf32> to vector<40x40xf32>
    %cst_99 = arith.constant dense<0.000000e+00> : vector<64x40xf32>
    %81 = tpu.matmul %78, %80, %cst_99 {dimension_numbers = #tpu.dot_dimension_numbers<[1], [0], [0], [1], [0, 0, 1, 1], [], []>} : vector<64x40xf32>, vector<40x40xf32>, vector<64x40xf32> -> vector<64x40xf32>
    %c0_100 = arith.constant 0 : index
    %c1_101 = arith.constant 1 : index
    %c0_102 = arith.constant 0 : index
    %82 = vector.load %arg6[%c0_100, %c1_101, %c0_102] : memref<10x10x40xf32, #tpu.memory_space<vmem>>, vector<8x8x40xf32>
    %83 = vector.shape_cast %82 : vector<8x8x40xf32> to vector<64x40xf32>
    %c1_103 = arith.constant 1 : index
    %c1_104 = arith.constant 1 : index
    %c0_105 = arith.constant 0 : index
    %c0_106 = arith.constant 0 : index
    %84 = vector.load %arg3[%c1_103, %c1_104, %c0_105, %c0_106] : memref<4x9x40x40xf32, #tpu.memory_space<vmem>>, vector<1x1x40x40xf32>
    %85 = vector.shape_cast %84 : vector<1x1x40x40xf32> to vector<40x40xf32>
    %cst_107 = arith.constant dense<0.000000e+00> : vector<64x40xf32>
    %86 = tpu.matmul %83, %85, %cst_107 {dimension_numbers = #tpu.dot_dimension_numbers<[1], [0], [0], [1], [0, 0, 1, 1], [], []>} : vector<64x40xf32>, vector<40x40xf32>, vector<64x40xf32> -> vector<64x40xf32>
    %87 = arith.addf %81, %86 : vector<64x40xf32>
    %c0_108 = arith.constant 0 : index
    %c2_109 = arith.constant 2 : index
    %c0_110 = arith.constant 0 : index
    %88 = vector.load %arg6[%c0_108, %c2_109, %c0_110] : memref<10x10x40xf32, #tpu.memory_space<vmem>>, vector<8x8x40xf32>
    %89 = vector.shape_cast %88 : vector<8x8x40xf32> to vector<64x40xf32>
    %c1_111 = arith.constant 1 : index
    %c2_112 = arith.constant 2 : index
    %c0_113 = arith.constant 0 : index
    %c0_114 = arith.constant 0 : index
    %90 = vector.load %arg3[%c1_111, %c2_112, %c0_113, %c0_114] : memref<4x9x40x40xf32, #tpu.memory_space<vmem>>, vector<1x1x40x40xf32>
    %91 = vector.shape_cast %90 : vector<1x1x40x40xf32> to vector<40x40xf32>
    %cst_115 = arith.constant dense<0.000000e+00> : vector<64x40xf32>
    %92 = tpu.matmul %89, %91, %cst_115 {dimension_numbers = #tpu.dot_dimension_numbers<[1], [0], [0], [1], [0, 0, 1, 1], [], []>} : vector<64x40xf32>, vector<40x40xf32>, vector<64x40xf32> -> vector<64x40xf32>
    %93 = arith.addf %87, %92 : vector<64x40xf32>
    %c1_116 = arith.constant 1 : index
    %c0_117 = arith.constant 0 : index
    %c0_118 = arith.constant 0 : index
    %94 = vector.load %arg6[%c1_116, %c0_117, %c0_118] : memref<10x10x40xf32, #tpu.memory_space<vmem>>, vector<8x8x40xf32>
    %95 = vector.shape_cast %94 : vector<8x8x40xf32> to vector<64x40xf32>
    %c1_119 = arith.constant 1 : index
    %c3_120 = arith.constant 3 : index
    %c0_121 = arith.constant 0 : index
    %c0_122 = arith.constant 0 : index
    %96 = vector.load %arg3[%c1_119, %c3_120, %c0_121, %c0_122] : memref<4x9x40x40xf32, #tpu.memory_space<vmem>>, vector<1x1x40x40xf32>
    %97 = vector.shape_cast %96 : vector<1x1x40x40xf32> to vector<40x40xf32>
    %cst_123 = arith.constant dense<0.000000e+00> : vector<64x40xf32>
    %98 = tpu.matmul %95, %97, %cst_123 {dimension_numbers = #tpu.dot_dimension_numbers<[1], [0], [0], [1], [0, 0, 1, 1], [], []>} : vector<64x40xf32>, vector<40x40xf32>, vector<64x40xf32> -> vector<64x40xf32>
    %99 = arith.addf %93, %98 : vector<64x40xf32>
    %c1_124 = arith.constant 1 : index
    %c1_125 = arith.constant 1 : index
    %c0_126 = arith.constant 0 : index
    %100 = vector.load %arg6[%c1_124, %c1_125, %c0_126] : memref<10x10x40xf32, #tpu.memory_space<vmem>>, vector<8x8x40xf32>
    %101 = vector.shape_cast %100 : vector<8x8x40xf32> to vector<64x40xf32>
    %c1_127 = arith.constant 1 : index
    %c4_128 = arith.constant 4 : index
    %c0_129 = arith.constant 0 : index
    %c0_130 = arith.constant 0 : index
    %102 = vector.load %arg3[%c1_127, %c4_128, %c0_129, %c0_130] : memref<4x9x40x40xf32, #tpu.memory_space<vmem>>, vector<1x1x40x40xf32>
    %103 = vector.shape_cast %102 : vector<1x1x40x40xf32> to vector<40x40xf32>
    %cst_131 = arith.constant dense<0.000000e+00> : vector<64x40xf32>
    %104 = tpu.matmul %101, %103, %cst_131 {dimension_numbers = #tpu.dot_dimension_numbers<[1], [0], [0], [1], [0, 0, 1, 1], [], []>} : vector<64x40xf32>, vector<40x40xf32>, vector<64x40xf32> -> vector<64x40xf32>
    %105 = arith.addf %99, %104 : vector<64x40xf32>
    %c1_132 = arith.constant 1 : index
    %c2_133 = arith.constant 2 : index
    %c0_134 = arith.constant 0 : index
    %106 = vector.load %arg6[%c1_132, %c2_133, %c0_134] : memref<10x10x40xf32, #tpu.memory_space<vmem>>, vector<8x8x40xf32>
    %107 = vector.shape_cast %106 : vector<8x8x40xf32> to vector<64x40xf32>
    %c1_135 = arith.constant 1 : index
    %c5_136 = arith.constant 5 : index
    %c0_137 = arith.constant 0 : index
    %c0_138 = arith.constant 0 : index
    %108 = vector.load %arg3[%c1_135, %c5_136, %c0_137, %c0_138] : memref<4x9x40x40xf32, #tpu.memory_space<vmem>>, vector<1x1x40x40xf32>
    %109 = vector.shape_cast %108 : vector<1x1x40x40xf32> to vector<40x40xf32>
    %cst_139 = arith.constant dense<0.000000e+00> : vector<64x40xf32>
    %110 = tpu.matmul %107, %109, %cst_139 {dimension_numbers = #tpu.dot_dimension_numbers<[1], [0], [0], [1], [0, 0, 1, 1], [], []>} : vector<64x40xf32>, vector<40x40xf32>, vector<64x40xf32> -> vector<64x40xf32>
    %111 = arith.addf %105, %110 : vector<64x40xf32>
    %c2_140 = arith.constant 2 : index
    %c0_141 = arith.constant 0 : index
    %c0_142 = arith.constant 0 : index
    %112 = vector.load %arg6[%c2_140, %c0_141, %c0_142] : memref<10x10x40xf32, #tpu.memory_space<vmem>>, vector<8x8x40xf32>
    %113 = vector.shape_cast %112 : vector<8x8x40xf32> to vector<64x40xf32>
    %c1_143 = arith.constant 1 : index
    %c6_144 = arith.constant 6 : index
    %c0_145 = arith.constant 0 : index
    %c0_146 = arith.constant 0 : index
    %114 = vector.load %arg3[%c1_143, %c6_144, %c0_145, %c0_146] : memref<4x9x40x40xf32, #tpu.memory_space<vmem>>, vector<1x1x40x40xf32>
    %115 = vector.shape_cast %114 : vector<1x1x40x40xf32> to vector<40x40xf32>
    %cst_147 = arith.constant dense<0.000000e+00> : vector<64x40xf32>
    %116 = tpu.matmul %113, %115, %cst_147 {dimension_numbers = #tpu.dot_dimension_numbers<[1], [0], [0], [1], [0, 0, 1, 1], [], []>} : vector<64x40xf32>, vector<40x40xf32>, vector<64x40xf32> -> vector<64x40xf32>
    %117 = arith.addf %111, %116 : vector<64x40xf32>
    %c2_148 = arith.constant 2 : index
    %c1_149 = arith.constant 1 : index
    %c0_150 = arith.constant 0 : index
    %118 = vector.load %arg6[%c2_148, %c1_149, %c0_150] : memref<10x10x40xf32, #tpu.memory_space<vmem>>, vector<8x8x40xf32>
    %119 = vector.shape_cast %118 : vector<8x8x40xf32> to vector<64x40xf32>
    %c1_151 = arith.constant 1 : index
    %c7_152 = arith.constant 7 : index
    %c0_153 = arith.constant 0 : index
    %c0_154 = arith.constant 0 : index
    %120 = vector.load %arg3[%c1_151, %c7_152, %c0_153, %c0_154] : memref<4x9x40x40xf32, #tpu.memory_space<vmem>>, vector<1x1x40x40xf32>
    %121 = vector.shape_cast %120 : vector<1x1x40x40xf32> to vector<40x40xf32>
    %cst_155 = arith.constant dense<0.000000e+00> : vector<64x40xf32>
    %122 = tpu.matmul %119, %121, %cst_155 {dimension_numbers = #tpu.dot_dimension_numbers<[1], [0], [0], [1], [0, 0, 1, 1], [], []>} : vector<64x40xf32>, vector<40x40xf32>, vector<64x40xf32> -> vector<64x40xf32>
    %123 = arith.addf %117, %122 : vector<64x40xf32>
    %c2_156 = arith.constant 2 : index
    %c2_157 = arith.constant 2 : index
    %c0_158 = arith.constant 0 : index
    %124 = vector.load %arg6[%c2_156, %c2_157, %c0_158] : memref<10x10x40xf32, #tpu.memory_space<vmem>>, vector<8x8x40xf32>
    %125 = vector.shape_cast %124 : vector<8x8x40xf32> to vector<64x40xf32>
    %c1_159 = arith.constant 1 : index
    %c8_160 = arith.constant 8 : index
    %c0_161 = arith.constant 0 : index
    %c0_162 = arith.constant 0 : index
    %126 = vector.load %arg3[%c1_159, %c8_160, %c0_161, %c0_162] : memref<4x9x40x40xf32, #tpu.memory_space<vmem>>, vector<1x1x40x40xf32>
    %127 = vector.shape_cast %126 : vector<1x1x40x40xf32> to vector<40x40xf32>
    %cst_163 = arith.constant dense<0.000000e+00> : vector<64x40xf32>
    %128 = tpu.matmul %125, %127, %cst_163 {dimension_numbers = #tpu.dot_dimension_numbers<[1], [0], [0], [1], [0, 0, 1, 1], [], []>} : vector<64x40xf32>, vector<40x40xf32>, vector<64x40xf32> -> vector<64x40xf32>
    %129 = arith.addf %123, %128 : vector<64x40xf32>
    %c1_164 = arith.constant 1 : index
    %c0_165 = arith.constant 0 : index
    %130 = vector.load %arg4[%c1_164, %c0_165] : memref<4x40xf32, #tpu.memory_space<vmem>>, vector<1x40xf32>
    %131 = vector.broadcast %130 : vector<1x40xf32> to vector<64x40xf32>
    %132 = arith.addf %129, %131 : vector<64x40xf32>
    %cst_166 = arith.constant 0.000000e+00 : f32
    %133 = vector.broadcast %cst_166 : f32 to vector<64x40xf32>
    %134 = arith.maximumf %132, %133 : vector<64x40xf32>
    %135 = vector.shape_cast %134 : vector<64x40xf32> to vector<8x8x40xf32>
    %c1_167 = arith.constant 1 : index
    %c1_168 = arith.constant 1 : index
    %c0_169 = arith.constant 0 : index
    %136 = vector.load %arg6[%c1_167, %c1_168, %c0_169] : memref<10x10x40xf32, #tpu.memory_space<vmem>>, vector<8x8x40xf32>
    tpu.vector_store %arg6[%c1_167, %c1_168, %c0_169], %135 {strides = array<i32>} : memref<10x10x40xf32, #tpu.memory_space<vmem>>, vector<8x8x40xf32>,
    %c0_170 = arith.constant 0 : index
    %c0_171 = arith.constant 0 : index
    %c0_172 = arith.constant 0 : index
    %137 = vector.load %arg6[%c0_170, %c0_171, %c0_172] : memref<10x10x40xf32, #tpu.memory_space<vmem>>, vector<8x8x40xf32>
    %138 = vector.shape_cast %137 : vector<8x8x40xf32> to vector<64x40xf32>
    %c2_173 = arith.constant 2 : index
    %c0_174 = arith.constant 0 : index
    %c0_175 = arith.constant 0 : index
    %c0_176 = arith.constant 0 : index
    %139 = vector.load %arg3[%c2_173, %c0_174, %c0_175, %c0_176] : memref<4x9x40x40xf32, #tpu.memory_space<vmem>>, vector<1x1x40x40xf32>
    %140 = vector.shape_cast %139 : vector<1x1x40x40xf32> to vector<40x40xf32>
    %cst_177 = arith.constant dense<0.000000e+00> : vector<64x40xf32>
    %141 = tpu.matmul %138, %140, %cst_177 {dimension_numbers = #tpu.dot_dimension_numbers<[1], [0], [0], [1], [0, 0, 1, 1], [], []>} : vector<64x40xf32>, vector<40x40xf32>, vector<64x40xf32> -> vector<64x40xf32>
    %c0_178 = arith.constant 0 : index
    %c1_179 = arith.constant 1 : index
    %c0_180 = arith.constant 0 : index
    %142 = vector.load %arg6[%c0_178, %c1_179, %c0_180] : memref<10x10x40xf32, #tpu.memory_space<vmem>>, vector<8x8x40xf32>
    %143 = vector.shape_cast %142 : vector<8x8x40xf32> to vector<64x40xf32>
    %c2_181 = arith.constant 2 : index
    %c1_182 = arith.constant 1 : index
    %c0_183 = arith.constant 0 : index
    %c0_184 = arith.constant 0 : index
    %144 = vector.load %arg3[%c2_181, %c1_182, %c0_183, %c0_184] : memref<4x9x40x40xf32, #tpu.memory_space<vmem>>, vector<1x1x40x40xf32>
    %145 = vector.shape_cast %144 : vector<1x1x40x40xf32> to vector<40x40xf32>
    %cst_185 = arith.constant dense<0.000000e+00> : vector<64x40xf32>
    %146 = tpu.matmul %143, %145, %cst_185 {dimension_numbers = #tpu.dot_dimension_numbers<[1], [0], [0], [1], [0, 0, 1, 1], [], []>} : vector<64x40xf32>, vector<40x40xf32>, vector<64x40xf32> -> vector<64x40xf32>
    %147 = arith.addf %141, %146 : vector<64x40xf32>
    %c0_186 = arith.constant 0 : index
    %c2_187 = arith.constant 2 : index
    %c0_188 = arith.constant 0 : index
    %148 = vector.load %arg6[%c0_186, %c2_187, %c0_188] : memref<10x10x40xf32, #tpu.memory_space<vmem>>, vector<8x8x40xf32>
    %149 = vector.shape_cast %148 : vector<8x8x40xf32> to vector<64x40xf32>
    %c2_189 = arith.constant 2 : index
    %c2_190 = arith.constant 2 : index
    %c0_191 = arith.constant 0 : index
    %c0_192 = arith.constant 0 : index
    %150 = vector.load %arg3[%c2_189, %c2_190, %c0_191, %c0_192] : memref<4x9x40x40xf32, #tpu.memory_space<vmem>>, vector<1x1x40x40xf32>
    %151 = vector.shape_cast %150 : vector<1x1x40x40xf32> to vector<40x40xf32>
    %cst_193 = arith.constant dense<0.000000e+00> : vector<64x40xf32>
    %152 = tpu.matmul %149, %151, %cst_193 {dimension_numbers = #tpu.dot_dimension_numbers<[1], [0], [0], [1], [0, 0, 1, 1], [], []>} : vector<64x40xf32>, vector<40x40xf32>, vector<64x40xf32> -> vector<64x40xf32>
    %153 = arith.addf %147, %152 : vector<64x40xf32>
    %c1_194 = arith.constant 1 : index
    %c0_195 = arith.constant 0 : index
    %c0_196 = arith.constant 0 : index
    %154 = vector.load %arg6[%c1_194, %c0_195, %c0_196] : memref<10x10x40xf32, #tpu.memory_space<vmem>>, vector<8x8x40xf32>
    %155 = vector.shape_cast %154 : vector<8x8x40xf32> to vector<64x40xf32>
    %c2_197 = arith.constant 2 : index
    %c3_198 = arith.constant 3 : index
    %c0_199 = arith.constant 0 : index
    %c0_200 = arith.constant 0 : index
    %156 = vector.load %arg3[%c2_197, %c3_198, %c0_199, %c0_200] : memref<4x9x40x40xf32, #tpu.memory_space<vmem>>, vector<1x1x40x40xf32>
    %157 = vector.shape_cast %156 : vector<1x1x40x40xf32> to vector<40x40xf32>
    %cst_201 = arith.constant dense<0.000000e+00> : vector<64x40xf32>
    %158 = tpu.matmul %155, %157, %cst_201 {dimension_numbers = #tpu.dot_dimension_numbers<[1], [0], [0], [1], [0, 0, 1, 1], [], []>} : vector<64x40xf32>, vector<40x40xf32>, vector<64x40xf32> -> vector<64x40xf32>
    %159 = arith.addf %153, %158 : vector<64x40xf32>
    %c1_202 = arith.constant 1 : index
    %c1_203 = arith.constant 1 : index
    %c0_204 = arith.constant 0 : index
    %160 = vector.load %arg6[%c1_202, %c1_203, %c0_204] : memref<10x10x40xf32, #tpu.memory_space<vmem>>, vector<8x8x40xf32>
    %161 = vector.shape_cast %160 : vector<8x8x40xf32> to vector<64x40xf32>
    %c2_205 = arith.constant 2 : index
    %c4_206 = arith.constant 4 : index
    %c0_207 = arith.constant 0 : index
    %c0_208 = arith.constant 0 : index
    %162 = vector.load %arg3[%c2_205, %c4_206, %c0_207, %c0_208] : memref<4x9x40x40xf32, #tpu.memory_space<vmem>>, vector<1x1x40x40xf32>
    %163 = vector.shape_cast %162 : vector<1x1x40x40xf32> to vector<40x40xf32>
    %cst_209 = arith.constant dense<0.000000e+00> : vector<64x40xf32>
    %164 = tpu.matmul %161, %163, %cst_209 {dimension_numbers = #tpu.dot_dimension_numbers<[1], [0], [0], [1], [0, 0, 1, 1], [], []>} : vector<64x40xf32>, vector<40x40xf32>, vector<64x40xf32> -> vector<64x40xf32>
    %165 = arith.addf %159, %164 : vector<64x40xf32>
    %c1_210 = arith.constant 1 : index
    %c2_211 = arith.constant 2 : index
    %c0_212 = arith.constant 0 : index
    %166 = vector.load %arg6[%c1_210, %c2_211, %c0_212] : memref<10x10x40xf32, #tpu.memory_space<vmem>>, vector<8x8x40xf32>
    %167 = vector.shape_cast %166 : vector<8x8x40xf32> to vector<64x40xf32>
    %c2_213 = arith.constant 2 : index
    %c5_214 = arith.constant 5 : index
    %c0_215 = arith.constant 0 : index
    %c0_216 = arith.constant 0 : index
    %168 = vector.load %arg3[%c2_213, %c5_214, %c0_215, %c0_216] : memref<4x9x40x40xf32, #tpu.memory_space<vmem>>, vector<1x1x40x40xf32>
    %169 = vector.shape_cast %168 : vector<1x1x40x40xf32> to vector<40x40xf32>
    %cst_217 = arith.constant dense<0.000000e+00> : vector<64x40xf32>
    %170 = tpu.matmul %167, %169, %cst_217 {dimension_numbers = #tpu.dot_dimension_numbers<[1], [0], [0], [1], [0, 0, 1, 1], [], []>} : vector<64x40xf32>, vector<40x40xf32>, vector<64x40xf32> -> vector<64x40xf32>
    %171 = arith.addf %165, %170 : vector<64x40xf32>
    %c2_218 = arith.constant 2 : index
    %c0_219 = arith.constant 0 : index
    %c0_220 = arith.constant 0 : index
    %172 = vector.load %arg6[%c2_218, %c0_219, %c0_220] : memref<10x10x40xf32, #tpu.memory_space<vmem>>, vector<8x8x40xf32>
    %173 = vector.shape_cast %172 : vector<8x8x40xf32> to vector<64x40xf32>
    %c2_221 = arith.constant 2 : index
    %c6_222 = arith.constant 6 : index
    %c0_223 = arith.constant 0 : index
    %c0_224 = arith.constant 0 : index
    %174 = vector.load %arg3[%c2_221, %c6_222, %c0_223, %c0_224] : memref<4x9x40x40xf32, #tpu.memory_space<vmem>>, vector<1x1x40x40xf32>
    %175 = vector.shape_cast %174 : vector<1x1x40x40xf32> to vector<40x40xf32>
    %cst_225 = arith.constant dense<0.000000e+00> : vector<64x40xf32>
    %176 = tpu.matmul %173, %175, %cst_225 {dimension_numbers = #tpu.dot_dimension_numbers<[1], [0], [0], [1], [0, 0, 1, 1], [], []>} : vector<64x40xf32>, vector<40x40xf32>, vector<64x40xf32> -> vector<64x40xf32>
    %177 = arith.addf %171, %176 : vector<64x40xf32>
    %c2_226 = arith.constant 2 : index
    %c1_227 = arith.constant 1 : index
    %c0_228 = arith.constant 0 : index
    %178 = vector.load %arg6[%c2_226, %c1_227, %c0_228] : memref<10x10x40xf32, #tpu.memory_space<vmem>>, vector<8x8x40xf32>
    %179 = vector.shape_cast %178 : vector<8x8x40xf32> to vector<64x40xf32>
    %c2_229 = arith.constant 2 : index
    %c7_230 = arith.constant 7 : index
    %c0_231 = arith.constant 0 : index
    %c0_232 = arith.constant 0 : index
    %180 = vector.load %arg3[%c2_229, %c7_230, %c0_231, %c0_232] : memref<4x9x40x40xf32, #tpu.memory_space<vmem>>, vector<1x1x40x40xf32>
    %181 = vector.shape_cast %180 : vector<1x1x40x40xf32> to vector<40x40xf32>
    %cst_233 = arith.constant dense<0.000000e+00> : vector<64x40xf32>
    %182 = tpu.matmul %179, %181, %cst_233 {dimension_numbers = #tpu.dot_dimension_numbers<[1], [0], [0], [1], [0, 0, 1, 1], [], []>} : vector<64x40xf32>, vector<40x40xf32>, vector<64x40xf32> -> vector<64x40xf32>
    %183 = arith.addf %177, %182 : vector<64x40xf32>
    %c2_234 = arith.constant 2 : index
    %c2_235 = arith.constant 2 : index
    %c0_236 = arith.constant 0 : index
    %184 = vector.load %arg6[%c2_234, %c2_235, %c0_236] : memref<10x10x40xf32, #tpu.memory_space<vmem>>, vector<8x8x40xf32>
    %185 = vector.shape_cast %184 : vector<8x8x40xf32> to vector<64x40xf32>
    %c2_237 = arith.constant 2 : index
    %c8_238 = arith.constant 8 : index
    %c0_239 = arith.constant 0 : index
    %c0_240 = arith.constant 0 : index
    %186 = vector.load %arg3[%c2_237, %c8_238, %c0_239, %c0_240] : memref<4x9x40x40xf32, #tpu.memory_space<vmem>>, vector<1x1x40x40xf32>
    %187 = vector.shape_cast %186 : vector<1x1x40x40xf32> to vector<40x40xf32>
    %cst_241 = arith.constant dense<0.000000e+00> : vector<64x40xf32>
    %188 = tpu.matmul %185, %187, %cst_241 {dimension_numbers = #tpu.dot_dimension_numbers<[1], [0], [0], [1], [0, 0, 1, 1], [], []>} : vector<64x40xf32>, vector<40x40xf32>, vector<64x40xf32> -> vector<64x40xf32>
    %189 = arith.addf %183, %188 : vector<64x40xf32>
    %c2_242 = arith.constant 2 : index
    %c0_243 = arith.constant 0 : index
    %190 = vector.load %arg4[%c2_242, %c0_243] : memref<4x40xf32, #tpu.memory_space<vmem>>, vector<1x40xf32>
    %191 = vector.broadcast %190 : vector<1x40xf32> to vector<64x40xf32>
    %192 = arith.addf %189, %191 : vector<64x40xf32>
    %cst_244 = arith.constant 0.000000e+00 : f32
    %193 = vector.broadcast %cst_244 : f32 to vector<64x40xf32>
    %194 = arith.maximumf %192, %193 : vector<64x40xf32>
    %195 = vector.shape_cast %194 : vector<64x40xf32> to vector<8x8x40xf32>
    %c1_245 = arith.constant 1 : index
    %c1_246 = arith.constant 1 : index
    %c0_247 = arith.constant 0 : index
    %196 = vector.load %arg6[%c1_245, %c1_246, %c0_247] : memref<10x10x40xf32, #tpu.memory_space<vmem>>, vector<8x8x40xf32>
    tpu.vector_store %arg6[%c1_245, %c1_246, %c0_247], %195 {strides = array<i32>} : memref<10x10x40xf32, #tpu.memory_space<vmem>>, vector<8x8x40xf32>,
    %c0_248 = arith.constant 0 : index
    %c0_249 = arith.constant 0 : index
    %c0_250 = arith.constant 0 : index
    %197 = vector.load %arg6[%c0_248, %c0_249, %c0_250] : memref<10x10x40xf32, #tpu.memory_space<vmem>>, vector<8x8x40xf32>
    %198 = vector.shape_cast %197 : vector<8x8x40xf32> to vector<64x40xf32>
    %c3_251 = arith.constant 3 : index
    %c0_252 = arith.constant 0 : index
    %c0_253 = arith.constant 0 : index
    %c0_254 = arith.constant 0 : index
    %199 = vector.load %arg3[%c3_251, %c0_252, %c0_253, %c0_254] : memref<4x9x40x40xf32, #tpu.memory_space<vmem>>, vector<1x1x40x40xf32>
    %200 = vector.shape_cast %199 : vector<1x1x40x40xf32> to vector<40x40xf32>
    %cst_255 = arith.constant dense<0.000000e+00> : vector<64x40xf32>
    %201 = tpu.matmul %198, %200, %cst_255 {dimension_numbers = #tpu.dot_dimension_numbers<[1], [0], [0], [1], [0, 0, 1, 1], [], []>} : vector<64x40xf32>, vector<40x40xf32>, vector<64x40xf32> -> vector<64x40xf32>
    %c0_256 = arith.constant 0 : index
    %c1_257 = arith.constant 1 : index
    %c0_258 = arith.constant 0 : index
    %202 = vector.load %arg6[%c0_256, %c1_257, %c0_258] : memref<10x10x40xf32, #tpu.memory_space<vmem>>, vector<8x8x40xf32>
    %203 = vector.shape_cast %202 : vector<8x8x40xf32> to vector<64x40xf32>
    %c3_259 = arith.constant 3 : index
    %c1_260 = arith.constant 1 : index
    %c0_261 = arith.constant 0 : index
    %c0_262 = arith.constant 0 : index
    %204 = vector.load %arg3[%c3_259, %c1_260, %c0_261, %c0_262] : memref<4x9x40x40xf32, #tpu.memory_space<vmem>>, vector<1x1x40x40xf32>
    %205 = vector.shape_cast %204 : vector<1x1x40x40xf32> to vector<40x40xf32>
    %cst_263 = arith.constant dense<0.000000e+00> : vector<64x40xf32>
    %206 = tpu.matmul %203, %205, %cst_263 {dimension_numbers = #tpu.dot_dimension_numbers<[1], [0], [0], [1], [0, 0, 1, 1], [], []>} : vector<64x40xf32>, vector<40x40xf32>, vector<64x40xf32> -> vector<64x40xf32>
    %207 = arith.addf %201, %206 : vector<64x40xf32>
    %c0_264 = arith.constant 0 : index
    %c2_265 = arith.constant 2 : index
    %c0_266 = arith.constant 0 : index
    %208 = vector.load %arg6[%c0_264, %c2_265, %c0_266] : memref<10x10x40xf32, #tpu.memory_space<vmem>>, vector<8x8x40xf32>
    %209 = vector.shape_cast %208 : vector<8x8x40xf32> to vector<64x40xf32>
    %c3_267 = arith.constant 3 : index
    %c2_268 = arith.constant 2 : index
    %c0_269 = arith.constant 0 : index
    %c0_270 = arith.constant 0 : index
    %210 = vector.load %arg3[%c3_267, %c2_268, %c0_269, %c0_270] : memref<4x9x40x40xf32, #tpu.memory_space<vmem>>, vector<1x1x40x40xf32>
    %211 = vector.shape_cast %210 : vector<1x1x40x40xf32> to vector<40x40xf32>
    %cst_271 = arith.constant dense<0.000000e+00> : vector<64x40xf32>
    %212 = tpu.matmul %209, %211, %cst_271 {dimension_numbers = #tpu.dot_dimension_numbers<[1], [0], [0], [1], [0, 0, 1, 1], [], []>} : vector<64x40xf32>, vector<40x40xf32>, vector<64x40xf32> -> vector<64x40xf32>
    %213 = arith.addf %207, %212 : vector<64x40xf32>
    %c1_272 = arith.constant 1 : index
    %c0_273 = arith.constant 0 : index
    %c0_274 = arith.constant 0 : index
    %214 = vector.load %arg6[%c1_272, %c0_273, %c0_274] : memref<10x10x40xf32, #tpu.memory_space<vmem>>, vector<8x8x40xf32>
    %215 = vector.shape_cast %214 : vector<8x8x40xf32> to vector<64x40xf32>
    %c3_275 = arith.constant 3 : index
    %c3_276 = arith.constant 3 : index
    %c0_277 = arith.constant 0 : index
    %c0_278 = arith.constant 0 : index
    %216 = vector.load %arg3[%c3_275, %c3_276, %c0_277, %c0_278] : memref<4x9x40x40xf32, #tpu.memory_space<vmem>>, vector<1x1x40x40xf32>
    %217 = vector.shape_cast %216 : vector<1x1x40x40xf32> to vector<40x40xf32>
    %cst_279 = arith.constant dense<0.000000e+00> : vector<64x40xf32>
    %218 = tpu.matmul %215, %217, %cst_279 {dimension_numbers = #tpu.dot_dimension_numbers<[1], [0], [0], [1], [0, 0, 1, 1], [], []>} : vector<64x40xf32>, vector<40x40xf32>, vector<64x40xf32> -> vector<64x40xf32>
    %219 = arith.addf %213, %218 : vector<64x40xf32>
    %c1_280 = arith.constant 1 : index
    %c1_281 = arith.constant 1 : index
    %c0_282 = arith.constant 0 : index
    %220 = vector.load %arg6[%c1_280, %c1_281, %c0_282] : memref<10x10x40xf32, #tpu.memory_space<vmem>>, vector<8x8x40xf32>
    %221 = vector.shape_cast %220 : vector<8x8x40xf32> to vector<64x40xf32>
    %c3_283 = arith.constant 3 : index
    %c4_284 = arith.constant 4 : index
    %c0_285 = arith.constant 0 : index
    %c0_286 = arith.constant 0 : index
    %222 = vector.load %arg3[%c3_283, %c4_284, %c0_285, %c0_286] : memref<4x9x40x40xf32, #tpu.memory_space<vmem>>, vector<1x1x40x40xf32>
    %223 = vector.shape_cast %222 : vector<1x1x40x40xf32> to vector<40x40xf32>
    %cst_287 = arith.constant dense<0.000000e+00> : vector<64x40xf32>
    %224 = tpu.matmul %221, %223, %cst_287 {dimension_numbers = #tpu.dot_dimension_numbers<[1], [0], [0], [1], [0, 0, 1, 1], [], []>} : vector<64x40xf32>, vector<40x40xf32>, vector<64x40xf32> -> vector<64x40xf32>
    %225 = arith.addf %219, %224 : vector<64x40xf32>
    %c1_288 = arith.constant 1 : index
    %c2_289 = arith.constant 2 : index
    %c0_290 = arith.constant 0 : index
    %226 = vector.load %arg6[%c1_288, %c2_289, %c0_290] : memref<10x10x40xf32, #tpu.memory_space<vmem>>, vector<8x8x40xf32>
    %227 = vector.shape_cast %226 : vector<8x8x40xf32> to vector<64x40xf32>
    %c3_291 = arith.constant 3 : index
    %c5_292 = arith.constant 5 : index
    %c0_293 = arith.constant 0 : index
    %c0_294 = arith.constant 0 : index
    %228 = vector.load %arg3[%c3_291, %c5_292, %c0_293, %c0_294] : memref<4x9x40x40xf32, #tpu.memory_space<vmem>>, vector<1x1x40x40xf32>
    %229 = vector.shape_cast %228 : vector<1x1x40x40xf32> to vector<40x40xf32>
    %cst_295 = arith.constant dense<0.000000e+00> : vector<64x40xf32>
    %230 = tpu.matmul %227, %229, %cst_295 {dimension_numbers = #tpu.dot_dimension_numbers<[1], [0], [0], [1], [0, 0, 1, 1], [], []>} : vector<64x40xf32>, vector<40x40xf32>, vector<64x40xf32> -> vector<64x40xf32>
    %231 = arith.addf %225, %230 : vector<64x40xf32>
    %c2_296 = arith.constant 2 : index
    %c0_297 = arith.constant 0 : index
    %c0_298 = arith.constant 0 : index
    %232 = vector.load %arg6[%c2_296, %c0_297, %c0_298] : memref<10x10x40xf32, #tpu.memory_space<vmem>>, vector<8x8x40xf32>
    %233 = vector.shape_cast %232 : vector<8x8x40xf32> to vector<64x40xf32>
    %c3_299 = arith.constant 3 : index
    %c6_300 = arith.constant 6 : index
    %c0_301 = arith.constant 0 : index
    %c0_302 = arith.constant 0 : index
    %234 = vector.load %arg3[%c3_299, %c6_300, %c0_301, %c0_302] : memref<4x9x40x40xf32, #tpu.memory_space<vmem>>, vector<1x1x40x40xf32>
    %235 = vector.shape_cast %234 : vector<1x1x40x40xf32> to vector<40x40xf32>
    %cst_303 = arith.constant dense<0.000000e+00> : vector<64x40xf32>
    %236 = tpu.matmul %233, %235, %cst_303 {dimension_numbers = #tpu.dot_dimension_numbers<[1], [0], [0], [1], [0, 0, 1, 1], [], []>} : vector<64x40xf32>, vector<40x40xf32>, vector<64x40xf32> -> vector<64x40xf32>
    %237 = arith.addf %231, %236 : vector<64x40xf32>
    %c2_304 = arith.constant 2 : index
    %c1_305 = arith.constant 1 : index
    %c0_306 = arith.constant 0 : index
    %238 = vector.load %arg6[%c2_304, %c1_305, %c0_306] : memref<10x10x40xf32, #tpu.memory_space<vmem>>, vector<8x8x40xf32>
    %239 = vector.shape_cast %238 : vector<8x8x40xf32> to vector<64x40xf32>
    %c3_307 = arith.constant 3 : index
    %c7_308 = arith.constant 7 : index
    %c0_309 = arith.constant 0 : index
    %c0_310 = arith.constant 0 : index
    %240 = vector.load %arg3[%c3_307, %c7_308, %c0_309, %c0_310] : memref<4x9x40x40xf32, #tpu.memory_space<vmem>>, vector<1x1x40x40xf32>
    %241 = vector.shape_cast %240 : vector<1x1x40x40xf32> to vector<40x40xf32>
    %cst_311 = arith.constant dense<0.000000e+00> : vector<64x40xf32>
    %242 = tpu.matmul %239, %241, %cst_311 {dimension_numbers = #tpu.dot_dimension_numbers<[1], [0], [0], [1], [0, 0, 1, 1], [], []>} : vector<64x40xf32>, vector<40x40xf32>, vector<64x40xf32> -> vector<64x40xf32>
    %243 = arith.addf %237, %242 : vector<64x40xf32>
    %c2_312 = arith.constant 2 : index
    %c2_313 = arith.constant 2 : index
    %c0_314 = arith.constant 0 : index
    %244 = vector.load %arg6[%c2_312, %c2_313, %c0_314] : memref<10x10x40xf32, #tpu.memory_space<vmem>>, vector<8x8x40xf32>
    %245 = vector.shape_cast %244 : vector<8x8x40xf32> to vector<64x40xf32>
    %c3_315 = arith.constant 3 : index
    %c8_316 = arith.constant 8 : index
    %c0_317 = arith.constant 0 : index
    %c0_318 = arith.constant 0 : index
    %246 = vector.load %arg3[%c3_315, %c8_316, %c0_317, %c0_318] : memref<4x9x40x40xf32, #tpu.memory_space<vmem>>, vector<1x1x40x40xf32>
    %247 = vector.shape_cast %246 : vector<1x1x40x40xf32> to vector<40x40xf32>
    %cst_319 = arith.constant dense<0.000000e+00> : vector<64x40xf32>
    %248 = tpu.matmul %245, %247, %cst_319 {dimension_numbers = #tpu.dot_dimension_numbers<[1], [0], [0], [1], [0, 0, 1, 1], [], []>} : vector<64x40xf32>, vector<40x40xf32>, vector<64x40xf32> -> vector<64x40xf32>
    %249 = arith.addf %243, %248 : vector<64x40xf32>
    %c3_320 = arith.constant 3 : index
    %c0_321 = arith.constant 0 : index
    %250 = vector.load %arg4[%c3_320, %c0_321] : memref<4x40xf32, #tpu.memory_space<vmem>>, vector<1x40xf32>
    %251 = vector.broadcast %250 : vector<1x40xf32> to vector<64x40xf32>
    %252 = arith.addf %249, %251 : vector<64x40xf32>
    %cst_322 = arith.constant 0.000000e+00 : f32
    %253 = vector.broadcast %cst_322 : f32 to vector<64x40xf32>
    %254 = arith.maximumf %252, %253 : vector<64x40xf32>
    %c0_323 = arith.constant 0 : index
    %c0_324 = arith.constant 0 : index
    %c0_325 = arith.constant 0 : index
    %c0_326 = arith.constant 0 : index
    %255 = vector.load %arg2[%c0_323, %c0_324, %c0_325, %c0_326] : memref<1x8x8x32xf32, #tpu.memory_space<vmem>>, vector<1x8x8x32xf32>
    %256 = vector.shape_cast %255 : vector<1x8x8x32xf32> to vector<8x8x32xf32>
    %257 = vector.shape_cast %256 : vector<8x8x32xf32> to vector<64x32xf32>
    %258 = vector.extract_strided_slice %254 {offsets = [0, 4], sizes = [64, 32], strides = [1, 1]} : vector<64x40xf32> to vector<64x32xf32>
    %259 = arith.addf %258, %257 : vector<64x32xf32>
    %260 = vector.shape_cast %259 : vector<64x32xf32> to vector<8x8x32xf32>
    %c0_327 = arith.constant 0 : index
    %c0_328 = arith.constant 0 : index
    %c0_329 = arith.constant 0 : index
    %c0_330 = arith.constant 0 : index
    %261 = vector.load %arg5[%c0_327, %c0_328, %c0_329, %c0_330] : memref<1x8x8x32xf32, #tpu.memory_space<vmem>>, vector<1x8x8x32xf32>
    %262 = vector.shape_cast %261 : vector<1x8x8x32xf32> to vector<8x8x32xf32>
    %263 = vector.shape_cast %260 : vector<8x8x32xf32> to vector<1x8x8x32xf32>
    tpu.vector_store %arg5[%c0_327, %c0_328, %c0_329, %c0_330], %263 {strides = array<i32>} : memref<1x8x8x32xf32, #tpu.memory_space<vmem>>, vector<1x8x8x32xf32>,
    return
  }
  func.func @transform_0(%arg0: i32) -> (i32, i32, i32, i32) {
    %c0_i32 = arith.constant 0 : i32
    %c0_i32_0 = arith.constant 0 : i32
    %c0_i32_1 = arith.constant 0 : i32
    %c0_i32_2 = arith.constant 0 : i32
    return %arg0, %c0_i32, %c0_i32_0, %c0_i32_1 : i32, i32, i32, i32
  }
  func.func @transform_1(%arg0: i32) -> (i32, i32, i32, i32) {
    %c0_i32 = arith.constant 0 : i32
    %c0_i32_0 = arith.constant 0 : i32
    %c0_i32_1 = arith.constant 0 : i32
    %c0_i32_2 = arith.constant 0 : i32
    return %arg0, %c0_i32, %c0_i32_0, %c0_i32_1 : i32, i32, i32, i32
  }
  func.func @transform_2(%arg0: i32) -> (i32, i32, i32, i32) {
    %c0_i32 = arith.constant 0 : i32
    %c0_i32_0 = arith.constant 0 : i32
    %c0_i32_1 = arith.constant 0 : i32
    %c0_i32_2 = arith.constant 0 : i32
    %c0_i32_3 = arith.constant 0 : i32
    return %c0_i32, %c0_i32_0, %c0_i32_1, %c0_i32_2 : i32, i32, i32, i32
  }
  func.func @transform_3(%arg0: i32) -> (i32, i32) {
    %c0_i32 = arith.constant 0 : i32
    %c0_i32_0 = arith.constant 0 : i32
    %c0_i32_1 = arith.constant 0 : i32
    return %c0_i32, %c0_i32_0 : i32, i32
  }
  func.func @transform_4(%arg0: i32) -> (i32, i32, i32, i32) {
    %c0_i32 = arith.constant 0 : i32
    %c0_i32_0 = arith.constant 0 : i32
    %c0_i32_1 = arith.constant 0 : i32
    %c0_i32_2 = arith.constant 0 : i32
    return %arg0, %c0_i32, %c0_i32_0, %c0_i32_1 : i32, i32, i32, i32
  }
}

</mosaic_0001>

<llo_original>
// kernel: tpu_custom_call.1
$region0: #{tpu_custom_call.1}
  #allocation0 [shape = 'u32[]', space=smem, size = 0x4, offset = 0x4, fixed_abs, tag = 'smem constant byte address 0x4 - core index']
  #allocation1 [shape = 'u32[144,128]{1,0:T(1,128)}', space=vmem, size = 0x12000, scoped, tag = 'internal scratch']
  #allocation2 [shape = 'f32[10,10,40]{2,1,0:T(8,128)}', space=vmem, size = 0x14000, scoped, tag = 'scratch operand']
  %s0 = inlined_call_operand.vmem [shape: f32[2,10,10,40], index: 0, kind: input, shape index: {}]
  %s1 = inlined_call_operand.vmem [shape: f32[2,8,8,32], index: 1, kind: input, shape index: {}]
  %s2 = inlined_call_operand.hbm [shape: f32[4,9,40,40], index: 2, kind: input, shape index: {}]
  %s3 = inlined_call_operand.vmem [shape: f32[4,40], index: 3, kind: input, shape index: {}]
  %s4 = inlined_call_operand.hbm [shape: f32[2,8,8,32], index: 4, kind: output, shape index: {}]
  %s5 = sld [smem:[#allocation0]]
  $region53: #{tpu_custom_call.1} parent=0
    _
  %s7 = ssub.s32 1, %s5
  %s8 = scalar_select 0, %s7, %s5
  $region1: #{tpu_custom_call.1} parent=0
    #allocation3 [shape = 'u8[737280]{0}', space=vmem, size = 0xb4000, scoped, tag = 'input window, operand 2, single buffered']
    #allocation4 [shape = 's32[2]{0}', space=sflag, size = 0x8, scoped, tag = 'scoped memory for tpu_custom_call.1']
    #allocation5 [shape = 's32[2]{0}', space=sflag, size = 0x8, scoped, tag = 'scoped memory for tpu_custom_call.1']
    #allocation6 [shape = 'u8[65536]{0}', space=vmem, size = 0x10000, scoped, tag = 'output window, operand 0']
    %9 = vsyncpa [#allocation4], 0
    %10 = vsyncpa [#allocation5], 0
    %s11 = scalar_lea.sflag [#allocation5], 1
    %12 = vsyncpa %s11, 0
    loop: start=0, step=1, limit=4
    $region2: #{tpu_custom_call.1} parent=1 // loop_pre_header
      _
    $region3: #{tpu_custom_call.1} parent=1 // loop_header
      %s14 = sphi 0, %s18
      %p15 = scmp.ge.s32.totalorder %s14, 4
      %s24 = sphi 0, %s26
      %s27 = sphi 0, %s24
      %s28 = sphi 0, %s27
      %s44 = sphi 0, %s28
      %s50 = sphi 0, %s52
      %s53 = sphi 0, %s50
      %s54 = sphi 0, %s53
      %s70 = sphi 0, %s54
      %s74 = sphi 0, %s74
      %s76 = sphi 0, %s74
      %s77 = sphi 0, %s76
      %s91 = sphi 0, %s77
      %s95 = sphi 0, %s95
      %s97 = sphi 0, %s95
      %s98 = sphi 0, %s97
      %s112 = sphi 0, %s98
      %s118 = sphi 0, %s120
      %s121 = sphi 0, %s118
      %s122 = sphi 0, %s121
      %s138 = sphi 0, %s122
    $region4: #{tpu_custom_call.1} parent=1 // loop_header_branch
      %17 = sbr.rel (%p15) target = $region8
    $region5: #{tpu_custom_call.1} parent=1 // loop_body
      %s19 = ssub.s32 %s14, 1
      %s20 = ssub.s32 %s14, 2
      %s21 = sadd.s32 %s14, 1
      %s22 = ssub.s32 %s14, %s21
      %p23 = scmp.eq.s32.totalorder %s22, 0
      %s25 = sadd.s32 %s24, 1
      %s26 = scalar_select %p23, %s24, %s25
      %p29 = pneg %p23
      %p30 = scmp.eq.s32.totalorder %s14, 1
      %p31 = por %p29, %p30
      %p32 = scmp.ne.s32.totalorder %s24, %s27
      %p33 = scmp.eq.s32.totalorder %s14, 0
      %p34 = por %p32, %p33
      %p35 = scmp.ne.s32.totalorder %s24, %s27
      %p36 = scmp.eq.s32.totalorder %s19, 1
      %p37 = por %p35, %p36
      %p38 = scmp.ne.s32.totalorder %s27, %s28
      %p39 = scmp.eq.s32.totalorder %s19, 0
      %p40 = por %p38, %p39
      %p41 = scmp.ne.s32.totalorder %s27, %s28
      %p42 = scmp.eq.s32.totalorder %s20, 1
      %p43 = por %p41, %p42
      %p45 = scmp.ne.s32.totalorder %s28, %s44
      %p46 = scmp.eq.s32.totalorder %s20, 0
      %p47 = por %p45, %p46
      %s48 = ssub.s32 %s14, %s21
      %p49 = scmp.eq.s32.totalorder %s48, 0
      %s51 = sadd.s32 %s50, 1
      %s52 = scalar_select %p49, %s50, %s51
      %p55 = pneg %p49
      %p56 = scmp.eq.s32.totalorder %s14, 1
      %p57 = por %p55, %p56
      %p58 = scmp.ne.s32.totalorder %s50, %s53
      %p59 = scmp.eq.s32.totalorder %s14, 0
      %p60 = por %p58, %p59
      %p61 = scmp.ne.s32.totalorder %s50, %s53
      %p62 = scmp.eq.s32.totalorder %s19, 1
      %p63 = por %p61, %p62
      %p64 = scmp.ne.s32.totalorder %s53, %s54
      %p65 = scmp.eq.s32.totalorder %s19, 0
      %p66 = por %p64, %p65
      %p67 = scmp.ne.s32.totalorder %s53, %s54
      %p68 = scmp.eq.s32.totalorder %s20, 1
      %p69 = por %p67, %p68
      %p71 = scmp.ne.s32.totalorder %s54, %s70
      %p72 = scmp.eq.s32.totalorder %s20, 0
      %p73 = por %p71, %p72
      %s75 = sadd.s32 %s74, 1
      %p78 = scmp.eq.s32.totalorder %s14, 1
      %p79 = scmp.ne.s32.totalorder %s74, %s76
      %p80 = scmp.eq.s32.totalorder %s14, 0
      %p81 = por %p79, %p80
      %p82 = scmp.ne.s32.totalorder %s74, %s76
      %p83 = scmp.eq.s32.totalorder %s19, 1
      %p84 = por %p82, %p83
      %p85 = scmp.ne.s32.totalorder %s76, %s77
      %p86 = scmp.eq.s32.totalorder %s19, 0
      %p87 = por %p85, %p86
      %p88 = scmp.ne.s32.totalorder %s76, %s77
      %p89 = scmp.eq.s32.totalorder %s20, 1
      %p90 = por %p88, %p89
      %p92 = scmp.ne.s32.totalorder %s77, %s91
      %p93 = scmp.eq.s32.totalorder %s20, 0
      %p94 = por %p92, %p93
      %s96 = sadd.s32 %s95, 1
      %p99 = scmp.eq.s32.totalorder %s14, 1
      %p100 = scmp.ne.s32.totalorder %s95, %s97
      %p101 = scmp.eq.s32.totalorder %s14, 0
      %p102 = por %p100, %p101
      %p103 = scmp.ne.s32.totalorder %s95, %s97
      %p104 = scmp.eq.s32.totalorder %s19, 1
      %p105 = por %p103, %p104
      %p106 = scmp.ne.s32.totalorder %s97, %s98
      %p107 = scmp.eq.s32.totalorder %s19, 0
      %p108 = por %p106, %p107
      %p109 = scmp.ne.s32.totalorder %s97, %s98
      %p110 = scmp.eq.s32.totalorder %s20, 1
      %p111 = por %p109, %p110
      %p113 = scmp.ne.s32.totalorder %s98, %s112
      %p114 = scmp.eq.s32.totalorder %s20, 0
      %p115 = por %p113, %p114
      %s116 = ssub.s32 %s14, %s21
      %p117 = scmp.eq.s32.totalorder %s116, 0
      %s119 = sadd.s32 %s118, 1
      %s120 = scalar_select %p117, %s118, %s119
      %p123 = pneg %p117
      %p124 = scmp.eq.s32.totalorder %s14, 1
      %p125 = por %p123, %p124
      %p126 = scmp.ne.s32.totalorder %s118, %s121
      %p127 = scmp.eq.s32.totalorder %s14, 0
      %p128 = por %p126, %p127
      %p129 = scmp.ne.s32.totalorder %s118, %s121
      %p130 = scmp.eq.s32.totalorder %s19, 1
      %p131 = por %p129, %p130
      %p132 = scmp.ne.s32.totalorder %s121, %s122
      %p133 = scmp.eq.s32.totalorder %s19, 0
      %p134 = por %p132, %p133
      %p135 = scmp.ne.s32.totalorder %s121, %s122
      %p136 = scmp.eq.s32.totalorder %s20, 1
      %p137 = por %p135, %p136
      %p139 = scmp.ne.s32.totalorder %s122, %s138
      %p140 = scmp.eq.s32.totalorder %s20, 0
      %p141 = por %p139, %p140
      %p142 = scmp.le.s32.totalorder 1, %s14
      %p143 = scmp.lt.s32.totalorder %s14, 3
      %p144 = pnand %p142, %p143
      %p145 = pneg %p144
      // Predicated region
      $region9: #{tpu_custom_call.1} parent=5 // pred_check
        _
      $region10: #{tpu_custom_call.1} parent=5 // pred_check_branch
        %147 = sbr.rel (%p144) target = $region12
      $region11: #{tpu_custom_call.1} parent=5 // pred_region
        %s148 = ssub.s32 %s14, 1
        // Predicated region
        $region13: #{tpu_custom_call.1} parent=11 // pred_check
          %p149 = pneg %p87
        $region14: #{tpu_custom_call.1} parent=11 // pred_check_branch
          %151 = sbr.rel (%p149) target = $region16
        $region15: #{tpu_custom_call.1} parent=11 // pred_region
          %s153 = ssub.s32 23040, 23040
          %154 = vsyncadd [#allocation4], %s153
          %s155 = sshll.u32 [#allocation3], 4
          %s156 = int_to_ptr.vmem [resolvable:$true] %s155
          %161 = dma.hbm_to_vmem [thread:$0]  %s2, 23040, %s156, [#allocation4], 128, 128, 8
        $region16: #{tpu_custom_call.1} parent=11 // pred_fallthru
          _
        // Predicated region
        $region17: #{tpu_custom_call.1} parent=11 // pred_check
          %p162 = pneg %p108
        $region18: #{tpu_custom_call.1} parent=11 // pred_check_branch
          %164 = sbr.rel (%p162) target = $region20
        $region19: #{tpu_custom_call.1} parent=11 // pred_region
          _
        $region20: #{tpu_custom_call.1} parent=11 // pred_fallthru
          _
      $region12: #{tpu_custom_call.1} parent=5 // pred_fallthru
        _
      %p165 = scmp.lt.s32.totalorder %s14, 2
      // Predicated region
      $region21: #{tpu_custom_call.1} parent=5 // pred_check
        %p166 = pneg %p165
      $region22: #{tpu_custom_call.1} parent=5 // pred_check_branch
        %168 = sbr.rel (%p166) target = $region24
      $region23: #{tpu_custom_call.1} parent=5 // pred_region
        // Predicated region
        $region25: #{tpu_custom_call.1} parent=23 // pred_check
          %p169 = pneg %p34
        $region26: #{tpu_custom_call.1} parent=23 // pred_check_branch
          %171 = sbr.rel (%p169) target = $region28
        $region27: #{tpu_custom_call.1} parent=23 // pred_region
          %p172 = scmp.lt.s32.totalorder %s14, 1
          %s173 = scalar_select %p172, %s14, 1
          %s174 = smul.addr %s173, 20
          %s175 = smul.addr %s174, 8
          %s176 = scalar_lea.vmem %s0, %s175
        $region28: #{tpu_custom_call.1} parent=23 // pred_fallthru
          _
        // Predicated region
        $region29: #{tpu_custom_call.1} parent=23 // pred_check
          %p177 = pneg %p60
        $region30: #{tpu_custom_call.1} parent=23 // pred_check_branch
          %179 = sbr.rel (%p177) target = $region32
        $region31: #{tpu_custom_call.1} parent=23 // pred_region
          %p180 = scmp.lt.s32.totalorder %s14, 1
          %s181 = scalar_select %p180, %s14, 1
          %s182 = smul.addr %s181, 8
          %s183 = smul.addr %s182, 8
          %s184 = scalar_lea.vmem %s1, %s183
        $region32: #{tpu_custom_call.1} parent=23 // pred_fallthru
          _
      $region24: #{tpu_custom_call.1} parent=5 // pred_fallthru
        _
      %p185 = scmp.le.s32.totalorder 1, %s14
      %p186 = scmp.lt.s32.totalorder %s14, 3
      %p187 = pnand %p185, %p186
      %p188 = pneg %p187
      // Predicated region
      $region33: #{tpu_custom_call.1} parent=5 // pred_check
        _
      $region34: #{tpu_custom_call.1} parent=5 // pred_check_branch
        %190 = sbr.rel (%p187) target = $region36
      $region35: #{tpu_custom_call.1} parent=5 // pred_region
        %s191 = ssub.s32 %s14, 1
        // Predicated region
        $region37: #{tpu_custom_call.1} parent=35 // pred_check
          %p192 = pneg %p87
        $region38: #{tpu_custom_call.1} parent=35 // pred_check_branch
          %194 = sbr.rel (%p192) target = $region40
        $region39: #{tpu_custom_call.1} parent=35 // pred_region
          %195 = dma.done [#allocation4], 23040
        $region40: #{tpu_custom_call.1} parent=35 // pred_fallthru
          _
        %p196 = scmp.lt.s32.totalorder %s19, 1
        %s197 = scalar_select %p196, %s19, 1
        %s198 = smul.addr %s197, 20
        %s199 = smul.addr %s198, 8
        %s200 = scalar_lea.vmem %s0, %s199
        %p201 = pneg %p40
        %p202 = pneg %p37
        %p203 = scmp.lt.s32.totalorder %s19, 1
        %s204 = scalar_select %p203, %s19, 1
        %s205 = smul.addr %s204, 8
        %s206 = smul.addr %s205, 8
        %s207 = scalar_lea.vmem %s1, %s206
        %p208 = pneg %p66
        %p209 = pneg %p63
        %p210 = pneg %p87
        %p211 = pneg %p84
        %p212 = pneg %p108
        %p213 = pneg %p105
        %p214 = pneg %p134
        %p215 = pneg %p131
        %s216 = sand.u32 %s121, 1
        %s217 = scalar_lea.sflag [#allocation5], %s216
        %s218 = sand.u32 %s121, 1
        %s219 = smul.addr %s218, 64
        %s220 = scalar_lea.vmem [#allocation6], %s219
        %p221 = scmp.lt.s32.totalorder %s19, 1
        %s222 = scalar_select %p221, %s19, 1
        %s223 = smul.addr %s222, 20
        %s224 = smul.addr %s223, 8
        %s225 = scalar_lea.vmem %s0, %s224
        %p226 = scmp.lt.s32.totalorder %s19, 1
        %s227 = scalar_select %p226, %s19, 1
        %s228 = smul.addr %s227, 8
        %s229 = smul.addr %s228, 8
        %s230 = scalar_lea.vmem %s1, %s229
        %vm231 = vcmask 326656
        %232 = vst.msk [vmem:[#allocation2] sm:$0xff] %vm231, 0.0
        %vm233 = vcmask 320512
        %234 = vst.msk [vmem:[#allocation2 + $0x8] sm:$0x3] %vm233, 0.0
        %s235 = scalar_lea.vmem [#allocation2], 144
        %236 = vst.msk [vmem:[%s235] sm:$0xff] %vm231, 0.0
        %237 = vst.msk [vmem:[%s235 + $0x8] sm:$0x3] %vm233, 0.0
        %s238 = scalar_lea.vmem [#allocation2], 16
        %vm239 = vcmask 319488
        %240 = vst.msk [vmem:[%s238] sm:$0x1] %vm239, 0.0
        %241 = vst.msk [vmem:[%s238 + $0x10] sm:$0x1] %vm239, 0.0
        %242 = vst.msk [vmem:[%s238 + $0x20] sm:$0x1] %vm239, 0.0
        %243 = vst.msk [vmem:[%s238 + $0x30] sm:$0x1] %vm239, 0.0
        %244 = vst.msk [vmem:[%s238 + $0x40] sm:$0x1] %vm239, 0.0
        %245 = vst.msk [vmem:[%s238 + $0x50] sm:$0x1] %vm239, 0.0
        %246 = vst.msk [vmem:[%s238 + $0x60] sm:$0x1] %vm239, 0.0
        %247 = vst.msk [vmem:[%s238 + $0x70] sm:$0x1] %vm239, 0.0
        %248 = vst.msk [vmem:[%s238 + $0x9] sm:$0x1] %vm239, 0.0
        %249 = vst.msk [vmem:[%s238 + $0x19] sm:$0x1] %vm239, 0.0
        %250 = vst.msk [vmem:[%s238 + $0x29] sm:$0x1] %vm239, 0.0
        %251 = vst.msk [vmem:[%s238 + $0x39] sm:$0x1] %vm239, 0.0
        %252 = vst.msk [vmem:[%s238 + $0x49] sm:$0x1] %vm239, 0.0
        %253 = vst.msk [vmem:[%s238 + $0x59] sm:$0x1] %vm239, 0.0
        %254 = vst.msk [vmem:[%s238 + $0x69] sm:$0x1] %vm239, 0.0
        %255 = vst.msk [vmem:[%s238 + $0x79] sm:$0x1] %vm239, 0.0
        %v256 = vld [vmem:[%s225] sm:$0xff]
        %v257 = vld [vmem:[%s225 + $0x10] sm:$0xff]
        %v258 = vld [vmem:[%s225 + $0x20] sm:$0xff]
        %v259 = vld [vmem:[%s225 + $0x30] sm:$0xff]
        %v260 = vld [vmem:[%s225 + $0x40] sm:$0xff]
        %v261 = vld [vmem:[%s225 + $0x50] sm:$0xff]
        %v262 = vld [vmem:[%s225 + $0x60] sm:$0xff]
        %v263 = vld [vmem:[%s225 + $0x70] sm:$0xff]
        %v264 = vld [vmem:[#allocation3] sm:$0xff]
        %v265 = vld [vmem:[#allocation3 + $0x8] sm:$0xff]
        %v266 = vld [vmem:[#allocation3 + $0x10] sm:$0xff]
        %v267 = vld [vmem:[#allocation3 + $0x18] sm:$0xff]
        %v268 = vld [vmem:[#allocation3 + $0x20] sm:$0xff]
        %v269 = vld [vmem:[%s225 + $0x1] sm:$0xff]
        %v270 = vld [vmem:[%s225 + $0x11] sm:$0xff]
        %v271 = vld [vmem:[%s225 + $0x21] sm:$0xff]
        %v272 = vld [vmem:[%s225 + $0x31] sm:$0xff]
        %v273 = vld [vmem:[%s225 + $0x41] sm:$0xff]
        %v274 = vld [vmem:[%s225 + $0x51] sm:$0xff]
        %v275 = vld [vmem:[%s225 + $0x61] sm:$0xff]
        %v276 = vld [vmem:[%s225 + $0x71] sm:$0xff]
        %s277 = scalar_lea.vmem [#allocation3], 40
        %v278 = vld [vmem:[%s277] sm:$0xff]
        %v279 = vld [vmem:[%s277 + $0x8] sm:$0xff]
        %v280 = vld [vmem:[%s277 + $0x10] sm:$0xff]
        %v281 = vld [vmem:[%s277 + $0x18] sm:$0xff]
        %v282 = vld [vmem:[%s277 + $0x20] sm:$0xff]
        %v284 = vsel %vm231, %v269, 0
        %v287 = vsel %vm231, %v270, 0
        %v290 = vsel %vm231, %v271, 0
        %v293 = vsel %vm231, %v272, 0
        %v296 = vsel %vm231, %v273, 0
        %v299 = vsel %vm231, %v274, 0
        %v302 = vsel %vm231, %v275, 0
        %v305 = vsel %vm231, %v276, 0
        %307 = vmatprep.subr.mxu0 0.0
        %308 = vmatpush1.msra.mxu0 %v278
        %309 = vmatprep.subr.mxu0 0.0
        %310 = vmatpush1.msra.mxu0 %v279
        %311 = vmatprep.subr.mxu0 0.0
        %312 = vmatpush1.msra.mxu0 %v280
        %313 = vmatprep.subr.mxu0 0.0
        %314 = vmatpush1.msra.mxu0 %v281
        %315 = vmatprep.subr.mxu0 0.0
        %316 = vmatpush1.msra.mxu0 %v282
        %317 = vmatprep.subr.mxu0 0.0
        %318 = vmatpush1.msra.mxu0 0.0
        %319 = vmatprep.subr.mxu0 0.0
        %320 = vmatpush1.msra.mxu0 0.0
        %321 = vmatprep.subr.mxu0 0.0
        %322 = vmatpush1.msra.mxu0 0.0
        %323 = vmatprep.subr.mxu0 0.0
        %324 = vmatpush1.msra.mxu0 0.0
        %325 = vmatprep.subr.mxu0 0.0
        %326 = vmatpush1.msra.mxu0 0.0
        %327 = vmatprep.subr.mxu0 0.0
        %328 = vmatpush1.msra.mxu0 0.0
        %329 = vmatprep.subr.mxu0 0.0
        %330 = vmatpush1.msra.mxu0 0.0
        %331 = vmatprep.subr.mxu0 0.0
        %332 = vmatpush1.msra.mxu0 0.0
        %333 = vmatprep.subr.mxu0 0.0
        %334 = vmatpush1.msra.mxu0 0.0
        %335 = vmatprep.subr.mxu0 0.0
        %336 = vmatpush1.msra.mxu0 0.0
        %337 = vmatprep.subr.mxu0 0.0
        %338 = vmatpush1.msra.mxu0 0.0
        %339 = vmatprep.subr.mxu0 0.0
        %340 = vmatpush1.msra.mxu0 0.0
        %341 = vmatprep.subr.mxu0 0.0
        %342 = vmatpush1.msra.mxu0 0.0
        %343 = vmatprep.subr.mxu0 0.0
        %344 = vmatpush1.msra.mxu0 0.0
        %345 = vmatprep.subr.mxu0 0.0
        %346 = vmatpush1.msra.mxu0 0.0
        %347 = vmatprep.subr.mxu0 0.0
        %348 = vmatpush1.msra.mxu0 0.0
        %349 = vmatprep.subr.mxu0 0.0
        %350 = vmatpush1.msra.mxu0 0.0
        %351 = vmatprep.subr.mxu0 0.0
        %352 = vmatpush1.msra.mxu0 0.0
        %353 = vmatprep.subr.mxu0 0.0
        %354 = vmatpush1.msra.mxu0 0.0
        %355 = vmatprep.subr.mxu0 0.0
        %356 = vmatpush1.msra.mxu0 0.0
        %357 = vmatprep.subr.mxu0 0.0
        %358 = vmatpush1.msra.mxu0 0.0
        %359 = vmatprep.subr.mxu0 0.0
        %360 = vmatpush1.msra.mxu0 0.0
        %361 = vmatprep.subr.mxu0 0.0
        %362 = vmatpush1.msra.mxu0 0.0
        %363 = vmatprep.subr.mxu0 0.0
        %364 = vmatpush1.msra.mxu0 0.0
        %365 = vmatprep.subr.mxu0 0.0
        %366 = vmatpush1.msra.mxu0 0.0
        %367 = vmatprep.subr.mxu0 0.0
        %368 = vmatpush1.msra.mxu0 0.0
        %369 = vmatprep.subr.mxu0 0.0
        %370 = vmatpush1.msra.mxu0 0.0
        %371 = vmatprep.mubr.f32.mxu0 0.0
        %372 = vmatmul.mubr.f32.gmra.mrb[0].mxu0 %v284
        %v373 = vpop.f32.mrb[0].mxu0
        %v374 = vadd.f32 0.0, %v373
        %v375 = vpop.f32.mrb[0].mxu0
        %376 = vmatprep.mubr.f32.mxu0 0.0
        %377 = vmatmul.mubr.f32.gmra.mrb[0].mxu0 %v287
        %v378 = vpop.f32.mrb[0].mxu0
        %v379 = vadd.f32 0.0, %v378
        %v380 = vpop.f32.mrb[0].mxu0
        %381 = vmatprep.mubr.f32.mxu0 0.0
        %382 = vmatmul.mubr.f32.gmra.mrb[0].mxu0 %v290
        %v383 = vpop.f32.mrb[0].mxu0
        %v384 = vadd.f32 0.0, %v383
        %v385 = vpop.f32.mrb[0].mxu0
        %386 = vmatprep.mubr.f32.mxu0 0.0
        %387 = vmatmul.mubr.f32.gmra.mrb[0].mxu0 %v293
        %v388 = vpop.f32.mrb[0].mxu0
        %v389 = vadd.f32 0.0, %v388
        %v390 = vpop.f32.mrb[0].mxu0
        %391 = vmatprep.mubr.f32.mxu0 0.0
        %392 = vmatmul.mubr.f32.gmra.mrb[0].mxu0 %v296
        %v393 = vpop.f32.mrb[0].mxu0
        %v394 = vadd.f32 0.0, %v393
        %v395 = vpop.f32.mrb[0].mxu0
        %396 = vmatprep.mubr.f32.mxu0 0.0
        %397 = vmatmul.mubr.f32.gmra.mrb[0].mxu0 %v299
        %v398 = vpop.f32.mrb[0].mxu0
        %v399 = vadd.f32 0.0, %v398
        %v400 = vpop.f32.mrb[0].mxu0
        %401 = vmatprep.mubr.f32.mxu0 0.0
        %402 = vmatmul.mubr.f32.gmra.mrb[0].mxu0 %v302
        %v403 = vpop.f32.mrb[0].mxu0
        %v404 = vadd.f32 0.0, %v403
        %v405 = vpop.f32.mrb[0].mxu0
        %406 = vmatprep.mubr.f32.mxu0 0.0
        %407 = vmatmul.mubr.f32.gmra.mrb[0].mxu0 %v305
        %v408 = vpop.f32.mrb[0].mxu0
        %v409 = vadd.f32 0.0, %v408
        %v410 = vpop.f32.mrb[0].mxu0
        %411 = vdwg.mxu0
        %v413 = vsel %vm231, %v256, 0
        %v416 = vsel %vm231, %v257, 0
        %v419 = vsel %vm231, %v258, 0
        %v422 = vsel %vm231, %v259, 0
        %v425 = vsel %vm231, %v260, 0
        %v428 = vsel %vm231, %v261, 0
        %v431 = vsel %vm231, %v262, 0
        %v434 = vsel %vm231, %v263, 0
        %436 = vmatprep.subr.mxu0 0.0
        %437 = vmatpush1.msra.mxu0 %v264
        %438 = vmatprep.subr.mxu0 0.0
        %439 = vmatpush1.msra.mxu0 %v265
        %440 = vmatprep.subr.mxu0 0.0
        %441 = vmatpush1.msra.mxu0 %v266
        %442 = vmatprep.subr.mxu0 0.0
        %443 = vmatpush1.msra.mxu0 %v267
        %444 = vmatprep.subr.mxu0 0.0
        %445 = vmatpush1.msra.mxu0 %v268
        %446 = vmatprep.subr.mxu0 0.0
        %447 = vmatpush1.msra.mxu0 0.0
        %448 = vmatprep.subr.mxu0 0.0
        %449 = vmatpush1.msra.mxu0 0.0
        %450 = vmatprep.subr.mxu0 0.0
        %451 = vmatpush1.msra.mxu0 0.0
        %452 = vmatprep.subr.mxu0 0.0
        %453 = vmatpush1.msra.mxu0 0.0
        %454 = vmatprep.subr.mxu0 0.0
        %455 = vmatpush1.msra.mxu0 0.0
        %456 = vmatprep.subr.mxu0 0.0
        %457 = vmatpush1.msra.mxu0 0.0
        %458 = vmatprep.subr.mxu0 0.0
        %459 = vmatpush1.msra.mxu0 0.0
        %460 = vmatprep.subr.mxu0 0.0
        %461 = vmatpush1.msra.mxu0 0.0
        %462 = vmatprep.subr.mxu0 0.0
        %463 = vmatpush1.msra.mxu0 0.0
        %464 = vmatprep.subr.mxu0 0.0
        %465 = vmatpush1.msra.mxu0 0.0
        %466 = vmatprep.subr.mxu0 0.0
        %467 = vmatpush1.msra.mxu0 0.0
        %468 = vmatprep.subr.mxu0 0.0
        %469 = vmatpush1.msra.mxu0 0.0
        %470 = vmatprep.subr.mxu0 0.0
        %471 = vmatpush1.msra.mxu0 0.0
        %472 = vmatprep.subr.mxu0 0.0
        %473 = vmatpush1.msra.mxu0 0.0
        %474 = vmatprep.subr.mxu0 0.0
        %475 = vmatpush1.msra.mxu0 0.0
        %476 = vmatprep.subr.mxu0 0.0
        %477 = vmatpush1.msra.mxu0 0.0
        %478 = vmatprep.subr.mxu0 0.0
        %479 = vmatpush1.msra.mxu0 0.0
        %480 = vmatprep.subr.mxu0 0.0
        %481 = vmatpush1.msra.mxu0 0.0
        %482 = vmatprep.subr.mxu0 0.0
        %483 = vmatpush1.msra.mxu0 0.0
        %484 = vmatprep.subr.mxu0 0.0
        %485 = vmatpush1.msra.mxu0 0.0
        %486 = vmatprep.subr.mxu0 0.0
        %487 = vmatpush1.msra.mxu0 0.0
        %488 = vmatprep.subr.mxu0 0.0
        %489 = vmatpush1.msra.mxu0 0.0
        %490 = vmatprep.subr.mxu0 0.0
        %491 = vmatpush1.msra.mxu0 0.0
        %492 = vmatprep.subr.mxu0 0.0
        %493 = vmatpush1.msra.mxu0 0.0
        %494 = vmatprep.subr.mxu0 0.0
        %495 = vmatpush1.msra.mxu0 0.0
        %496 = vmatprep.subr.mxu0 0.0
        %497 = vmatpush1.msra.mxu0 0.0
        %498 = vmatprep.subr.mxu0 0.0
        %499 = vmatpush1.msra.mxu0 0.0
        %500 = vmatprep.mubr.f32.mxu0 0.0
        %501 = vmatmul.mubr.f32.gmra.mrb[0].mxu0 %v413
        %v502 = vpop.f32.mrb[0].mxu0
        %v503 = vadd.f32 %v374, %v502
        %v504 = vpop.f32.mrb[0].mxu0
        %505 = vmatprep.mubr.f32.mxu0 0.0
        %506 = vmatmul.mubr.f32.gmra.mrb[0].mxu0 %v416
        %v507 = vpop.f32.mrb[0].mxu0
        %v508 = vadd.f32 %v379, %v507
        %v509 = vpop.f32.mrb[0].mxu0
        %510 = vmatprep.mubr.f32.mxu0 0.0
        %511 = vmatmul.mubr.f32.gmra.mrb[0].mxu0 %v419
        %v512 = vpop.f32.mrb[0].mxu0
        %v513 = vadd.f32 %v384, %v512
        %v514 = vpop.f32.mrb[0].mxu0
        %515 = vmatprep.mubr.f32.mxu0 0.0
        %516 = vmatmul.mubr.f32.gmra.mrb[0].mxu0 %v422
        %v517 = vpop.f32.mrb[0].mxu0
        %v518 = vadd.f32 %v389, %v517
        %v519 = vpop.f32.mrb[0].mxu0
        %520 = vmatprep.mubr.f32.mxu0 0.0
        %521 = vmatmul.mubr.f32.gmra.mrb[0].mxu0 %v425
        %v522 = vpop.f32.mrb[0].mxu0
        %v523 = vadd.f32 %v394, %v522
        %v524 = vpop.f32.mrb[0].mxu0
        %525 = vmatprep.mubr.f32.mxu0 0.0
        %526 = vmatmul.mubr.f32.gmra.mrb[0].mxu0 %v428
        %v527 = vpop.f32.mrb[0].mxu0
        %v528 = vadd.f32 %v399, %v527
        %v529 = vpop.f32.mrb[0].mxu0
        %530 = vmatprep.mubr.f32.mxu0 0.0
        %531 = vmatmul.mubr.f32.gmra.mrb[0].mxu0 %v431
        %v532 = vpop.f32.mrb[0].mxu0
        %v533 = vadd.f32 %v404, %v532
        %v534 = vpop.f32.mrb[0].mxu0
        %535 = vmatprep.mubr.f32.mxu0 0.0
        %536 = vmatmul.mubr.f32.gmra.mrb[0].mxu0 %v434
        %v537 = vpop.f32.mrb[0].mxu0
        %v538 = vadd.f32 %v409, %v537
        %v539 = vpop.f32.mrb[0].mxu0
        %540 = vdwg.mxu0
        %v541 = vld [vmem:[%s225 + $0x2] sm:$0xff]
        %v542 = vld [vmem:[%s225 + $0x12] sm:$0xff]
        %v543 = vld [vmem:[%s225 + $0x22] sm:$0xff]
        %v544 = vld [vmem:[%s225 + $0x32] sm:$0xff]
        %v545 = vld [vmem:[%s225 + $0x42] sm:$0xff]
        %v546 = vld [vmem:[%s225 + $0x52] sm:$0xff]
        %v547 = vld [vmem:[%s225 + $0x62] sm:$0xff]
        %v548 = vld [vmem:[%s225 + $0x72] sm:$0xff]
        %s549 = scalar_lea.vmem [#allocation3], 80
        %v550 = vld [vmem:[%s549] sm:$0xff]
        %v551 = vld [vmem:[%s549 + $0x8] sm:$0xff]
        %v552 = vld [vmem:[%s549 + $0x10] sm:$0xff]
        %v553 = vld [vmem:[%s549 + $0x18] sm:$0xff]
        %v554 = vld [vmem:[%s549 + $0x20] sm:$0xff]
        %v556 = vsel %vm231, %v541, 0
        %v559 = vsel %vm231, %v542, 0
        %v562 = vsel %vm231, %v543, 0
        %v565 = vsel %vm231, %v544, 0
        %v568 = vsel %vm231, %v545, 0
        %v571 = vsel %vm231, %v546, 0
        %v574 = vsel %vm231, %v547, 0
        %v577 = vsel %vm231, %v548, 0
        %579 = vmatprep.subr.mxu0 0.0
        %580 = vmatpush1.msra.mxu0 %v550
        %581 = vmatprep.subr.mxu0 0.0
        %582 = vmatpush1.msra.mxu0 %v551
        %583 = vmatprep.subr.mxu0 0.0
        %584 = vmatpush1.msra.mxu0 %v552
        %585 = vmatprep.subr.mxu0 0.0
        %586 = vmatpush1.msra.mxu0 %v553
        %587 = vmatprep.subr.mxu0 0.0
        %588 = vmatpush1.msra.mxu0 %v554
        %589 = vmatprep.subr.mxu0 0.0
        %590 = vmatpush1.msra.mxu0 0.0
        %591 = vmatprep.subr.mxu0 0.0
        %592 = vmatpush1.msra.mxu0 0.0
        %593 = vmatprep.subr.mxu0 0.0
        %594 = vmatpush1.msra.mxu0 0.0
        %595 = vmatprep.subr.mxu0 0.0
        %596 = vmatpush1.msra.mxu0 0.0
        %597 = vmatprep.subr.mxu0 0.0
        %598 = vmatpush1.msra.mxu0 0.0
        %599 = vmatprep.subr.mxu0 0.0
        %600 = vmatpush1.msra.mxu0 0.0
        %601 = vmatprep.subr.mxu0 0.0
        %602 = vmatpush1.msra.mxu0 0.0
        %603 = vmatprep.subr.mxu0 0.0
        %604 = vmatpush1.msra.mxu0 0.0
        %605 = vmatprep.subr.mxu0 0.0
        %606 = vmatpush1.msra.mxu0 0.0
        %607 = vmatprep.subr.mxu0 0.0
        %608 = vmatpush1.msra.mxu0 0.0
        %609 = vmatprep.subr.mxu0 0.0
        %610 = vmatpush1.msra.mxu0 0.0
        %611 = vmatprep.subr.mxu0 0.0
        %612 = vmatpush1.msra.mxu0 0.0
        %613 = vmatprep.subr.mxu0 0.0
        %614 = vmatpush1.msra.mxu0 0.0
        %615 = vmatprep.subr.mxu0 0.0
        %616 = vmatpush1.msra.mxu0 0.0
        %617 = vmatprep.subr.mxu0 0.0
        %618 = vmatpush1.msra.mxu0 0.0
        %619 = vmatprep.subr.mxu0 0.0
        %620 = vmatpush1.msra.mxu0 0.0
        %621 = vmatprep.subr.mxu0 0.0
        %622 = vmatpush1.msra.mxu0 0.0
        %623 = vmatprep.subr.mxu0 0.0
        %624 = vmatpush1.msra.mxu0 0.0
        %625 = vmatprep.subr.mxu0 0.0
        %626 = vmatpush1.msra.mxu0 0.0
        %627 = vmatprep.subr.mxu0 0.0
        %628 = vmatpush1.msra.mxu0 0.0
        %629 = vmatprep.subr.mxu0 0.0
        %630 = vmatpush1.msra.mxu0 0.0
        %631 = vmatprep.subr.mxu0 0.0
        %632 = vmatpush1.msra.mxu0 0.0
        %633 = vmatprep.subr.mxu0 0.0
        %634 = vmatpush1.msra.mxu0 0.0
        %635 = vmatprep.subr.mxu0 0.0
        %636 = vmatpush1.msra.mxu0 0.0
        %637 = vmatprep.subr.mxu0 0.0
        %638 = vmatpush1.msra.mxu0 0.0
        %639 = vmatprep.subr.mxu0 0.0
        %640 = vmatpush1.msra.mxu0 0.0
        %641 = vmatprep.subr.mxu0 0.0
        %642 = vmatpush1.msra.mxu0 0.0
        %643 = vmatprep.mubr.f32.mxu0 0.0
        %644 = vmatmul.mubr.f32.gmra.mrb[0].mxu0 %v556
        %v645 = vpop.f32.mrb[0].mxu0
        %v646 = vadd.f32 0.0, %v645
        %v647 = vpop.f32.mrb[0].mxu0
        %648 = vmatprep.mubr.f32.mxu0 0.0
        %649 = vmatmul.mubr.f32.gmra.mrb[0].mxu0 %v559
        %v650 = vpop.f32.mrb[0].mxu0
        %v651 = vadd.f32 0.0, %v650
        %v652 = vpop.f32.mrb[0].mxu0
        %653 = vmatprep.mubr.f32.mxu0 0.0
        %654 = vmatmul.mubr.f32.gmra.mrb[0].mxu0 %v562
        %v655 = vpop.f32.mrb[0].mxu0
        %v656 = vadd.f32 0.0, %v655
        %v657 = vpop.f32.mrb[0].mxu0
        %658 = vmatprep.mubr.f32.mxu0 0.0
        %659 = vmatmul.mubr.f32.gmra.mrb[0].mxu0 %v565
        %v660 = vpop.f32.mrb[0].mxu0
        %v661 = vadd.f32 0.0, %v660
        %v662 = vpop.f32.mrb[0].mxu0
        %663 = vmatprep.mubr.f32.mxu0 0.0
        %664 = vmatmul.mubr.f32.gmra.mrb[0].mxu0 %v568
        %v665 = vpop.f32.mrb[0].mxu0
        %v666 = vadd.f32 0.0, %v665
        %v667 = vpop.f32.mrb[0].mxu0
        %668 = vmatprep.mubr.f32.mxu0 0.0
        %669 = vmatmul.mubr.f32.gmra.mrb[0].mxu0 %v571
        %v670 = vpop.f32.mrb[0].mxu0
        %v671 = vadd.f32 0.0, %v670
        %v672 = vpop.f32.mrb[0].mxu0
        %673 = vmatprep.mubr.f32.mxu0 0.0
        %674 = vmatmul.mubr.f32.gmra.mrb[0].mxu0 %v574
        %v675 = vpop.f32.mrb[0].mxu0
        %v676 = vadd.f32 0.0, %v675
        %v677 = vpop.f32.mrb[0].mxu0
        %678 = vmatprep.mubr.f32.mxu0 0.0
        %679 = vmatmul.mubr.f32.gmra.mrb[0].mxu0 %v577
        %v680 = vpop.f32.mrb[0].mxu0
        %v681 = vadd.f32 0.0, %v680
        %v682 = vpop.f32.mrb[0].mxu0
        %683 = vdwg.mxu0
        %v684 = vadd.f32 %v503, %v646
        %v685 = vadd.f32 %v508, %v651
        %v686 = vadd.f32 %v513, %v656
        %v687 = vadd.f32 %v518, %v661
        %v688 = vadd.f32 %v523, %v666
        %v689 = vadd.f32 %v528, %v671
        %v690 = vadd.f32 %v533, %v676
        %v691 = vadd.f32 %v538, %v681
        %s692 = scalar_lea.vmem %s225, 16
        %v693 = vld [vmem:[%s692] sm:$0xff]
        %v694 = vld [vmem:[%s692 + $0x10] sm:$0xff]
        %v695 = vld [vmem:[%s692 + $0x20] sm:$0xff]
        %v696 = vld [vmem:[%s692 + $0x30] sm:$0xff]
        %v697 = vld [vmem:[%s692 + $0x40] sm:$0xff]
        %v698 = vld [vmem:[%s692 + $0x50] sm:$0xff]
        %v699 = vld [vmem:[%s692 + $0x60] sm:$0xff]
        %v700 = vld [vmem:[%s692 + $0x70] sm:$0xff]
        %s701 = scalar_lea.vmem [#allocation3], 120
        %v702 = vld [vmem:[%s701] sm:$0xff]
        %v703 = vld [vmem:[%s701 + $0x8] sm:$0xff]
        %v704 = vld [vmem:[%s701 + $0x10] sm:$0xff]
        %v705 = vld [vmem:[%s701 + $0x18] sm:$0xff]
        %v706 = vld [vmem:[%s701 + $0x20] sm:$0xff]
        %v708 = vsel %vm231, %v693, 0
        %v711 = vsel %vm231, %v694, 0
        %v714 = vsel %vm231, %v695, 0
        %v717 = vsel %vm231, %v696, 0
        %v720 = vsel %vm231, %v697, 0
        %v723 = vsel %vm231, %v698, 0
        %v726 = vsel %vm231, %v699, 0
        %v729 = vsel %vm231, %v700, 0
        %731 = vmatprep.subr.mxu0 0.0
        %732 = vmatpush1.msra.mxu0 %v702
        %733 = vmatprep.subr.mxu0 0.0
        %734 = vmatpush1.msra.mxu0 %v703
        %735 = vmatprep.subr.mxu0 0.0
        %736 = vmatpush1.msra.mxu0 %v704
        %737 = vmatprep.subr.mxu0 0.0
        %738 = vmatpush1.msra.mxu0 %v705
        %739 = vmatprep.subr.mxu0 0.0
        %740 = vmatpush1.msra.mxu0 %v706
        %741 = vmatprep.subr.mxu0 0.0
        %742 = vmatpush1.msra.mxu0 0.0
        %743 = vmatprep.subr.mxu0 0.0
        %744 = vmatpush1.msra.mxu0 0.0
        %745 = vmatprep.subr.mxu0 0.0
        %746 = vmatpush1.msra.mxu0 0.0
        %747 = vmatprep.subr.mxu0 0.0
        %748 = vmatpush1.msra.mxu0 0.0
        %749 = vmatprep.subr.mxu0 0.0
        %750 = vmatpush1.msra.mxu0 0.0
        %751 = vmatprep.subr.mxu0 0.0
        %752 = vmatpush1.msra.mxu0 0.0
        %753 = vmatprep.subr.mxu0 0.0
        %754 = vmatpush1.msra.mxu0 0.0
        %755 = vmatprep.subr.mxu0 0.0
        %756 = vmatpush1.msra.mxu0 0.0
        %757 = vmatprep.subr.mxu0 0.0
        %758 = vmatpush1.msra.mxu0 0.0
        %759 = vmatprep.subr.mxu0 0.0
        %760 = vmatpush1.msra.mxu0 0.0
        %761 = vmatprep.subr.mxu0 0.0
        %762 = vmatpush1.msra.mxu0 0.0
        %763 = vmatprep.subr.mxu0 0.0
        %764 = vmatpush1.msra.mxu0 0.0
        %765 = vmatprep.subr.mxu0 0.0
        %766 = vmatpush1.msra.mxu0 0.0
        %767 = vmatprep.subr.mxu0 0.0
        %768 = vmatpush1.msra.mxu0 0.0
        %769 = vmatprep.subr.mxu0 0.0
        %770 = vmatpush1.msra.mxu0 0.0
        %771 = vmatprep.subr.mxu0 0.0
        %772 = vmatpush1.msra.mxu0 0.0
        %773 = vmatprep.subr.mxu0 0.0
        %774 = vmatpush1.msra.mxu0 0.0
        %775 = vmatprep.subr.mxu0 0.0
        %776 = vmatpush1.msra.mxu0 0.0
        %777 = vmatprep.subr.mxu0 0.0
        %778 = vmatpush1.msra.mxu0 0.0
        %779 = vmatprep.subr.mxu0 0.0
        %780 = vmatpush1.msra.mxu0 0.0
        %781 = vmatprep.subr.mxu0 0.0
        %782 = vmatpush1.msra.mxu0 0.0
        %783 = vmatprep.subr.mxu0 0.0
        %784 = vmatpush1.msra.mxu0 0.0
        %785 = vmatprep.subr.mxu0 0.0
        %786 = vmatpush1.msra.mxu0 0.0
        %787 = vmatprep.subr.mxu0 0.0
        %788 = vmatpush1.msra.mxu0 0.0
        %789 = vmatprep.subr.mxu0 0.0
        %790 = vmatpush1.msra.mxu0 0.0
        %791 = vmatprep.subr.mxu0 0.0
        %792 = vmatpush1.msra.mxu0 0.0
        %793 = vmatprep.subr.mxu0 0.0
        %794 = vmatpush1.msra.mxu0 0.0
        %795 = vmatprep.mubr.f32.mxu0 0.0
        %796 = vmatmul.mubr.f32.gmra.mrb[0].mxu0 %v708
        %v797 = vpop.f32.mrb[0].mxu0
        %v798 = vadd.f32 0.0, %v797
        %v799 = vpop.f32.mrb[0].mxu0
        %800 = vmatprep.mubr.f32.mxu0 0.0
        %801 = vmatmul.mubr.f32.gmra.mrb[0].mxu0 %v711
        %v802 = vpop.f32.mrb[0].mxu0
        %v803 = vadd.f32 0.0, %v802
        %v804 = vpop.f32.mrb[0].mxu0
        %805 = vmatprep.mubr.f32.mxu0 0.0
        %806 = vmatmul.mubr.f32.gmra.mrb[0].mxu0 %v714
        %v807 = vpop.f32.mrb[0].mxu0
        %v808 = vadd.f32 0.0, %v807
        %v809 = vpop.f32.mrb[0].mxu0
        %810 = vmatprep.mubr.f32.mxu0 0.0
        %811 = vmatmul.mubr.f32.gmra.mrb[0].mxu0 %v717
        %v812 = vpop.f32.mrb[0].mxu0
        %v813 = vadd.f32 0.0, %v812
        %v814 = vpop.f32.mrb[0].mxu0
        %815 = vmatprep.mubr.f32.mxu0 0.0
        %816 = vmatmul.mubr.f32.gmra.mrb[0].mxu0 %v720
        %v817 = vpop.f32.mrb[0].mxu0
        %v818 = vadd.f32 0.0, %v817
        %v819 = vpop.f32.mrb[0].mxu0
        %820 = vmatprep.mubr.f32.mxu0 0.0
        %821 = vmatmul.mubr.f32.gmra.mrb[0].mxu0 %v723
        %v822 = vpop.f32.mrb[0].mxu0
        %v823 = vadd.f32 0.0, %v822
        %v824 = vpop.f32.mrb[0].mxu0
        %825 = vmatprep.mubr.f32.mxu0 0.0
        %826 = vmatmul.mubr.f32.gmra.mrb[0].mxu0 %v726
        %v827 = vpop.f32.mrb[0].mxu0
        %v828 = vadd.f32 0.0, %v827
        %v829 = vpop.f32.mrb[0].mxu0
        %830 = vmatprep.mubr.f32.mxu0 0.0
        %831 = vmatmul.mubr.f32.gmra.mrb[0].mxu0 %v729
        %v832 = vpop.f32.mrb[0].mxu0
        %v833 = vadd.f32 0.0, %v832
        %v834 = vpop.f32.mrb[0].mxu0
        %835 = vdwg.mxu0
        %v836 = vadd.f32 %v684, %v798
        %v837 = vadd.f32 %v685, %v803
        %v838 = vadd.f32 %v686, %v808
        %v839 = vadd.f32 %v687, %v813
        %v840 = vadd.f32 %v688, %v818
        %v841 = vadd.f32 %v689, %v823
        %v842 = vadd.f32 %v690, %v828
        %v843 = vadd.f32 %v691, %v833
        %v844 = vld [vmem:[%s692 + $0x1] sm:$0xff]
        %v845 = vld [vmem:[%s692 + $0x11] sm:$0xff]
        %v846 = vld [vmem:[%s692 + $0x21] sm:$0xff]
        %v847 = vld [vmem:[%s692 + $0x31] sm:$0xff]
        %v848 = vld [vmem:[%s692 + $0x41] sm:$0xff]
        %v849 = vld [vmem:[%s692 + $0x51] sm:$0xff]
        %v850 = vld [vmem:[%s692 + $0x61] sm:$0xff]
        %v851 = vld [vmem:[%s692 + $0x71] sm:$0xff]
        %s852 = scalar_lea.vmem [#allocation3], 160
        %v853 = vld [vmem:[%s852] sm:$0xff]
        %v854 = vld [vmem:[%s852 + $0x8] sm:$0xff]
        %v855 = vld [vmem:[%s852 + $0x10] sm:$0xff]
        %v856 = vld [vmem:[%s852 + $0x18] sm:$0xff]
        %v857 = vld [vmem:[%s852 + $0x20] sm:$0xff]
        %v859 = vsel %vm231, %v844, 0
        %v862 = vsel %vm231, %v845, 0
        %v865 = vsel %vm231, %v846, 0
        %v868 = vsel %vm231, %v847, 0
        %v871 = vsel %vm231, %v848, 0
        %v874 = vsel %vm231, %v849, 0
        %v877 = vsel %vm231, %v850, 0
        %v880 = vsel %vm231, %v851, 0
        %882 = vmatprep.subr.mxu0 0.0
        %883 = vmatpush1.msra.mxu0 %v853
        %884 = vmatprep.subr.mxu0 0.0
        %885 = vmatpush1.msra.mxu0 %v854
        %886 = vmatprep.subr.mxu0 0.0
        %887 = vmatpush1.msra.mxu0 %v855
        %888 = vmatprep.subr.mxu0 0.0
        %889 = vmatpush1.msra.mxu0 %v856
        %890 = vmatprep.subr.mxu0 0.0
        %891 = vmatpush1.msra.mxu0 %v857
        %892 = vmatprep.subr.mxu0 0.0
        %893 = vmatpush1.msra.mxu0 0.0
        %894 = vmatprep.subr.mxu0 0.0
        %895 = vmatpush1.msra.mxu0 0.0
        %896 = vmatprep.subr.mxu0 0.0
        %897 = vmatpush1.msra.mxu0 0.0
        %898 = vmatprep.subr.mxu0 0.0
        %899 = vmatpush1.msra.mxu0 0.0
        %900 = vmatprep.subr.mxu0 0.0
        %901 = vmatpush1.msra.mxu0 0.0
        %902 = vmatprep.subr.mxu0 0.0
        %903 = vmatpush1.msra.mxu0 0.0
        %904 = vmatprep.subr.mxu0 0.0
        %905 = vmatpush1.msra.mxu0 0.0
        %906 = vmatprep.subr.mxu0 0.0
        %907 = vmatpush1.msra.mxu0 0.0
        %908 = vmatprep.subr.mxu0 0.0
        %909 = vmatpush1.msra.mxu0 0.0
        %910 = vmatprep.subr.mxu0 0.0
        %911 = vmatpush1.msra.mxu0 0.0
        %912 = vmatprep.subr.mxu0 0.0
        %913 = vmatpush1.msra.mxu0 0.0
        %914 = vmatprep.subr.mxu0 0.0
        %915 = vmatpush1.msra.mxu0 0.0
        %916 = vmatprep.subr.mxu0 0.0
        %917 = vmatpush1.msra.mxu0 0.0
        %918 = vmatprep.subr.mxu0 0.0
        %919 = vmatpush1.msra.mxu0 0.0
        %920 = vmatprep.subr.mxu0 0.0
        %921 = vmatpush1.msra.mxu0 0.0
        %922 = vmatprep.subr.mxu0 0.0
        %923 = vmatpush1.msra.mxu0 0.0
        %924 = vmatprep.subr.mxu0 0.0
        %925 = vmatpush1.msra.mxu0 0.0
        %926 = vmatprep.subr.mxu0 0.0
        %927 = vmatpush1.msra.mxu0 0.0
        %928 = vmatprep.subr.mxu0 0.0
        %929 = vmatpush1.msra.mxu0 0.0
        %930 = vmatprep.subr.mxu0 0.0
        %931 = vmatpush1.msra.mxu0 0.0
        %932 = vmatprep.subr.mxu0 0.0
        %933 = vmatpush1.msra.mxu0 0.0
        %934 = vmatprep.subr.mxu0 0.0
        %935 = vmatpush1.msra.mxu0 0.0
        %936 = vmatprep.subr.mxu0 0.0
        %937 = vmatpush1.msra.mxu0 0.0
        %938 = vmatprep.subr.mxu0 0.0
        %939 = vmatpush1.msra.mxu0 0.0
        %940 = vmatprep.subr.mxu0 0.0
        %941 = vmatpush1.msra.mxu0 0.0
        %942 = vmatprep.subr.mxu0 0.0
        %943 = vmatpush1.msra.mxu0 0.0
        %944 = vmatprep.subr.mxu0 0.0
        %945 = vmatpush1.msra.mxu0 0.0
        %946 = vmatprep.mubr.f32.mxu0 0.0
        %947 = vmatmul.mubr.f32.gmra.mrb[0].mxu0 %v859
        %v948 = vpop.f32.mrb[0].mxu0
        %v949 = vadd.f32 0.0, %v948
        %v950 = vpop.f32.mrb[0].mxu0
        %951 = vmatprep.mubr.f32.mxu0 0.0
        %952 = vmatmul.mubr.f32.gmra.mrb[0].mxu0 %v862
        %v953 = vpop.f32.mrb[0].mxu0
        %v954 = vadd.f32 0.0, %v953
        %v955 = vpop.f32.mrb[0].mxu0
        %956 = vmatprep.mubr.f32.mxu0 0.0
        %957 = vmatmul.mubr.f32.gmra.mrb[0].mxu0 %v865
        %v958 = vpop.f32.mrb[0].mxu0
        %v959 = vadd.f32 0.0, %v958
        %v960 = vpop.f32.mrb[0].mxu0
        %961 = vmatprep.mubr.f32.mxu0 0.0
        %962 = vmatmul.mubr.f32.gmra.mrb[0].mxu0 %v868
        %v963 = vpop.f32.mrb[0].mxu0
        %v964 = vadd.f32 0.0, %v963
        %v965 = vpop.f32.mrb[0].mxu0
        %966 = vmatprep.mubr.f32.mxu0 0.0
        %967 = vmatmul.mubr.f32.gmra.mrb[0].mxu0 %v871
        %v968 = vpop.f32.mrb[0].mxu0
        %v969 = vadd.f32 0.0, %v968
        %v970 = vpop.f32.mrb[0].mxu0
        %971 = vmatprep.mubr.f32.mxu0 0.0
        %972 = vmatmul.mubr.f32.gmra.mrb[0].mxu0 %v874
        %v973 = vpop.f32.mrb[0].mxu0
        %v974 = vadd.f32 0.0, %v973
        %v975 = vpop.f32.mrb[0].mxu0
        %976 = vmatprep.mubr.f32.mxu0 0.0
        %977 = vmatmul.mubr.f32.gmra.mrb[0].mxu0 %v877
        %v978 = vpop.f32.mrb[0].mxu0
        %v979 = vadd.f32 0.0, %v978
        %v980 = vpop.f32.mrb[0].mxu0
        %981 = vmatprep.mubr.f32.mxu0 0.0
        %982 = vmatmul.mubr.f32.gmra.mrb[0].mxu0 %v880
        %v983 = vpop.f32.mrb[0].mxu0
        %v984 = vadd.f32 0.0, %v983
        %v985 = vpop.f32.mrb[0].mxu0
        %986 = vdwg.mxu0
        %v987 = vadd.f32 %v836, %v949
        %v988 = vadd.f32 %v837, %v954
        %v989 = vadd.f32 %v838, %v959
        %v990 = vadd.f32 %v839, %v964
        %v991 = vadd.f32 %v840, %v969
        %v992 = vadd.f32 %v841, %v974
        %v993 = vadd.f32 %v842, %v979
        %v994 = vadd.f32 %v843, %v984
        %v995 = vld [vmem:[%s692 + $0x2] sm:$0xff]
        %v996 = vld [vmem:[%s692 + $0x12] sm:$0xff]
        %v997 = vld [vmem:[%s692 + $0x22] sm:$0xff]
        %v998 = vld [vmem:[%s692 + $0x32] sm:$0xff]
        %v999 = vld [vmem:[%s692 + $0x42] sm:$0xff]
        %v1000 = vld [vmem:[%s692 + $0x52] sm:$0xff]
        %v1001 = vld [vmem:[%s692 + $0x62] sm:$0xff]
        %v1002 = vld [vmem:[%s692 + $0x72] sm:$0xff]
        %s1003 = scalar_lea.vmem [#allocation3], 200
        %v1004 = vld [vmem:[%s1003] sm:$0xff]
        %v1005 = vld [vmem:[%s1003 + $0x8] sm:$0xff]
        %v1006 = vld [vmem:[%s1003 + $0x10] sm:$0xff]
        %v1007 = vld [vmem:[%s1003 + $0x18] sm:$0xff]
        %v1008 = vld [vmem:[%s1003 + $0x20] sm:$0xff]
        %v1010 = vsel %vm231, %v995, 0
        %v1013 = vsel %vm231, %v996, 0
        %v1016 = vsel %vm231, %v997, 0
        %v1019 = vsel %vm231, %v998, 0
        %v1022 = vsel %vm231, %v999, 0
        %v1025 = vsel %vm231, %v1000, 0
        %v1028 = vsel %vm231, %v1001, 0
        %v1031 = vsel %vm231, %v1002, 0
        %1033 = vmatprep.subr.mxu0 0.0
        %1034 = vmatpush1.msra.mxu0 %v1004
        %1035 = vmatprep.subr.mxu0 0.0
        %1036 = vmatpush1.msra.mxu0 %v1005
        %1037 = vmatprep.subr.mxu0 0.0
        %1038 = vmatpush1.msra.mxu0 %v1006
        %1039 = vmatprep.subr.mxu0 0.0
        %1040 = vmatpush1.msra.mxu0 %v1007
        %1041 = vmatprep.subr.mxu0 0.0
        %1042 = vmatpush1.msra.mxu0 %v1008
        %1043 = vmatprep.subr.mxu0 0.0
        %1044 = vmatpush1.msra.mxu0 0.0
        %1045 = vmatprep.subr.mxu0 0.0
        %1046 = vmatpush1.msra.mxu0 0.0
        %1047 = vmatprep.subr.mxu0 0.0
        %1048 = vmatpush1.msra.mxu0 0.0
        %1049 = vmatprep.subr.mxu0 0.0
        %1050 = vmatpush1.msra.mxu0 0.0
        %1051 = vmatprep.subr.mxu0 0.0
        %1052 = vmatpush1.msra.mxu0 0.0
        %1053 = vmatprep.subr.mxu0 0.0
        %1054 = vmatpush1.msra.mxu0 0.0
        %1055 = vmatprep.subr.mxu0 0.0
        %1056 = vmatpush1.msra.mxu0 0.0
        %1057 = vmatprep.subr.mxu0 0.0
        %1058 = vmatpush1.msra.mxu0 0.0
        %1059 = vmatprep.subr.mxu0 0.0
        %1060 = vmatpush1.msra.mxu0 0.0
        %1061 = vmatprep.subr.mxu0 0.0
        %1062 = vmatpush1.msra.mxu0 0.0
        %1063 = vmatprep.subr.mxu0 0.0
        %1064 = vmatpush1.msra.mxu0 0.0
        %1065 = vmatprep.subr.mxu0 0.0
        %1066 = vmatpush1.msra.mxu0 0.0
        %1067 = vmatprep.subr.mxu0 0.0
        %1068 = vmatpush1.msra.mxu0 0.0
        %1069 = vmatprep.subr.mxu0 0.0
        %1070 = vmatpush1.msra.mxu0 0.0
        %1071 = vmatprep.subr.mxu0 0.0
        %1072 = vmatpush1.msra.mxu0 0.0
        %1073 = vmatprep.subr.mxu0 0.0
        %1074 = vmatpush1.msra.mxu0 0.0
        %1075 = vmatprep.subr.mxu0 0.0
        %1076 = vmatpush1.msra.mxu0 0.0
        %1077 = vmatprep.subr.mxu0 0.0
        %1078 = vmatpush1.msra.mxu0 0.0
        %1079 = vmatprep.subr.mxu0 0.0
        %1080 = vmatpush1.msra.mxu0 0.0
        %1081 = vmatprep.subr.mxu0 0.0
        %1082 = vmatpush1.msra.mxu0 0.0
        %1083 = vmatprep.subr.mxu0 0.0
        %1084 = vmatpush1.msra.mxu0 0.0
        %1085 = vmatprep.subr.mxu0 0.0
        %1086 = vmatpush1.msra.mxu0 0.0
        %1087 = vmatprep.subr.mxu0 0.0
        %1088 = vmatpush1.msra.mxu0 0.0
        %1089 = vmatprep.subr.mxu0 0.0
        %1090 = vmatpush1.msra.mxu0 0.0
        %1091 = vmatprep.subr.mxu0 0.0
        %1092 = vmatpush1.msra.mxu0 0.0
        %1093 = vmatprep.subr.mxu0 0.0
        %1094 = vmatpush1.msra.mxu0 0.0
        %1095 = vmatprep.subr.mxu0 0.0
        %1096 = vmatpush1.msra.mxu0 0.0
        %1097 = vmatprep.mubr.f32.mxu0 0.0
        %1098 = vmatmul.mubr.f32.gmra.mrb[0].mxu0 %v1010
        %v1099 = vpop.f32.mrb[0].mxu0
        %v1100 = vadd.f32 0.0, %v1099
        %v1101 = vpop.f32.mrb[0].mxu0
        %1102 = vmatprep.mubr.f32.mxu0 0.0
        %1103 = vmatmul.mubr.f32.gmra.mrb[0].mxu0 %v1013
        %v1104 = vpop.f32.mrb[0].mxu0
        %v1105 = vadd.f32 0.0, %v1104
        %v1106 = vpop.f32.mrb[0].mxu0
        %1107 = vmatprep.mubr.f32.mxu0 0.0
        %1108 = vmatmul.mubr.f32.gmra.mrb[0].mxu0 %v1016
        %v1109 = vpop.f32.mrb[0].mxu0
        %v1110 = vadd.f32 0.0, %v1109
        %v1111 = vpop.f32.mrb[0].mxu0
        %1112 = vmatprep.mubr.f32.mxu0 0.0
        %1113 = vmatmul.mubr.f32.gmra.mrb[0].mxu0 %v1019
        %v1114 = vpop.f32.mrb[0].mxu0
        %v1115 = vadd.f32 0.0, %v1114
        %v1116 = vpop.f32.mrb[0].mxu0
        %1117 = vmatprep.mubr.f32.mxu0 0.0
        %1118 = vmatmul.mubr.f32.gmra.mrb[0].mxu0 %v1022
        %v1119 = vpop.f32.mrb[0].mxu0
        %v1120 = vadd.f32 0.0, %v1119
        %v1121 = vpop.f32.mrb[0].mxu0
        %1122 = vmatprep.mubr.f32.mxu0 0.0
        %1123 = vmatmul.mubr.f32.gmra.mrb[0].mxu0 %v1025
        %v1124 = vpop.f32.mrb[0].mxu0
        %v1125 = vadd.f32 0.0, %v1124
        %v1126 = vpop.f32.mrb[0].mxu0
        %1127 = vmatprep.mubr.f32.mxu0 0.0
        %1128 = vmatmul.mubr.f32.gmra.mrb[0].mxu0 %v1028
        %v1129 = vpop.f32.mrb[0].mxu0
        %v1130 = vadd.f32 0.0, %v1129
        %v1131 = vpop.f32.mrb[0].mxu0
        %1132 = vmatprep.mubr.f32.mxu0 0.0
        %1133 = vmatmul.mubr.f32.gmra.mrb[0].mxu0 %v1031
        %v1134 = vpop.f32.mrb[0].mxu0
        %v1135 = vadd.f32 0.0, %v1134
        %v1136 = vpop.f32.mrb[0].mxu0
        %1137 = vdwg.mxu0
        %v1138 = vadd.f32 %v987, %v1100
        %v1139 = vadd.f32 %v988, %v1105
        %v1140 = vadd.f32 %v989, %v1110
        %v1141 = vadd.f32 %v990, %v1115
        %v1142 = vadd.f32 %v991, %v1120
        %v1143 = vadd.f32 %v992, %v1125
        %v1144 = vadd.f32 %v993, %v1130
        %v1145 = vadd.f32 %v994, %v1135
        %s1146 = scalar_lea.vmem %s225, 32
        %v1147 = vld [vmem:[%s1146] sm:$0xff]
        %v1148 = vld [vmem:[%s1146 + $0x10] sm:$0xff]
        %v1149 = vld [vmem:[%s1146 + $0x20] sm:$0xff]
        %v1150 = vld [vmem:[%s1146 + $0x30] sm:$0xff]
        %v1151 = vld [vmem:[%s1146 + $0x40] sm:$0xff]
        %v1152 = vld [vmem:[%s1146 + $0x50] sm:$0xff]
        %v1153 = vld [vmem:[%s1146 + $0x60] sm:$0xff]
        %v1154 = vld [vmem:[%s1146 + $0x70] sm:$0xff]
        %s1155 = scalar_lea.vmem [#allocation3], 240
        %v1156 = vld [vmem:[%s1155] sm:$0xff]
        %v1157 = vld [vmem:[%s1155 + $0x8] sm:$0xff]
        %v1158 = vld [vmem:[%s1155 + $0x10] sm:$0xff]
        %v1159 = vld [vmem:[%s1155 + $0x18] sm:$0xff]
        %v1160 = vld [vmem:[%s1155 + $0x20] sm:$0xff]
        %v1162 = vsel %vm231, %v1147, 0
        %v1165 = vsel %vm231, %v1148, 0
        %v1168 = vsel %vm231, %v1149, 0
        %v1171 = vsel %vm231, %v1150, 0
        %v1174 = vsel %vm231, %v1151, 0
        %v1177 = vsel %vm231, %v1152, 0
        %v1180 = vsel %vm231, %v1153, 0
        %v1183 = vsel %vm231, %v1154, 0
        %1185 = vmatprep.subr.mxu0 0.0
        %1186 = vmatpush1.msra.mxu0 %v1156
        %1187 = vmatprep.subr.mxu0 0.0
        %1188 = vmatpush1.msra.mxu0 %v1157
        %1189 = vmatprep.subr.mxu0 0.0
        %1190 = vmatpush1.msra.mxu0 %v1158
        %1191 = vmatprep.subr.mxu0 0.0
        %1192 = vmatpush1.msra.mxu0 %v1159
        %1193 = vmatprep.subr.mxu0 0.0
        %1194 = vmatpush1.msra.mxu0 %v1160
        %1195 = vmatprep.subr.mxu0 0.0
        %1196 = vmatpush1.msra.mxu0 0.0
        %1197 = vmatprep.subr.mxu0 0.0
        %1198 = vmatpush1.msra.mxu0 0.0
        %1199 = vmatprep.subr.mxu0 0.0
        %1200 = vmatpush1.msra.mxu0 0.0
        %1201 = vmatprep.subr.mxu0 0.0
        %1202 = vmatpush1.msra.mxu0 0.0
        %1203 = vmatprep.subr.mxu0 0.0
        %1204 = vmatpush1.msra.mxu0 0.0
        %1205 = vmatprep.subr.mxu0 0.0
        %1206 = vmatpush1.msra.mxu0 0.0
        %1207 = vmatprep.subr.mxu0 0.0
        %1208 = vmatpush1.msra.mxu0 0.0
        %1209 = vmatprep.subr.mxu0 0.0
        %1210 = vmatpush1.msra.mxu0 0.0
        %1211 = vmatprep.subr.mxu0 0.0
        %1212 = vmatpush1.msra.mxu0 0.0
        %1213 = vmatprep.subr.mxu0 0.0
        %1214 = vmatpush1.msra.mxu0 0.0
        %1215 = vmatprep.subr.mxu0 0.0
        %1216 = vmatpush1.msra.mxu0 0.0
        %1217 = vmatprep.subr.mxu0 0.0
        %1218 = vmatpush1.msra.mxu0 0.0
        %1219 = vmatprep.subr.mxu0 0.0
        %1220 = vmatpush1.msra.mxu0 0.0
        %1221 = vmatprep.subr.mxu0 0.0
        %1222 = vmatpush1.msra.mxu0 0.0
        %1223 = vmatprep.subr.mxu0 0.0
        %1224 = vmatpush1.msra.mxu0 0.0
        %1225 = vmatprep.subr.mxu0 0.0
        %1226 = vmatpush1.msra.mxu0 0.0
        %1227 = vmatprep.subr.mxu0 0.0
        %1228 = vmatpush1.msra.mxu0 0.0
        %1229 = vmatprep.subr.mxu0 0.0
        %1230 = vmatpush1.msra.mxu0 0.0
        %1231 = vmatprep.subr.mxu0 0.0
        %1232 = vmatpush1.msra.mxu0 0.0
        %1233 = vmatprep.subr.mxu0 0.0
        %1234 = vmatpush1.msra.mxu0 0.0
        %1235 = vmatprep.subr.mxu0 0.0
        %1236 = vmatpush1.msra.mxu0 0.0
        %1237 = vmatprep.subr.mxu0 0.0
        %1238 = vmatpush1.msra.mxu0 0.0
        %1239 = vmatprep.subr.mxu0 0.0
        %1240 = vmatpush1.msra.mxu0 0.0
        %1241 = vmatprep.subr.mxu0 0.0
        %1242 = vmatpush1.msra.mxu0 0.0
        %1243 = vmatprep.subr.mxu0 0.0
        %1244 = vmatpush1.msra.mxu0 0.0
        %1245 = vmatprep.subr.mxu0 0.0
        %1246 = vmatpush1.msra.mxu0 0.0
        %1247 = vmatprep.subr.mxu0 0.0
        %1248 = vmatpush1.msra.mxu0 0.0
        %1249 = vmatprep.mubr.f32.mxu0 0.0
        %1250 = vmatmul.mubr.f32.gmra.mrb[0].mxu0 %v1162
        %v1251 = vpop.f32.mrb[0].mxu0
        %v1252 = vadd.f32 0.0, %v1251
        %v1253 = vpop.f32.mrb[0].mxu0
        %1254 = vmatprep.mubr.f32.mxu0 0.0
        %1255 = vmatmul.mubr.f32.gmra.mrb[0].mxu0 %v1165
        %v1256 = vpop.f32.mrb[0].mxu0
        %v1257 = vadd.f32 0.0, %v1256
        %v1258 = vpop.f32.mrb[0].mxu0
        %1259 = vmatprep.mubr.f32.mxu0 0.0
        %1260 = vmatmul.mubr.f32.gmra.mrb[0].mxu0 %v1168
        %v1261 = vpop.f32.mrb[0].mxu0
        %v1262 = vadd.f32 0.0, %v1261
        %v1263 = vpop.f32.mrb[0].mxu0
        %1264 = vmatprep.mubr.f32.mxu0 0.0
        %1265 = vmatmul.mubr.f32.gmra.mrb[0].mxu0 %v1171
        %v1266 = vpop.f32.mrb[0].mxu0
        %v1267 = vadd.f32 0.0, %v1266
        %v1268 = vpop.f32.mrb[0].mxu0
        %1269 = vmatprep.mubr.f32.mxu0 0.0
        %1270 = vmatmul.mubr.f32.gmra.mrb[0].mxu0 %v1174
        %v1271 = vpop.f32.mrb[0].mxu0
        %v1272 = vadd.f32 0.0, %v1271
        %v1273 = vpop.f32.mrb[0].mxu0
        %1274 = vmatprep.mubr.f32.mxu0 0.0
        %1275 = vmatmul.mubr.f32.gmra.mrb[0].mxu0 %v1177
        %v1276 = vpop.f32.mrb[0].mxu0
        %v1277 = vadd.f32 0.0, %v1276
        %v1278 = vpop.f32.mrb[0].mxu0
        %1279 = vmatprep.mubr.f32.mxu0 0.0
        %1280 = vmatmul.mubr.f32.gmra.mrb[0].mxu0 %v1180
        %v1281 = vpop.f32.mrb[0].mxu0
        %v1282 = vadd.f32 0.0, %v1281
        %v1283 = vpop.f32.mrb[0].mxu0
        %1284 = vmatprep.mubr.f32.mxu0 0.0
        %1285 = vmatmul.mubr.f32.gmra.mrb[0].mxu0 %v1183
        %v1286 = vpop.f32.mrb[0].mxu0
        %v1287 = vadd.f32 0.0, %v1286
        %v1288 = vpop.f32.mrb[0].mxu0
        %1289 = vdwg.mxu0
        %v1290 = vadd.f32 %v1138, %v1252
        %v1291 = vadd.f32 %v1139, %v1257
        %v1292 = vadd.f32 %v1140, %v1262
        %v1293 = vadd.f32 %v1141, %v1267
        %v1294 = vadd.f32 %v1142, %v1272
        %v1295 = vadd.f32 %v1143, %v1277
        %v1296 = vadd.f32 %v1144, %v1282
        %v1297 = vadd.f32 %v1145, %v1287
        %v1298 = vld [vmem:[%s1146 + $0x1] sm:$0xff]
        %v1299 = vld [vmem:[%s1146 + $0x11] sm:$0xff]
        %v1300 = vld [vmem:[%s1146 + $0x21] sm:$0xff]
        %v1301 = vld [vmem:[%s1146 + $0x31] sm:$0xff]
        %v1302 = vld [vmem:[%s1146 + $0x41] sm:$0xff]
        %v1303 = vld [vmem:[%s1146 + $0x51] sm:$0xff]
        %v1304 = vld [vmem:[%s1146 + $0x61] sm:$0xff]
        %v1305 = vld [vmem:[%s1146 + $0x71] sm:$0xff]
        %s1306 = scalar_lea.vmem [#allocation3], 280
        %v1307 = vld [vmem:[%s1306] sm:$0xff]
        %v1308 = vld [vmem:[%s1306 + $0x8] sm:$0xff]
        %v1309 = vld [vmem:[%s1306 + $0x10] sm:$0xff]
        %v1310 = vld [vmem:[%s1306 + $0x18] sm:$0xff]
        %v1311 = vld [vmem:[%s1306 + $0x20] sm:$0xff]
        %v1313 = vsel %vm231, %v1298, 0
        %v1316 = vsel %vm231, %v1299, 0
        %v1319 = vsel %vm231, %v1300, 0
        %v1322 = vsel %vm231, %v1301, 0
        %v1325 = vsel %vm231, %v1302, 0
        %v1328 = vsel %vm231, %v1303, 0
        %v1331 = vsel %vm231, %v1304, 0
        %v1334 = vsel %vm231, %v1305, 0
        %1336 = vmatprep.subr.mxu0 0.0
        %1337 = vmatpush1.msra.mxu0 %v1307
        %1338 = vmatprep.subr.mxu0 0.0
        %1339 = vmatpush1.msra.mxu0 %v1308
        %1340 = vmatprep.subr.mxu0 0.0
        %1341 = vmatpush1.msra.mxu0 %v1309
        %1342 = vmatprep.subr.mxu0 0.0
        %1343 = vmatpush1.msra.mxu0 %v1310
        %1344 = vmatprep.subr.mxu0 0.0
        %1345 = vmatpush1.msra.mxu0 %v1311
        %1346 = vmatprep.subr.mxu0 0.0
        %1347 = vmatpush1.msra.mxu0 0.0
        %1348 = vmatprep.subr.mxu0 0.0
        %1349 = vmatpush1.msra.mxu0 0.0
        %1350 = vmatprep.subr.mxu0 0.0
        %1351 = vmatpush1.msra.mxu0 0.0
        %1352 = vmatprep.subr.mxu0 0.0
        %1353 = vmatpush1.msra.mxu0 0.0
        %1354 = vmatprep.subr.mxu0 0.0
        %1355 = vmatpush1.msra.mxu0 0.0
        %1356 = vmatprep.subr.mxu0 0.0
        %1357 = vmatpush1.msra.mxu0 0.0
        %1358 = vmatprep.subr.mxu0 0.0
        %1359 = vmatpush1.msra.mxu0 0.0
        %1360 = vmatprep.subr.mxu0 0.0
        %1361 = vmatpush1.msra.mxu0 0.0
        %1362 = vmatprep.subr.mxu0 0.0
        %1363 = vmatpush1.msra.mxu0 0.0
        %1364 = vmatprep.subr.mxu0 0.0
        %1365 = vmatpush1.msra.mxu0 0.0
        %1366 = vmatprep.subr.mxu0 0.0
        %1367 = vmatpush1.msra.mxu0 0.0
        %1368 = vmatprep.subr.mxu0 0.0
        %1369 = vmatpush1.msra.mxu0 0.0
        %1370 = vmatprep.subr.mxu0 0.0
        %1371 = vmatpush1.msra.mxu0 0.0
        %1372 = vmatprep.subr.mxu0 0.0
        %1373 = vmatpush1.msra.mxu0 0.0
        %1374 = vmatprep.subr.mxu0 0.0
        %1375 = vmatpush1.msra.mxu0 0.0
        %1376 = vmatprep.subr.mxu0 0.0
        %1377 = vmatpush1.msra.mxu0 0.0
        %1378 = vmatprep.subr.mxu0 0.0
        %1379 = vmatpush1.msra.mxu0 0.0
        %1380 = vmatprep.subr.mxu0 0.0
        %1381 = vmatpush1.msra.mxu0 0.0
        %1382 = vmatprep.subr.mxu0 0.0
        %1383 = vmatpush1.msra.mxu0 0.0
        %1384 = vmatprep.subr.mxu0 0.0
        %1385 = vmatpush1.msra.mxu0 0.0
        %1386 = vmatprep.subr.mxu0 0.0
        %1387 = vmatpush1.msra.mxu0 0.0
        %1388 = vmatprep.subr.mxu0 0.0
        %1389 = vmatpush1.msra.mxu0 0.0
        %1390 = vmatprep.subr.mxu0 0.0
        %1391 = vmatpush1.msra.mxu0 0.0
        %1392 = vmatprep.subr.mxu0 0.0
        %1393 = vmatpush1.msra.mxu0 0.0
        %1394 = vmatprep.subr.mxu0 0.0
        %1395 = vmatpush1.msra.mxu0 0.0
        %1396 = vmatprep.subr.mxu0 0.0
        %1397 = vmatpush1.msra.mxu0 0.0
        %1398 = vmatprep.subr.mxu0 0.0
        %1399 = vmatpush1.msra.mxu0 0.0
        %1400 = vmatprep.mubr.f32.mxu0 0.0
        %1401 = vmatmul.mubr.f32.gmra.mrb[0].mxu0 %v1313
        %v1402 = vpop.f32.mrb[0].mxu0
        %v1403 = vadd.f32 0.0, %v1402
        %v1404 = vpop.f32.mrb[0].mxu0
        %1405 = vmatprep.mubr.f32.mxu0 0.0
        %1406 = vmatmul.mubr.f32.gmra.mrb[0].mxu0 %v1316
        %v1407 = vpop.f32.mrb[0].mxu0
        %v1408 = vadd.f32 0.0, %v1407
        %v1409 = vpop.f32.mrb[0].mxu0
        %1410 = vmatprep.mubr.f32.mxu0 0.0
        %1411 = vmatmul.mubr.f32.gmra.mrb[0].mxu0 %v1319
        %v1412 = vpop.f32.mrb[0].mxu0
        %v1413 = vadd.f32 0.0, %v1412
        %v1414 = vpop.f32.mrb[0].mxu0
        %1415 = vmatprep.mubr.f32.mxu0 0.0
        %1416 = vmatmul.mubr.f32.gmra.mrb[0].mxu0 %v1322
        %v1417 = vpop.f32.mrb[0].mxu0
        %v1418 = vadd.f32 0.0, %v1417
        %v1419 = vpop.f32.mrb[0].mxu0
        %1420 = vmatprep.mubr.f32.mxu0 0.0
        %1421 = vmatmul.mubr.f32.gmra.mrb[0].mxu0 %v1325
        %v1422 = vpop.f32.mrb[0].mxu0
        %v1423 = vadd.f32 0.0, %v1422
        %v1424 = vpop.f32.mrb[0].mxu0
        %1425 = vmatprep.mubr.f32.mxu0 0.0
        %1426 = vmatmul.mubr.f32.gmra.mrb[0].mxu0 %v1328
        %v1427 = vpop.f32.mrb[0].mxu0
        %v1428 = vadd.f32 0.0, %v1427
        %v1429 = vpop.f32.mrb[0].mxu0
        %1430 = vmatprep.mubr.f32.mxu0 0.0
        %1431 = vmatmul.mubr.f32.gmra.mrb[0].mxu0 %v1331
        %v1432 = vpop.f32.mrb[0].mxu0
        %v1433 = vadd.f32 0.0, %v1432
        %v1434 = vpop.f32.mrb[0].mxu0
        %1435 = vmatprep.mubr.f32.mxu0 0.0
        %1436 = vmatmul.mubr.f32.gmra.mrb[0].mxu0 %v1334
        %v1437 = vpop.f32.mrb[0].mxu0
        %v1438 = vadd.f32 0.0, %v1437
        %v1439 = vpop.f32.mrb[0].mxu0
        %1440 = vdwg.mxu0
        %v1441 = vadd.f32 %v1290, %v1403
        %v1442 = vadd.f32 %v1291, %v1408
        %v1443 = vadd.f32 %v1292, %v1413
        %v1444 = vadd.f32 %v1293, %v1418
        %v1445 = vadd.f32 %v1294, %v1423
        %v1446 = vadd.f32 %v1295, %v1428
        %v1447 = vadd.f32 %v1296, %v1433
        %v1448 = vadd.f32 %v1297, %v1438
        %v1449 = vld [vmem:[%s1146 + $0x2] sm:$0xff]
        %v1450 = vld [vmem:[%s1146 + $0x12] sm:$0xff]
        %v1451 = vld [vmem:[%s1146 + $0x22] sm:$0xff]
        %v1452 = vld [vmem:[%s1146 + $0x32] sm:$0xff]
        %v1453 = vld [vmem:[%s1146 + $0x42] sm:$0xff]
        %v1454 = vld [vmem:[%s1146 + $0x52] sm:$0xff]
        %v1455 = vld [vmem:[%s1146 + $0x62] sm:$0xff]
        %v1456 = vld [vmem:[%s1146 + $0x72] sm:$0xff]
        %s1457 = scalar_lea.vmem [#allocation3], 320
        %v1458 = vld [vmem:[%s1457] sm:$0xff]
        %v1459 = vld [vmem:[%s1457 + $0x8] sm:$0xff]
        %v1460 = vld [vmem:[%s1457 + $0x10] sm:$0xff]
        %v1461 = vld [vmem:[%s1457 + $0x18] sm:$0xff]
        %v1462 = vld [vmem:[%s1457 + $0x20] sm:$0xff]
        %v1464 = vsel %vm231, %v1449, 0
        %v1467 = vsel %vm231, %v1450, 0
        %v1470 = vsel %vm231, %v1451, 0
        %v1473 = vsel %vm231, %v1452, 0
        %v1476 = vsel %vm231, %v1453, 0
        %v1479 = vsel %vm231, %v1454, 0
        %v1482 = vsel %vm231, %v1455, 0
        %v1485 = vsel %vm231, %v1456, 0
        %1487 = vmatprep.subr.mxu0 0.0
        %1488 = vmatpush1.msra.mxu0 %v1458
        %1489 = vmatprep.subr.mxu0 0.0
        %1490 = vmatpush1.msra.mxu0 %v1459
        %1491 = vmatprep.subr.mxu0 0.0
        %1492 = vmatpush1.msra.mxu0 %v1460
        %1493 = vmatprep.subr.mxu0 0.0
        %1494 = vmatpush1.msra.mxu0 %v1461
        %1495 = vmatprep.subr.mxu0 0.0
        %1496 = vmatpush1.msra.mxu0 %v1462
        %1497 = vmatprep.subr.mxu0 0.0
        %1498 = vmatpush1.msra.mxu0 0.0
        %1499 = vmatprep.subr.mxu0 0.0
        %1500 = vmatpush1.msra.mxu0 0.0
        %1501 = vmatprep.subr.mxu0 0.0
        %1502 = vmatpush1.msra.mxu0 0.0
        %1503 = vmatprep.subr.mxu0 0.0
        %1504 = vmatpush1.msra.mxu0 0.0
        %1505 = vmatprep.subr.mxu0 0.0
        %1506 = vmatpush1.msra.mxu0 0.0
        %1507 = vmatprep.subr.mxu0 0.0
        %1508 = vmatpush1.msra.mxu0 0.0
        %1509 = vmatprep.subr.mxu0 0.0
        %1510 = vmatpush1.msra.mxu0 0.0
        %1511 = vmatprep.subr.mxu0 0.0
        %1512 = vmatpush1.msra.mxu0 0.0
        %1513 = vmatprep.subr.mxu0 0.0
        %1514 = vmatpush1.msra.mxu0 0.0
        %1515 = vmatprep.subr.mxu0 0.0
        %1516 = vmatpush1.msra.mxu0 0.0
        %1517 = vmatprep.subr.mxu0 0.0
        %1518 = vmatpush1.msra.mxu0 0.0
        %1519 = vmatprep.subr.mxu0 0.0
        %1520 = vmatpush1.msra.mxu0 0.0
        %1521 = vmatprep.subr.mxu0 0.0
        %1522 = vmatpush1.msra.mxu0 0.0
        %1523 = vmatprep.subr.mxu0 0.0
        %1524 = vmatpush1.msra.mxu0 0.0
        %1525 = vmatprep.subr.mxu0 0.0
        %1526 = vmatpush1.msra.mxu0 0.0
        %1527 = vmatprep.subr.mxu0 0.0
        %1528 = vmatpush1.msra.mxu0 0.0
        %1529 = vmatprep.subr.mxu0 0.0
        %1530 = vmatpush1.msra.mxu0 0.0
        %1531 = vmatprep.subr.mxu0 0.0
        %1532 = vmatpush1.msra.mxu0 0.0
        %1533 = vmatprep.subr.mxu0 0.0
        %1534 = vmatpush1.msra.mxu0 0.0
        %1535 = vmatprep.subr.mxu0 0.0
        %1536 = vmatpush1.msra.mxu0 0.0
        %1537 = vmatprep.subr.mxu0 0.0
        %1538 = vmatpush1.msra.mxu0 0.0
        %1539 = vmatprep.subr.mxu0 0.0
        %1540 = vmatpush1.msra.mxu0 0.0
        %1541 = vmatprep.subr.mxu0 0.0
        %1542 = vmatpush1.msra.mxu0 0.0
        %1543 = vmatprep.subr.mxu0 0.0
        %1544 = vmatpush1.msra.mxu0 0.0
        %1545 = vmatprep.subr.mxu0 0.0
        %1546 = vmatpush1.msra.mxu0 0.0
        %1547 = vmatprep.subr.mxu0 0.0
        %1548 = vmatpush1.msra.mxu0 0.0
        %1549 = vmatprep.subr.mxu0 0.0
        %1550 = vmatpush1.msra.mxu0 0.0
        %1551 = vmatprep.mubr.f32.mxu0 0.0
        %1552 = vmatmul.mubr.f32.gmra.mrb[0].mxu0 %v1464
        %v1553 = vpop.f32.mrb[0].mxu0
        %v1554 = vadd.f32 0.0, %v1553
        %v1555 = vpop.f32.mrb[0].mxu0
        %1556 = vmatprep.mubr.f32.mxu0 0.0
        %1557 = vmatmul.mubr.f32.gmra.mrb[0].mxu0 %v1467
        %v1558 = vpop.f32.mrb[0].mxu0
        %v1559 = vadd.f32 0.0, %v1558
        %v1560 = vpop.f32.mrb[0].mxu0
        %1561 = vmatprep.mubr.f32.mxu0 0.0
        %1562 = vmatmul.mubr.f32.gmra.mrb[0].mxu0 %v1470
        %v1563 = vpop.f32.mrb[0].mxu0
        %v1564 = vadd.f32 0.0, %v1563
        %v1565 = vpop.f32.mrb[0].mxu0
        %1566 = vmatprep.mubr.f32.mxu0 0.0
        %1567 = vmatmul.mubr.f32.gmra.mrb[0].mxu0 %v1473
        %v1568 = vpop.f32.mrb[0].mxu0
        %v1569 = vadd.f32 0.0, %v1568
        %v1570 = vpop.f32.mrb[0].mxu0
        %1571 = vmatprep.mubr.f32.mxu0 0.0
        %1572 = vmatmul.mubr.f32.gmra.mrb[0].mxu0 %v1476
        %v1573 = vpop.f32.mrb[0].mxu0
        %v1574 = vadd.f32 0.0, %v1573
        %v1575 = vpop.f32.mrb[0].mxu0
        %1576 = vmatprep.mubr.f32.mxu0 0.0
        %1577 = vmatmul.mubr.f32.gmra.mrb[0].mxu0 %v1479
        %v1578 = vpop.f32.mrb[0].mxu0
        %v1579 = vadd.f32 0.0, %v1578
        %v1580 = vpop.f32.mrb[0].mxu0
        %1581 = vmatprep.mubr.f32.mxu0 0.0
        %1582 = vmatmul.mubr.f32.gmra.mrb[0].mxu0 %v1482
        %v1583 = vpop.f32.mrb[0].mxu0
        %v1584 = vadd.f32 0.0, %v1583
        %v1585 = vpop.f32.mrb[0].mxu0
        %1586 = vmatprep.mubr.f32.mxu0 0.0
        %1587 = vmatmul.mubr.f32.gmra.mrb[0].mxu0 %v1485
        %v1588 = vpop.f32.mrb[0].mxu0
        %v1589 = vadd.f32 0.0, %v1588
        %v1590 = vpop.f32.mrb[0].mxu0
        %1591 = vdwg.mxu0
        %v1592 = vadd.f32 %v1441, %v1554
        %v1593 = vadd.f32 %v1442, %v1559
        %v1594 = vadd.f32 %v1443, %v1564
        %v1595 = vadd.f32 %v1444, %v1569
        %v1596 = vadd.f32 %v1445, %v1574
        %v1597 = vadd.f32 %v1446, %v1579
        %v1598 = vadd.f32 %v1447, %v1584
        %v1599 = vadd.f32 %v1448, %v1589
        %v1600 = vld [vmem:[%s3] sm:$0x1]
        %v1601 = vlaneseq
        %v1602 = vshrl.u32 %v1601, 7
        %v1603 = vsub.s32 0, %v1602
        %v1604 = vrot.slane %v1600, %v1603
        %v1605 = vadd.f32 %v1592, %v1604
        %v1606 = vadd.f32 %v1593, %v1604
        %v1607 = vadd.f32 %v1594, %v1604
        %v1608 = vadd.f32 %v1595, %v1604
        %v1609 = vadd.f32 %v1596, %v1604
        %v1610 = vadd.f32 %v1597, %v1604
        %v1611 = vadd.f32 %v1598, %v1604
        %v1612 = vadd.f32 %v1599, %v1604
        %v1613 = vmax.f32 %v1605, 0.0
        %v1614 = vmax.f32 %v1606, 0.0
        %v1615 = vmax.f32 %v1607, 0.0
        %v1616 = vmax.f32 %v1608, 0.0
        %v1617 = vmax.f32 %v1609, 0.0
        %v1618 = vmax.f32 %v1610, 0.0
        %v1619 = vmax.f32 %v1611, 0.0
        %v1620 = vmax.f32 %v1612, 0.0
        %1621 = vst.msk [vmem:[%s238 + $0x1] sm:$0xff] %vm231, %v1613
        %1622 = vst.msk [vmem:[%s238 + $0x11] sm:$0xff] %vm231, %v1614
        %1623 = vst.msk [vmem:[%s238 + $0x21] sm:$0xff] %vm231, %v1615
        %1624 = vst.msk [vmem:[%s238 + $0x31] sm:$0xff] %vm231, %v1616
        %1625 = vst.msk [vmem:[%s238 + $0x41] sm:$0xff] %vm231, %v1617
        %1626 = vst.msk [vmem:[%s238 + $0x51] sm:$0xff] %vm231, %v1618
        %1627 = vst.msk [vmem:[%s238 + $0x61] sm:$0xff] %vm231, %v1619
        %1628 = vst.msk [vmem:[%s238 + $0x71] sm:$0xff] %vm231, %v1620
        %v1629 = vld [vmem:[#allocation2] sm:$0xff]
        %v1630 = vld [vmem:[#allocation2 + $0x10] sm:$0xff]
        %v1631 = vld [vmem:[#allocation2 + $0x20] sm:$0xff]
        %v1632 = vld [vmem:[#allocation2 + $0x30] sm:$0xff]
        %v1633 = vld [vmem:[#allocation2 + $0x40] sm:$0xff]
        %v1634 = vld [vmem:[#allocation2 + $0x50] sm:$0xff]
        %v1635 = vld [vmem:[#allocation2 + $0x60] sm:$0xff]
        %v1636 = vld [vmem:[#allocation2 + $0x70] sm:$0xff]
        %s1637 = scalar_lea.vmem [#allocation3], 360
        %v1638 = vld [vmem:[%s1637] sm:$0xff]
        %v1639 = vld [vmem:[%s1637 + $0x8] sm:$0xff]
        %v1640 = vld [vmem:[%s1637 + $0x10] sm:$0xff]
        %v1641 = vld [vmem:[%s1637 + $0x18] sm:$0xff]
        %v1642 = vld [vmem:[%s1637 + $0x20] sm:$0xff]
        %v1643 = vld [vmem:[#allocation2 + $0x1] sm:$0xff]
        %v1644 = vld [vmem:[#allocation2 + $0x11] sm:$0xff]
        %v1645 = vld [vmem:[#allocation2 + $0x21] sm:$0xff]
        %v1646 = vld [vmem:[#allocation2 + $0x31] sm:$0xff]
        %v1647 = vld [vmem:[#allocation2 + $0x41] sm:$0xff]
        %v1648 = vld [vmem:[#allocation2 + $0x51] sm:$0xff]
        %v1649 = vld [vmem:[#allocation2 + $0x61] sm:$0xff]
        %v1650 = vld [vmem:[#allocation2 + $0x71] sm:$0xff]
        %s1651 = scalar_lea.vmem [#allocation3], 400
        %v1652 = vld [vmem:[%s1651] sm:$0xff]
        %v1653 = vld [vmem:[%s1651 + $0x8] sm:$0xff]
        %v1654 = vld [vmem:[%s1651 + $0x10] sm:$0xff]
        %v1655 = vld [vmem:[%s1651 + $0x18] sm:$0xff]
        %v1656 = vld [vmem:[%s1651 + $0x20] sm:$0xff]
        %v1658 = vsel %vm231, %v1643, 0
        %v1661 = vsel %vm231, %v1644, 0
        %v1664 = vsel %vm231, %v1645, 0
        %v1667 = vsel %vm231, %v1646, 0
        %v1670 = vsel %vm231, %v1647, 0
        %v1673 = vsel %vm231, %v1648, 0
        %v1676 = vsel %vm231, %v1649, 0
        %v1679 = vsel %vm231, %v1650, 0
        %1681 = vmatprep.subr.mxu0 0.0
        %1682 = vmatpush1.msra.mxu0 %v1652
        %1683 = vmatprep.subr.mxu0 0.0
        %1684 = vmatpush1.msra.mxu0 %v1653
        %1685 = vmatprep.subr.mxu0 0.0
        %1686 = vmatpush1.msra.mxu0 %v1654
        %1687 = vmatprep.subr.mxu0 0.0
        %1688 = vmatpush1.msra.mxu0 %v1655
        %1689 = vmatprep.subr.mxu0 0.0
        %1690 = vmatpush1.msra.mxu0 %v1656
        %1691 = vmatprep.subr.mxu0 0.0
        %1692 = vmatpush1.msra.mxu0 0.0
        %1693 = vmatprep.subr.mxu0 0.0
        %1694 = vmatpush1.msra.mxu0 0.0
        %1695 = vmatprep.subr.mxu0 0.0
        %1696 = vmatpush1.msra.mxu0 0.0
        %1697 = vmatprep.subr.mxu0 0.0
        %1698 = vmatpush1.msra.mxu0 0.0
        %1699 = vmatprep.subr.mxu0 0.0
        %1700 = vmatpush1.msra.mxu0 0.0
        %1701 = vmatprep.subr.mxu0 0.0
        %1702 = vmatpush1.msra.mxu0 0.0
        %1703 = vmatprep.subr.mxu0 0.0
        %1704 = vmatpush1.msra.mxu0 0.0
        %1705 = vmatprep.subr.mxu0 0.0
        %1706 = vmatpush1.msra.mxu0 0.0
        %1707 = vmatprep.subr.mxu0 0.0
        %1708 = vmatpush1.msra.mxu0 0.0
        %1709 = vmatprep.subr.mxu0 0.0
        %1710 = vmatpush1.msra.mxu0 0.0
        %1711 = vmatprep.subr.mxu0 0.0
        %1712 = vmatpush1.msra.mxu0 0.0
        %1713 = vmatprep.subr.mxu0 0.0
        %1714 = vmatpush1.msra.mxu0 0.0
        %1715 = vmatprep.subr.mxu0 0.0
        %1716 = vmatpush1.msra.mxu0 0.0
        %1717 = vmatprep.subr.mxu0 0.0
        %1718 = vmatpush1.msra.mxu0 0.0
        %1719 = vmatprep.subr.mxu0 0.0
        %1720 = vmatpush1.msra.mxu0 0.0
        %1721 = vmatprep.subr.mxu0 0.0
        %1722 = vmatpush1.msra.mxu0 0.0
        %1723 = vmatprep.subr.mxu0 0.0
        %1724 = vmatpush1.msra.mxu0 0.0
        %1725 = vmatprep.subr.mxu0 0.0
        %1726 = vmatpush1.msra.mxu0 0.0
        %1727 = vmatprep.subr.mxu0 0.0
        %1728 = vmatpush1.msra.mxu0 0.0
        %1729 = vmatprep.subr.mxu0 0.0
        %1730 = vmatpush1.msra.mxu0 0.0
        %1731 = vmatprep.subr.mxu0 0.0
        %1732 = vmatpush1.msra.mxu0 0.0
        %1733 = vmatprep.subr.mxu0 0.0
        %1734 = vmatpush1.msra.mxu0 0.0
        %1735 = vmatprep.subr.mxu0 0.0
        %1736 = vmatpush1.msra.mxu0 0.0
        %1737 = vmatprep.subr.mxu0 0.0
        %1738 = vmatpush1.msra.mxu0 0.0
        %1739 = vmatprep.subr.mxu0 0.0
        %1740 = vmatpush1.msra.mxu0 0.0
        %1741 = vmatprep.subr.mxu0 0.0
        %1742 = vmatpush1.msra.mxu0 0.0
        %1743 = vmatprep.subr.mxu0 0.0
        %1744 = vmatpush1.msra.mxu0 0.0
        %1745 = vmatprep.mubr.f32.mxu0 0.0
        %1746 = vmatmul.mubr.f32.gmra.mrb[0].mxu0 %v1658
        %v1747 = vpop.f32.mrb[0].mxu0
        %v1748 = vadd.f32 0.0, %v1747
        %v1749 = vpop.f32.mrb[0].mxu0
        %1750 = vmatprep.mubr.f32.mxu0 0.0
        %1751 = vmatmul.mubr.f32.gmra.mrb[0].mxu0 %v1661
        %v1752 = vpop.f32.mrb[0].mxu0
        %v1753 = vadd.f32 0.0, %v1752
        %v1754 = vpop.f32.mrb[0].mxu0
        %1755 = vmatprep.mubr.f32.mxu0 0.0
        %1756 = vmatmul.mubr.f32.gmra.mrb[0].mxu0 %v1664
        %v1757 = vpop.f32.mrb[0].mxu0
        %v1758 = vadd.f32 0.0, %v1757
        %v1759 = vpop.f32.mrb[0].mxu0
        %1760 = vmatprep.mubr.f32.mxu0 0.0
        %1761 = vmatmul.mubr.f32.gmra.mrb[0].mxu0 %v1667
        %v1762 = vpop.f32.mrb[0].mxu0
        %v1763 = vadd.f32 0.0, %v1762
        %v1764 = vpop.f32.mrb[0].mxu0
        %1765 = vmatprep.mubr.f32.mxu0 0.0
        %1766 = vmatmul.mubr.f32.gmra.mrb[0].mxu0 %v1670
        %v1767 = vpop.f32.mrb[0].mxu0
        %v1768 = vadd.f32 0.0, %v1767
        %v1769 = vpop.f32.mrb[0].mxu0
        %1770 = vmatprep.mubr.f32.mxu0 0.0
        %1771 = vmatmul.mubr.f32.gmra.mrb[0].mxu0 %v1673
        %v1772 = vpop.f32.mrb[0].mxu0
        %v1773 = vadd.f32 0.0, %v1772
        %v1774 = vpop.f32.mrb[0].mxu0
        %1775 = vmatprep.mubr.f32.mxu0 0.0
        %1776 = vmatmul.mubr.f32.gmra.mrb[0].mxu0 %v1676
        %v1777 = vpop.f32.mrb[0].mxu0
        %v1778 = vadd.f32 0.0, %v1777
        %v1779 = vpop.f32.mrb[0].mxu0
        %1780 = vmatprep.mubr.f32.mxu0 0.0
        %1781 = vmatmul.mubr.f32.gmra.mrb[0].mxu0 %v1679
        %v1782 = vpop.f32.mrb[0].mxu0
        %v1783 = vadd.f32 0.0, %v1782
        %v1784 = vpop.f32.mrb[0].mxu0
        %1785 = vdwg.mxu0
        %v1787 = vsel %vm231, %v1629, 0
        %v1790 = vsel %vm231, %v1630, 0
        %v1793 = vsel %vm231, %v1631, 0
        %v1796 = vsel %vm231, %v1632, 0
        %v1799 = vsel %vm231, %v1633, 0
        %v1802 = vsel %vm231, %v1634, 0
        %v1805 = vsel %vm231, %v1635, 0
        %v1808 = vsel %vm231, %v1636, 0
        %1810 = vmatprep.subr.mxu0 0.0
        %1811 = vmatpush1.msra.mxu0 %v1638
        %1812 = vmatprep.subr.mxu0 0.0
        %1813 = vmatpush1.msra.mxu0 %v1639
        %1814 = vmatprep.subr.mxu0 0.0
        %1815 = vmatpush1.msra.mxu0 %v1640
        %1816 = vmatprep.subr.mxu0 0.0
        %1817 = vmatpush1.msra.mxu0 %v1641
        %1818 = vmatprep.subr.mxu0 0.0
        %1819 = vmatpush1.msra.mxu0 %v1642
        %1820 = vmatprep.subr.mxu0 0.0
        %1821 = vmatpush1.msra.mxu0 0.0
        %1822 = vmatprep.subr.mxu0 0.0
        %1823 = vmatpush1.msra.mxu0 0.0
        %1824 = vmatprep.subr.mxu0 0.0
        %1825 = vmatpush1.msra.mxu0 0.0
        %1826 = vmatprep.subr.mxu0 0.0
        %1827 = vmatpush1.msra.mxu0 0.0
        %1828 = vmatprep.subr.mxu0 0.0
        %1829 = vmatpush1.msra.mxu0 0.0
        %1830 = vmatprep.subr.mxu0 0.0
        %1831 = vmatpush1.msra.mxu0 0.0
        %1832 = vmatprep.subr.mxu0 0.0
        %1833 = vmatpush1.msra.mxu0 0.0
        %1834 = vmatprep.subr.mxu0 0.0
        %1835 = vmatpush1.msra.mxu0 0.0
        %1836 = vmatprep.subr.mxu0 0.0
        %1837 = vmatpush1.msra.mxu0 0.0
        %1838 = vmatprep.subr.mxu0 0.0
        %1839 = vmatpush1.msra.mxu0 0.0
        %1840 = vmatprep.subr.mxu0 0.0
        %1841 = vmatpush1.msra.mxu0 0.0
        %1842 = vmatprep.subr.mxu0 0.0
        %1843 = vmatpush1.msra.mxu0 0.0
        %1844 = vmatprep.subr.mxu0 0.0
        %1845 = vmatpush1.msra.mxu0 0.0
        %1846 = vmatprep.subr.mxu0 0.0
        %1847 = vmatpush1.msra.mxu0 0.0
        %1848 = vmatprep.subr.mxu0 0.0
        %1849 = vmatpush1.msra.mxu0 0.0
        %1850 = vmatprep.subr.mxu0 0.0
        %1851 = vmatpush1.msra.mxu0 0.0
        %1852 = vmatprep.subr.mxu0 0.0
        %1853 = vmatpush1.msra.mxu0 0.0
        %1854 = vmatprep.subr.mxu0 0.0
        %1855 = vmatpush1.msra.mxu0 0.0
        %1856 = vmatprep.subr.mxu0 0.0
        %1857 = vmatpush1.msra.mxu0 0.0
        %1858 = vmatprep.subr.mxu0 0.0
        %1859 = vmatpush1.msra.mxu0 0.0
        %1860 = vmatprep.subr.mxu0 0.0
        %1861 = vmatpush1.msra.mxu0 0.0
        %1862 = vmatprep.subr.mxu0 0.0
        %1863 = vmatpush1.msra.mxu0 0.0
        %1864 = vmatprep.subr.mxu0 0.0
        %1865 = vmatpush1.msra.mxu0 0.0
        %1866 = vmatprep.subr.mxu0 0.0
        %1867 = vmatpush1.msra.mxu0 0.0
        %1868 = vmatprep.subr.mxu0 0.0
        %1869 = vmatpush1.msra.mxu0 0.0
        %1870 = vmatprep.subr.mxu0 0.0
        %1871 = vmatpush1.msra.mxu0 0.0
        %1872 = vmatprep.subr.mxu0 0.0
        %1873 = vmatpush1.msra.mxu0 0.0
        %1874 = vmatprep.mubr.f32.mxu0 0.0
        %1875 = vmatmul.mubr.f32.gmra.mrb[0].mxu0 %v1787
        %v1876 = vpop.f32.mrb[0].mxu0
        %v1877 = vadd.f32 %v1748, %v1876
        %v1878 = vpop.f32.mrb[0].mxu0
        %1879 = vmatprep.mubr.f32.mxu0 0.0
        %1880 = vmatmul.mubr.f32.gmra.mrb[0].mxu0 %v1790
        %v1881 = vpop.f32.mrb[0].mxu0
        %v1882 = vadd.f32 %v1753, %v1881
        %v1883 = vpop.f32.mrb[0].mxu0
        %1884 = vmatprep.mubr.f32.mxu0 0.0
        %1885 = vmatmul.mubr.f32.gmra.mrb[0].mxu0 %v1793
        %v1886 = vpop.f32.mrb[0].mxu0
        %v1887 = vadd.f32 %v1758, %v1886
        %v1888 = vpop.f32.mrb[0].mxu0
        %1889 = vmatprep.mubr.f32.mxu0 0.0
        %1890 = vmatmul.mubr.f32.gmra.mrb[0].mxu0 %v1796
        %v1891 = vpop.f32.mrb[0].mxu0
        %v1892 = vadd.f32 %v1763, %v1891
        %v1893 = vpop.f32.mrb[0].mxu0
        %1894 = vmatprep.mubr.f32.mxu0 0.0
        %1895 = vmatmul.mubr.f32.gmra.mrb[0].mxu0 %v1799
        %v1896 = vpop.f32.mrb[0].mxu0
        %v1897 = vadd.f32 %v1768, %v1896
        %v1898 = vpop.f32.mrb[0].mxu0
        %1899 = vmatprep.mubr.f32.mxu0 0.0
        %1900 = vmatmul.mubr.f32.gmra.mrb[0].mxu0 %v1802
        %v1901 = vpop.f32.mrb[0].mxu0
        %v1902 = vadd.f32 %v1773, %v1901
        %v1903 = vpop.f32.mrb[0].mxu0
        %1904 = vmatprep.mubr.f32.mxu0 0.0
        %1905 = vmatmul.mubr.f32.gmra.mrb[0].mxu0 %v1805
        %v1906 = vpop.f32.mrb[0].mxu0
        %v1907 = vadd.f32 %v1778, %v1906
        %v1908 = vpop.f32.mrb[0].mxu0
        %1909 = vmatprep.mubr.f32.mxu0 0.0
        %1910 = vmatmul.mubr.f32.gmra.mrb[0].mxu0 %v1808
        %v1911 = vpop.f32.mrb[0].mxu0
        %v1912 = vadd.f32 %v1783, %v1911
        %v1913 = vpop.f32.mrb[0].mxu0
        %1914 = vdwg.mxu0
        %v1915 = vld [vmem:[#allocation2 + $0x2] sm:$0xff]
        %v1916 = vld [vmem:[#allocation2 + $0x12] sm:$0xff]
        %v1917 = vld [vmem:[#allocation2 + $0x22] sm:$0xff]
        %v1918 = vld [vmem:[#allocation2 + $0x32] sm:$0xff]
        %v1919 = vld [vmem:[#allocation2 + $0x42] sm:$0xff]
        %v1920 = vld [vmem:[#allocation2 + $0x52] sm:$0xff]
        %v1921 = vld [vmem:[#allocation2 + $0x62] sm:$0xff]
        %v1922 = vld [vmem:[#allocation2 + $0x72] sm:$0xff]
        %s1923 = scalar_lea.vmem [#allocation3], 440
        %v1924 = vld [vmem:[%s1923] sm:$0xff]
        %v1925 = vld [vmem:[%s1923 + $0x8] sm:$0xff]
        %v1926 = vld [vmem:[%s1923 + $0x10] sm:$0xff]
        %v1927 = vld [vmem:[%s1923 + $0x18] sm:$0xff]
        %v1928 = vld [vmem:[%s1923 + $0x20] sm:$0xff]
        %v1930 = vsel %vm231, %v1915, 0
        %v1933 = vsel %vm231, %v1916, 0
        %v1936 = vsel %vm231, %v1917, 0
        %v1939 = vsel %vm231, %v1918, 0
        %v1942 = vsel %vm231, %v1919, 0
        %v1945 = vsel %vm231, %v1920, 0
        %v1948 = vsel %vm231, %v1921, 0
        %v1951 = vsel %vm231, %v1922, 0
        %1953 = vmatprep.subr.mxu0 0.0
        %1954 = vmatpush1.msra.mxu0 %v1924
        %1955 = vmatprep.subr.mxu0 0.0
        %1956 = vmatpush1.msra.mxu0 %v1925
        %1957 = vmatprep.subr.mxu0 0.0
        %1958 = vmatpush1.msra.mxu0 %v1926
        %1959 = vmatprep.subr.mxu0 0.0
        %1960 = vmatpush1.msra.mxu0 %v1927
        %1961 = vmatprep.subr.mxu0 0.0
        %1962 = vmatpush1.msra.mxu0 %v1928
        %1963 = vmatprep.subr.mxu0 0.0
        %1964 = vmatpush1.msra.mxu0 0.0
        %1965 = vmatprep.subr.mxu0 0.0
        %1966 = vmatpush1.msra.mxu0 0.0
        %1967 = vmatprep.subr.mxu0 0.0
        %1968 = vmatpush1.msra.mxu0 0.0
        %1969 = vmatprep.subr.mxu0 0.0
        %1970 = vmatpush1.msra.mxu0 0.0
        %1971 = vmatprep.subr.mxu0 0.0
        %1972 = vmatpush1.msra.mxu0 0.0
        %1973 = vmatprep.subr.mxu0 0.0
        %1974 = vmatpush1.msra.mxu0 0.0
        %1975 = vmatprep.subr.mxu0 0.0
        %1976 = vmatpush1.msra.mxu0 0.0
        %1977 = vmatprep.subr.mxu0 0.0
        %1978 = vmatpush1.msra.mxu0 0.0
        %1979 = vmatprep.subr.mxu0 0.0
        %1980 = vmatpush1.msra.mxu0 0.0
        %1981 = vmatprep.subr.mxu0 0.0
        %1982 = vmatpush1.msra.mxu0 0.0
        %1983 = vmatprep.subr.mxu0 0.0
        %1984 = vmatpush1.msra.mxu0 0.0
        %1985 = vmatprep.subr.mxu0 0.0
        %1986 = vmatpush1.msra.mxu0 0.0
        %1987 = vmatprep.subr.mxu0 0.0
        %1988 = vmatpush1.msra.mxu0 0.0
        %1989 = vmatprep.subr.mxu0 0.0
        %1990 = vmatpush1.msra.mxu0 0.0
        %1991 = vmatprep.subr.mxu0 0.0
        %1992 = vmatpush1.msra.mxu0 0.0
        %1993 = vmatprep.subr.mxu0 0.0
        %1994 = vmatpush1.msra.mxu0 0.0
        %1995 = vmatprep.subr.mxu0 0.0
        %1996 = vmatpush1.msra.mxu0 0.0
        %1997 = vmatprep.subr.mxu0 0.0
        %1998 = vmatpush1.msra.mxu0 0.0
        %1999 = vmatprep.subr.mxu0 0.0
        %2000 = vmatpush1.msra.mxu0 0.0
        %2001 = vmatprep.subr.mxu0 0.0
        %2002 = vmatpush1.msra.mxu0 0.0
        %2003 = vmatprep.subr.mxu0 0.0
        %2004 = vmatpush1.msra.mxu0 0.0
        %2005 = vmatprep.subr.mxu0 0.0
        %2006 = vmatpush1.msra.mxu0 0.0
        %2007 = vmatprep.subr.mxu0 0.0
        %2008 = vmatpush1.msra.mxu0 0.0
        %2009 = vmatprep.subr.mxu0 0.0
        %2010 = vmatpush1.msra.mxu0 0.0
        %2011 = vmatprep.subr.mxu0 0.0
        %2012 = vmatpush1.msra.mxu0 0.0
        %2013 = vmatprep.subr.mxu0 0.0
        %2014 = vmatpush1.msra.mxu0 0.0
        %2015 = vmatprep.subr.mxu0 0.0
        %2016 = vmatpush1.msra.mxu0 0.0
        %2017 = vmatprep.mubr.f32.mxu0 0.0
        %2018 = vmatmul.mubr.f32.gmra.mrb[0].mxu0 %v1930
        %v2019 = vpop.f32.mrb[0].mxu0
        %v2020 = vadd.f32 0.0, %v2019
        %v2021 = vpop.f32.mrb[0].mxu0
        %2022 = vmatprep.mubr.f32.mxu0 0.0
        %2023 = vmatmul.mubr.f32.gmra.mrb[0].mxu0 %v1933
        %v2024 = vpop.f32.mrb[0].mxu0
        %v2025 = vadd.f32 0.0, %v2024
        %v2026 = vpop.f32.mrb[0].mxu0
        %2027 = vmatprep.mubr.f32.mxu0 0.0
        %2028 = vmatmul.mubr.f32.gmra.mrb[0].mxu0 %v1936
        %v2029 = vpop.f32.mrb[0].mxu0
        %v2030 = vadd.f32 0.0, %v2029
        %v2031 = vpop.f32.mrb[0].mxu0
        %2032 = vmatprep.mubr.f32.mxu0 0.0
        %2033 = vmatmul.mubr.f32.gmra.mrb[0].mxu0 %v1939
        %v2034 = vpop.f32.mrb[0].mxu0
        %v2035 = vadd.f32 0.0, %v2034
        %v2036 = vpop.f32.mrb[0].mxu0
        %2037 = vmatprep.mubr.f32.mxu0 0.0
        %2038 = vmatmul.mubr.f32.gmra.mrb[0].mxu0 %v1942
        %v2039 = vpop.f32.mrb[0].mxu0
        %v2040 = vadd.f32 0.0, %v2039
        %v2041 = vpop.f32.mrb[0].mxu0
        %2042 = vmatprep.mubr.f32.mxu0 0.0
        %2043 = vmatmul.mubr.f32.gmra.mrb[0].mxu0 %v1945
        %v2044 = vpop.f32.mrb[0].mxu0
        %v2045 = vadd.f32 0.0, %v2044
        %v2046 = vpop.f32.mrb[0].mxu0
        %2047 = vmatprep.mubr.f32.mxu0 0.0
        %2048 = vmatmul.mubr.f32.gmra.mrb[0].mxu0 %v1948
        %v2049 = vpop.f32.mrb[0].mxu0
        %v2050 = vadd.f32 0.0, %v2049
        %v2051 = vpop.f32.mrb[0].mxu0
        %2052 = vmatprep.mubr.f32.mxu0 0.0
        %2053 = vmatmul.mubr.f32.gmra.mrb[0].mxu0 %v1951
        %v2054 = vpop.f32.mrb[0].mxu0
        %v2055 = vadd.f32 0.0, %v2054
        %v2056 = vpop.f32.mrb[0].mxu0
        %2057 = vdwg.mxu0
        %v2058 = vadd.f32 %v1877, %v2020
        %v2059 = vadd.f32 %v1882, %v2025
        %v2060 = vadd.f32 %v1887, %v2030
        %v2061 = vadd.f32 %v1892, %v2035
        %v2062 = vadd.f32 %v1897, %v2040
        %v2063 = vadd.f32 %v1902, %v2045
        %v2064 = vadd.f32 %v1907, %v2050
        %v2065 = vadd.f32 %v1912, %v2055
        %v2066 = vld [vmem:[%s238] sm:$0xff]
        %v2067 = vld [vmem:[%s238 + $0x10] sm:$0xff]
        %v2068 = vld [vmem:[%s238 + $0x20] sm:$0xff]
        %v2069 = vld [vmem:[%s238 + $0x30] sm:$0xff]
        %v2070 = vld [vmem:[%s238 + $0x40] sm:$0xff]
        %v2071 = vld [vmem:[%s238 + $0x50] sm:$0xff]
        %v2072 = vld [vmem:[%s238 + $0x60] sm:$0xff]
        %v2073 = vld [vmem:[%s238 + $0x70] sm:$0xff]
        %s2074 = scalar_lea.vmem [#allocation3], 480
        %v2075 = vld [vmem:[%s2074] sm:$0xff]
        %v2076 = vld [vmem:[%s2074 + $0x8] sm:$0xff]
        %v2077 = vld [vmem:[%s2074 + $0x10] sm:$0xff]
        %v2078 = vld [vmem:[%s2074 + $0x18] sm:$0xff]
        %v2079 = vld [vmem:[%s2074 + $0x20] sm:$0xff]
        %v2081 = vsel %vm231, %v2066, 0
        %v2084 = vsel %vm231, %v2067, 0
        %v2087 = vsel %vm231, %v2068, 0
        %v2090 = vsel %vm231, %v2069, 0
        %v2093 = vsel %vm231, %v2070, 0
        %v2096 = vsel %vm231, %v2071, 0
        %v2099 = vsel %vm231, %v2072, 0
        %v2102 = vsel %vm231, %v2073, 0
        %2104 = vmatprep.subr.mxu0 0.0
        %2105 = vmatpush1.msra.mxu0 %v2075
        %2106 = vmatprep.subr.mxu0 0.0
        %2107 = vmatpush1.msra.mxu0 %v2076
        %2108 = vmatprep.subr.mxu0 0.0
        %2109 = vmatpush1.msra.mxu0 %v2077
        %2110 = vmatprep.subr.mxu0 0.0
        %2111 = vmatpush1.msra.mxu0 %v2078
        %2112 = vmatprep.subr.mxu0 0.0
        %2113 = vmatpush1.msra.mxu0 %v2079
        %2114 = vmatprep.subr.mxu0 0.0
        %2115 = vmatpush1.msra.mxu0 0.0
        %2116 = vmatprep.subr.mxu0 0.0
        %2117 = vmatpush1.msra.mxu0 0.0
        %2118 = vmatprep.subr.mxu0 0.0
        %2119 = vmatpush1.msra.mxu0 0.0
        %2120 = vmatprep.subr.mxu0 0.0
        %2121 = vmatpush1.msra.mxu0 0.0
        %2122 = vmatprep.subr.mxu0 0.0
        %2123 = vmatpush1.msra.mxu0 0.0
        %2124 = vmatprep.subr.mxu0 0.0
        %2125 = vmatpush1.msra.mxu0 0.0
        %2126 = vmatprep.subr.mxu0 0.0
        %2127 = vmatpush1.msra.mxu0 0.0
        %2128 = vmatprep.subr.mxu0 0.0
        %2129 = vmatpush1.msra.mxu0 0.0
        %2130 = vmatprep.subr.mxu0 0.0
        %2131 = vmatpush1.msra.mxu0 0.0
        %2132 = vmatprep.subr.mxu0 0.0
        %2133 = vmatpush1.msra.mxu0 0.0
        %2134 = vmatprep.subr.mxu0 0.0
        %2135 = vmatpush1.msra.mxu0 0.0
        %2136 = vmatprep.subr.mxu0 0.0
        %2137 = vmatpush1.msra.mxu0 0.0
        %2138 = vmatprep.subr.mxu0 0.0
        %2139 = vmatpush1.msra.mxu0 0.0
        %2140 = vmatprep.subr.mxu0 0.0
        %2141 = vmatpush1.msra.mxu0 0.0
        %2142 = vmatprep.subr.mxu0 0.0
        %2143 = vmatpush1.msra.mxu0 0.0
        %2144 = vmatprep.subr.mxu0 0.0
        %2145 = vmatpush1.msra.mxu0 0.0
        %2146 = vmatprep.subr.mxu0 0.0
        %2147 = vmatpush1.msra.mxu0 0.0
        %2148 = vmatprep.subr.mxu0 0.0
        %2149 = vmatpush1.msra.mxu0 0.0
        %2150 = vmatprep.subr.mxu0 0.0
        %2151 = vmatpush1.msra.mxu0 0.0
        %2152 = vmatprep.subr.mxu0 0.0
        %2153 = vmatpush1.msra.mxu0 0.0
        %2154 = vmatprep.subr.mxu0 0.0
        %2155 = vmatpush1.msra.mxu0 0.0
        %2156 = vmatprep.subr.mxu0 0.0
        %2157 = vmatpush1.msra.mxu0 0.0
        %2158 = vmatprep.subr.mxu0 0.0
        %2159 = vmatpush1.msra.mxu0 0.0
        %2160 = vmatprep.subr.mxu0 0.0
        %2161 = vmatpush1.msra.mxu0 0.0
        %2162 = vmatprep.subr.mxu0 0.0
        %2163 = vmatpush1.msra.mxu0 0.0
        %2164 = vmatprep.subr.mxu0 0.0
        %2165 = vmatpush1.msra.mxu0 0.0
        %2166 = vmatprep.subr.mxu0 0.0
        %2167 = vmatpush1.msra.mxu0 0.0
        %2168 = vmatprep.mubr.f32.mxu0 0.0
        %2169 = vmatmul.mubr.f32.gmra.mrb[0].mxu0 %v2081
        %v2170 = vpop.f32.mrb[0].mxu0
        %v2171 = vadd.f32 0.0, %v2170
        %v2172 = vpop.f32.mrb[0].mxu0
        %2173 = vmatprep.mubr.f32.mxu0 0.0
        %2174 = vmatmul.mubr.f32.gmra.mrb[0].mxu0 %v2084
        %v2175 = vpop.f32.mrb[0].mxu0
        %v2176 = vadd.f32 0.0, %v2175
        %v2177 = vpop.f32.mrb[0].mxu0
        %2178 = vmatprep.mubr.f32.mxu0 0.0
        %2179 = vmatmul.mubr.f32.gmra.mrb[0].mxu0 %v2087
        %v2180 = vpop.f32.mrb[0].mxu0
        %v2181 = vadd.f32 0.0, %v2180
        %v2182 = vpop.f32.mrb[0].mxu0
        %2183 = vmatprep.mubr.f32.mxu0 0.0
        %2184 = vmatmul.mubr.f32.gmra.mrb[0].mxu0 %v2090
        %v2185 = vpop.f32.mrb[0].mxu0
        %v2186 = vadd.f32 0.0, %v2185
        %v2187 = vpop.f32.mrb[0].mxu0
        %2188 = vmatprep.mubr.f32.mxu0 0.0
        %2189 = vmatmul.mubr.f32.gmra.mrb[0].mxu0 %v2093
        %v2190 = vpop.f32.mrb[0].mxu0
        %v2191 = vadd.f32 0.0, %v2190
        %v2192 = vpop.f32.mrb[0].mxu0
        %2193 = vmatprep.mubr.f32.mxu0 0.0
        %2194 = vmatmul.mubr.f32.gmra.mrb[0].mxu0 %v2096
        %v2195 = vpop.f32.mrb[0].mxu0
        %v2196 = vadd.f32 0.0, %v2195
        %v2197 = vpop.f32.mrb[0].mxu0
        %2198 = vmatprep.mubr.f32.mxu0 0.0
        %2199 = vmatmul.mubr.f32.gmra.mrb[0].mxu0 %v2099
        %v2200 = vpop.f32.mrb[0].mxu0
        %v2201 = vadd.f32 0.0, %v2200
        %v2202 = vpop.f32.mrb[0].mxu0
        %2203 = vmatprep.mubr.f32.mxu0 0.0
        %2204 = vmatmul.mubr.f32.gmra.mrb[0].mxu0 %v2102
        %v2205 = vpop.f32.mrb[0].mxu0
        %v2206 = vadd.f32 0.0, %v2205
        %v2207 = vpop.f32.mrb[0].mxu0
        %2208 = vdwg.mxu0
        %v2209 = vadd.f32 %v2058, %v2171
        %v2210 = vadd.f32 %v2059, %v2176
        %v2211 = vadd.f32 %v2060, %v2181
        %v2212 = vadd.f32 %v2061, %v2186
        %v2213 = vadd.f32 %v2062, %v2191
        %v2214 = vadd.f32 %v2063, %v2196
        %v2215 = vadd.f32 %v2064, %v2201
        %v2216 = vadd.f32 %v2065, %v2206
        %v2217 = vld [vmem:[%s238 + $0x1] sm:$0xff]
        %v2218 = vld [vmem:[%s238 + $0x11] sm:$0xff]
        %v2219 = vld [vmem:[%s238 + $0x21] sm:$0xff]
        %v2220 = vld [vmem:[%s238 + $0x31] sm:$0xff]
        %v2221 = vld [vmem:[%s238 + $0x41] sm:$0xff]
        %v2222 = vld [vmem:[%s238 + $0x51] sm:$0xff]
        %v2223 = vld [vmem:[%s238 + $0x61] sm:$0xff]
        %v2224 = vld [vmem:[%s238 + $0x71] sm:$0xff]
        %s2225 = scalar_lea.vmem [#allocation3], 520
        %v2226 = vld [vmem:[%s2225] sm:$0xff]
        %v2227 = vld [vmem:[%s2225 + $0x8] sm:$0xff]
        %v2228 = vld [vmem:[%s2225 + $0x10] sm:$0xff]
        %v2229 = vld [vmem:[%s2225 + $0x18] sm:$0xff]
        %v2230 = vld [vmem:[%s2225 + $0x20] sm:$0xff]
        %v2232 = vsel %vm231, %v2217, 0
        %v2235 = vsel %vm231, %v2218, 0
        %v2238 = vsel %vm231, %v2219, 0
        %v2241 = vsel %vm231, %v2220, 0
        %v2244 = vsel %vm231, %v2221, 0
        %v2247 = vsel %vm231, %v2222, 0
        %v2250 = vsel %vm231, %v2223, 0
        %v2253 = vsel %vm231, %v2224, 0
        %2255 = vmatprep.subr.mxu0 0.0
        %2256 = vmatpush1.msra.mxu0 %v2226
        %2257 = vmatprep.subr.mxu0 0.0
        %2258 = vmatpush1.msra.mxu0 %v2227
        %2259 = vmatprep.subr.mxu0 0.0
        %2260 = vmatpush1.msra.mxu0 %v2228
        %2261 = vmatprep.subr.mxu0 0.0
        %2262 = vmatpush1.msra.mxu0 %v2229
        %2263 = vmatprep.subr.mxu0 0.0
        %2264 = vmatpush1.msra.mxu0 %v2230
        %2265 = vmatprep.subr.mxu0 0.0
        %2266 = vmatpush1.msra.mxu0 0.0
        %2267 = vmatprep.subr.mxu0 0.0
        %2268 = vmatpush1.msra.mxu0 0.0
        %2269 = vmatprep.subr.mxu0 0.0
        %2270 = vmatpush1.msra.mxu0 0.0
        %2271 = vmatprep.subr.mxu0 0.0
        %2272 = vmatpush1.msra.mxu0 0.0
        %2273 = vmatprep.subr.mxu0 0.0
        %2274 = vmatpush1.msra.mxu0 0.0
        %2275 = vmatprep.subr.mxu0 0.0
        %2276 = vmatpush1.msra.mxu0 0.0
        %2277 = vmatprep.subr.mxu0 0.0
        %2278 = vmatpush1.msra.mxu0 0.0
        %2279 = vmatprep.subr.mxu0 0.0
        %2280 = vmatpush1.msra.mxu0 0.0
        %2281 = vmatprep.subr.mxu0 0.0
        %2282 = vmatpush1.msra.mxu0 0.0
        %2283 = vmatprep.subr.mxu0 0.0
        %2284 = vmatpush1.msra.mxu0 0.0
        %2285 = vmatprep.subr.mxu0 0.0
        %2286 = vmatpush1.msra.mxu0 0.0
        %2287 = vmatprep.subr.mxu0 0.0
        %2288 = vmatpush1.msra.mxu0 0.0
        %2289 = vmatprep.subr.mxu0 0.0
        %2290 = vmatpush1.msra.mxu0 0.0
        %2291 = vmatprep.subr.mxu0 0.0
        %2292 = vmatpush1.msra.mxu0 0.0
        %2293 = vmatprep.subr.mxu0 0.0
        %2294 = vmatpush1.msra.mxu0 0.0
        %2295 = vmatprep.subr.mxu0 0.0
        %2296 = vmatpush1.msra.mxu0 0.0
        %2297 = vmatprep.subr.mxu0 0.0
        %2298 = vmatpush1.msra.mxu0 0.0
        %2299 = vmatprep.subr.mxu0 0.0
        %2300 = vmatpush1.msra.mxu0 0.0
        %2301 = vmatprep.subr.mxu0 0.0
        %2302 = vmatpush1.msra.mxu0 0.0
        %2303 = vmatprep.subr.mxu0 0.0
        %2304 = vmatpush1.msra.mxu0 0.0
        %2305 = vmatprep.subr.mxu0 0.0
        %2306 = vmatpush1.msra.mxu0 0.0
        %2307 = vmatprep.subr.mxu0 0.0
        %2308 = vmatpush1.msra.mxu0 0.0
        %2309 = vmatprep.subr.mxu0 0.0
        %2310 = vmatpush1.msra.mxu0 0.0
        %2311 = vmatprep.subr.mxu0 0.0
        %2312 = vmatpush1.msra.mxu0 0.0
        %2313 = vmatprep.subr.mxu0 0.0
        %2314 = vmatpush1.msra.mxu0 0.0
        %2315 = vmatprep.subr.mxu0 0.0
        %2316 = vmatpush1.msra.mxu0 0.0
        %2317 = vmatprep.subr.mxu0 0.0
        %2318 = vmatpush1.msra.mxu0 0.0
        %2319 = vmatprep.mubr.f32.mxu0 0.0
        %2320 = vmatmul.mubr.f32.gmra.mrb[0].mxu0 %v2232
        %v2321 = vpop.f32.mrb[0].mxu0
        %v2322 = vadd.f32 0.0, %v2321
        %v2323 = vpop.f32.mrb[0].mxu0
        %2324 = vmatprep.mubr.f32.mxu0 0.0
        %2325 = vmatmul.mubr.f32.gmra.mrb[0].mxu0 %v2235
        %v2326 = vpop.f32.mrb[0].mxu0
        %v2327 = vadd.f32 0.0, %v2326
        %v2328 = vpop.f32.mrb[0].mxu0
        %2329 = vmatprep.mubr.f32.mxu0 0.0
        %2330 = vmatmul.mubr.f32.gmra.mrb[0].mxu0 %v2238
        %v2331 = vpop.f32.mrb[0].mxu0
        %v2332 = vadd.f32 0.0, %v2331
        %v2333 = vpop.f32.mrb[0].mxu0
        %2334 = vmatprep.mubr.f32.mxu0 0.0
        %2335 = vmatmul.mubr.f32.gmra.mrb[0].mxu0 %v2241
        %v2336 = vpop.f32.mrb[0].mxu0
        %v2337 = vadd.f32 0.0, %v2336
        %v2338 = vpop.f32.mrb[0].mxu0
        %2339 = vmatprep.mubr.f32.mxu0 0.0
        %2340 = vmatmul.mubr.f32.gmra.mrb[0].mxu0 %v2244
        %v2341 = vpop.f32.mrb[0].mxu0
        %v2342 = vadd.f32 0.0, %v2341
        %v2343 = vpop.f32.mrb[0].mxu0
        %2344 = vmatprep.mubr.f32.mxu0 0.0
        %2345 = vmatmul.mubr.f32.gmra.mrb[0].mxu0 %v2247
        %v2346 = vpop.f32.mrb[0].mxu0
        %v2347 = vadd.f32 0.0, %v2346
        %v2348 = vpop.f32.mrb[0].mxu0
        %2349 = vmatprep.mubr.f32.mxu0 0.0
        %2350 = vmatmul.mubr.f32.gmra.mrb[0].mxu0 %v2250
        %v2351 = vpop.f32.mrb[0].mxu0
        %v2352 = vadd.f32 0.0, %v2351
        %v2353 = vpop.f32.mrb[0].mxu0
        %2354 = vmatprep.mubr.f32.mxu0 0.0
        %2355 = vmatmul.mubr.f32.gmra.mrb[0].mxu0 %v2253
        %v2356 = vpop.f32.mrb[0].mxu0
        %v2357 = vadd.f32 0.0, %v2356
        %v2358 = vpop.f32.mrb[0].mxu0
        %2359 = vdwg.mxu0
        %v2360 = vadd.f32 %v2209, %v2322
        %v2361 = vadd.f32 %v2210, %v2327
        %v2362 = vadd.f32 %v2211, %v2332
        %v2363 = vadd.f32 %v2212, %v2337
        %v2364 = vadd.f32 %v2213, %v2342
        %v2365 = vadd.f32 %v2214, %v2347
        %v2366 = vadd.f32 %v2215, %v2352
        %v2367 = vadd.f32 %v2216, %v2357
        %v2368 = vld [vmem:[%s238 + $0x2] sm:$0xff]
        %v2369 = vld [vmem:[%s238 + $0x12] sm:$0xff]
        %v2370 = vld [vmem:[%s238 + $0x22] sm:$0xff]
        %v2371 = vld [vmem:[%s238 + $0x32] sm:$0xff]
        %v2372 = vld [vmem:[%s238 + $0x42] sm:$0xff]
        %v2373 = vld [vmem:[%s238 + $0x52] sm:$0xff]
        %v2374 = vld [vmem:[%s238 + $0x62] sm:$0xff]
        %v2375 = vld [vmem:[%s238 + $0x72] sm:$0xff]
        %s2376 = scalar_lea.vmem [#allocation3], 560
        %v2377 = vld [vmem:[%s2376] sm:$0xff]
        %v2378 = vld [vmem:[%s2376 + $0x8] sm:$0xff]
        %v2379 = vld [vmem:[%s2376 + $0x10] sm:$0xff]
        %v2380 = vld [vmem:[%s2376 + $0x18] sm:$0xff]
        %v2381 = vld [vmem:[%s2376 + $0x20] sm:$0xff]
        %v2383 = vsel %vm231, %v2368, 0
        %v2386 = vsel %vm231, %v2369, 0
        %v2389 = vsel %vm231, %v2370, 0
        %v2392 = vsel %vm231, %v2371, 0
        %v2395 = vsel %vm231, %v2372, 0
        %v2398 = vsel %vm231, %v2373, 0
        %v2401 = vsel %vm231, %v2374, 0
        %v2404 = vsel %vm231, %v2375, 0
        %2406 = vmatprep.subr.mxu0 0.0
        %2407 = vmatpush1.msra.mxu0 %v2377
        %2408 = vmatprep.subr.mxu0 0.0
        %2409 = vmatpush1.msra.mxu0 %v2378
        %2410 = vmatprep.subr.mxu0 0.0
        %2411 = vmatpush1.msra.mxu0 %v2379
        %2412 = vmatprep.subr.mxu0 0.0
        %2413 = vmatpush1.msra.mxu0 %v2380
        %2414 = vmatprep.subr.mxu0 0.0
        %2415 = vmatpush1.msra.mxu0 %v2381
        %2416 = vmatprep.subr.mxu0 0.0
        %2417 = vmatpush1.msra.mxu0 0.0
        %2418 = vmatprep.subr.mxu0 0.0
        %2419 = vmatpush1.msra.mxu0 0.0
        %2420 = vmatprep.subr.mxu0 0.0
        %2421 = vmatpush1.msra.mxu0 0.0
        %2422 = vmatprep.subr.mxu0 0.0
        %2423 = vmatpush1.msra.mxu0 0.0
        %2424 = vmatprep.subr.mxu0 0.0
        %2425 = vmatpush1.msra.mxu0 0.0
        %2426 = vmatprep.subr.mxu0 0.0
        %2427 = vmatpush1.msra.mxu0 0.0
        %2428 = vmatprep.subr.mxu0 0.0
        %2429 = vmatpush1.msra.mxu0 0.0
        %2430 = vmatprep.subr.mxu0 0.0
        %2431 = vmatpush1.msra.mxu0 0.0
        %2432 = vmatprep.subr.mxu0 0.0
        %2433 = vmatpush1.msra.mxu0 0.0
        %2434 = vmatprep.subr.mxu0 0.0
        %2435 = vmatpush1.msra.mxu0 0.0
        %2436 = vmatprep.subr.mxu0 0.0
        %2437 = vmatpush1.msra.mxu0 0.0
        %2438 = vmatprep.subr.mxu0 0.0
        %2439 = vmatpush1.msra.mxu0 0.0
        %2440 = vmatprep.subr.mxu0 0.0
        %2441 = vmatpush1.msra.mxu0 0.0
        %2442 = vmatprep.subr.mxu0 0.0
        %2443 = vmatpush1.msra.mxu0 0.0
        %2444 = vmatprep.subr.mxu0 0.0
        %2445 = vmatpush1.msra.mxu0 0.0
        %2446 = vmatprep.subr.mxu0 0.0
        %2447 = vmatpush1.msra.mxu0 0.0
        %2448 = vmatprep.subr.mxu0 0.0
        %2449 = vmatpush1.msra.mxu0 0.0
        %2450 = vmatprep.subr.mxu0 0.0
        %2451 = vmatpush1.msra.mxu0 0.0
        %2452 = vmatprep.subr.mxu0 0.0
        %2453 = vmatpush1.msra.mxu0 0.0
        %2454 = vmatprep.subr.mxu0 0.0
        %2455 = vmatpush1.msra.mxu0 0.0
        %2456 = vmatprep.subr.mxu0 0.0
        %2457 = vmatpush1.msra.mxu0 0.0
        %2458 = vmatprep.subr.mxu0 0.0
        %2459 = vmatpush1.msra.mxu0 0.0
        %2460 = vmatprep.subr.mxu0 0.0
        %2461 = vmatpush1.msra.mxu0 0.0
        %2462 = vmatprep.subr.mxu0 0.0
        %2463 = vmatpush1.msra.mxu0 0.0
        %2464 = vmatprep.subr.mxu0 0.0
        %2465 = vmatpush1.msra.mxu0 0.0
        %2466 = vmatprep.subr.mxu0 0.0
        %2467 = vmatpush1.msra.mxu0 0.0
        %2468 = vmatprep.subr.mxu0 0.0
        %2469 = vmatpush1.msra.mxu0 0.0
        %2470 = vmatprep.mubr.f32.mxu0 0.0
        %2471 = vmatmul.mubr.f32.gmra.mrb[0].mxu0 %v2383
        %v2472 = vpop.f32.mrb[0].mxu0
        %v2473 = vadd.f32 0.0, %v2472
        %v2474 = vpop.f32.mrb[0].mxu0
        %2475 = vmatprep.mubr.f32.mxu0 0.0
        %2476 = vmatmul.mubr.f32.gmra.mrb[0].mxu0 %v2386
        %v2477 = vpop.f32.mrb[0].mxu0
        %v2478 = vadd.f32 0.0, %v2477
        %v2479 = vpop.f32.mrb[0].mxu0
        %2480 = vmatprep.mubr.f32.mxu0 0.0
        %2481 = vmatmul.mubr.f32.gmra.mrb[0].mxu0 %v2389
        %v2482 = vpop.f32.mrb[0].mxu0
        %v2483 = vadd.f32 0.0, %v2482
        %v2484 = vpop.f32.mrb[0].mxu0
        %2485 = vmatprep.mubr.f32.mxu0 0.0
        %2486 = vmatmul.mubr.f32.gmra.mrb[0].mxu0 %v2392
        %v2487 = vpop.f32.mrb[0].mxu0
        %v2488 = vadd.f32 0.0, %v2487
        %v2489 = vpop.f32.mrb[0].mxu0
        %2490 = vmatprep.mubr.f32.mxu0 0.0
        %2491 = vmatmul.mubr.f32.gmra.mrb[0].mxu0 %v2395
        %v2492 = vpop.f32.mrb[0].mxu0
        %v2493 = vadd.f32 0.0, %v2492
        %v2494 = vpop.f32.mrb[0].mxu0
        %2495 = vmatprep.mubr.f32.mxu0 0.0
        %2496 = vmatmul.mubr.f32.gmra.mrb[0].mxu0 %v2398
        %v2497 = vpop.f32.mrb[0].mxu0
        %v2498 = vadd.f32 0.0, %v2497
        %v2499 = vpop.f32.mrb[0].mxu0
        %2500 = vmatprep.mubr.f32.mxu0 0.0
        %2501 = vmatmul.mubr.f32.gmra.mrb[0].mxu0 %v2401
        %v2502 = vpop.f32.mrb[0].mxu0
        %v2503 = vadd.f32 0.0, %v2502
        %v2504 = vpop.f32.mrb[0].mxu0
        %2505 = vmatprep.mubr.f32.mxu0 0.0
        %2506 = vmatmul.mubr.f32.gmra.mrb[0].mxu0 %v2404
        %v2507 = vpop.f32.mrb[0].mxu0
        %v2508 = vadd.f32 0.0, %v2507
        %v2509 = vpop.f32.mrb[0].mxu0
        %2510 = vdwg.mxu0
        %v2511 = vadd.f32 %v2360, %v2473
        %v2512 = vadd.f32 %v2361, %v2478
        %v2513 = vadd.f32 %v2362, %v2483
        %v2514 = vadd.f32 %v2363, %v2488
        %v2515 = vadd.f32 %v2364, %v2493
        %v2516 = vadd.f32 %v2365, %v2498
        %v2517 = vadd.f32 %v2366, %v2503
        %v2518 = vadd.f32 %v2367, %v2508
        %s2519 = scalar_lea.vmem [#allocation2], 32
        %v2520 = vld [vmem:[%s2519] sm:$0xff]
        %v2521 = vld [vmem:[%s2519 + $0x10] sm:$0xff]
        %v2522 = vld [vmem:[%s2519 + $0x20] sm:$0xff]
        %v2523 = vld [vmem:[%s2519 + $0x30] sm:$0xff]
        %v2524 = vld [vmem:[%s2519 + $0x40] sm:$0xff]
        %v2525 = vld [vmem:[%s2519 + $0x50] sm:$0xff]
        %v2526 = vld [vmem:[%s2519 + $0x60] sm:$0xff]
        %v2527 = vld [vmem:[%s2519 + $0x70] sm:$0xff]
        %s2528 = scalar_lea.vmem [#allocation3], 600
        %v2529 = vld [vmem:[%s2528] sm:$0xff]
        %v2530 = vld [vmem:[%s2528 + $0x8] sm:$0xff]
        %v2531 = vld [vmem:[%s2528 + $0x10] sm:$0xff]
        %v2532 = vld [vmem:[%s2528 + $0x18] sm:$0xff]
        %v2533 = vld [vmem:[%s2528 + $0x20] sm:$0xff]
        %v2535 = vsel %vm231, %v2520, 0
        %v2538 = vsel %vm231, %v2521, 0
        %v2541 = vsel %vm231, %v2522, 0
        %v2544 = vsel %vm231, %v2523, 0
        %v2547 = vsel %vm231, %v2524, 0
        %v2550 = vsel %vm231, %v2525, 0
        %v2553 = vsel %vm231, %v2526, 0
        %v2556 = vsel %vm231, %v2527, 0
        %2558 = vmatprep.subr.mxu0 0.0
        %2559 = vmatpush1.msra.mxu0 %v2529
        %2560 = vmatprep.subr.mxu0 0.0
        %2561 = vmatpush1.msra.mxu0 %v2530
        %2562 = vmatprep.subr.mxu0 0.0
        %2563 = vmatpush1.msra.mxu0 %v2531
        %2564 = vmatprep.subr.mxu0 0.0
        %2565 = vmatpush1.msra.mxu0 %v2532
        %2566 = vmatprep.subr.mxu0 0.0
        %2567 = vmatpush1.msra.mxu0 %v2533
        %2568 = vmatprep.subr.mxu0 0.0
        %2569 = vmatpush1.msra.mxu0 0.0
        %2570 = vmatprep.subr.mxu0 0.0
        %2571 = vmatpush1.msra.mxu0 0.0
        %2572 = vmatprep.subr.mxu0 0.0
        %2573 = vmatpush1.msra.mxu0 0.0
        %2574 = vmatprep.subr.mxu0 0.0
        %2575 = vmatpush1.msra.mxu0 0.0
        %2576 = vmatprep.subr.mxu0 0.0
        %2577 = vmatpush1.msra.mxu0 0.0
        %2578 = vmatprep.subr.mxu0 0.0
        %2579 = vmatpush1.msra.mxu0 0.0
        %2580 = vmatprep.subr.mxu0 0.0
        %2581 = vmatpush1.msra.mxu0 0.0
        %2582 = vmatprep.subr.mxu0 0.0
        %2583 = vmatpush1.msra.mxu0 0.0
        %2584 = vmatprep.subr.mxu0 0.0
        %2585 = vmatpush1.msra.mxu0 0.0
        %2586 = vmatprep.subr.mxu0 0.0
        %2587 = vmatpush1.msra.mxu0 0.0
        %2588 = vmatprep.subr.mxu0 0.0
        %2589 = vmatpush1.msra.mxu0 0.0
        %2590 = vmatprep.subr.mxu0 0.0
        %2591 = vmatpush1.msra.mxu0 0.0
        %2592 = vmatprep.subr.mxu0 0.0
        %2593 = vmatpush1.msra.mxu0 0.0
        %2594 = vmatprep.subr.mxu0 0.0
        %2595 = vmatpush1.msra.mxu0 0.0
        %2596 = vmatprep.subr.mxu0 0.0
        %2597 = vmatpush1.msra.mxu0 0.0
        %2598 = vmatprep.subr.mxu0 0.0
        %2599 = vmatpush1.msra.mxu0 0.0
        %2600 = vmatprep.subr.mxu0 0.0
        %2601 = vmatpush1.msra.mxu0 0.0
        %2602 = vmatprep.subr.mxu0 0.0
        %2603 = vmatpush1.msra.mxu0 0.0
        %2604 = vmatprep.subr.mxu0 0.0
        %2605 = vmatpush1.msra.mxu0 0.0
        %2606 = vmatprep.subr.mxu0 0.0
        %2607 = vmatpush1.msra.mxu0 0.0
        %2608 = vmatprep.subr.mxu0 0.0
        %2609 = vmatpush1.msra.mxu0 0.0
        %2610 = vmatprep.subr.mxu0 0.0
        %2611 = vmatpush1.msra.mxu0 0.0
        %2612 = vmatprep.subr.mxu0 0.0
        %2613 = vmatpush1.msra.mxu0 0.0
        %2614 = vmatprep.subr.mxu0 0.0
        %2615 = vmatpush1.msra.mxu0 0.0
        %2616 = vmatprep.subr.mxu0 0.0
        %2617 = vmatpush1.msra.mxu0 0.0
        %2618 = vmatprep.subr.mxu0 0.0
        %2619 = vmatpush1.msra.mxu0 0.0
        %2620 = vmatprep.subr.mxu0 0.0
        %2621 = vmatpush1.msra.mxu0 0.0
        %2622 = vmatprep.mubr.f32.mxu0 0.0
        %2623 = vmatmul.mubr.f32.gmra.mrb[0].mxu0 %v2535
        %v2624 = vpop.f32.mrb[0].mxu0
        %v2625 = vadd.f32 0.0, %v2624
        %v2626 = vpop.f32.mrb[0].mxu0
        %2627 = vmatprep.mubr.f32.mxu0 0.0
        %2628 = vmatmul.mubr.f32.gmra.mrb[0].mxu0 %v2538
        %v2629 = vpop.f32.mrb[0].mxu0
        %v2630 = vadd.f32 0.0, %v2629
        %v2631 = vpop.f32.mrb[0].mxu0
        %2632 = vmatprep.mubr.f32.mxu0 0.0
        %2633 = vmatmul.mubr.f32.gmra.mrb[0].mxu0 %v2541
        %v2634 = vpop.f32.mrb[0].mxu0
        %v2635 = vadd.f32 0.0, %v2634
        %v2636 = vpop.f32.mrb[0].mxu0
        %2637 = vmatprep.mubr.f32.mxu0 0.0
        %2638 = vmatmul.mubr.f32.gmra.mrb[0].mxu0 %v2544
        %v2639 = vpop.f32.mrb[0].mxu0
        %v2640 = vadd.f32 0.0, %v2639
        %v2641 = vpop.f32.mrb[0].mxu0
        %2642 = vmatprep.mubr.f32.mxu0 0.0
        %2643 = vmatmul.mubr.f32.gmra.mrb[0].mxu0 %v2547
        %v2644 = vpop.f32.mrb[0].mxu0
        %v2645 = vadd.f32 0.0, %v2644
        %v2646 = vpop.f32.mrb[0].mxu0
        %2647 = vmatprep.mubr.f32.mxu0 0.0
        %2648 = vmatmul.mubr.f32.gmra.mrb[0].mxu0 %v2550
        %v2649 = vpop.f32.mrb[0].mxu0
        %v2650 = vadd.f32 0.0, %v2649
        %v2651 = vpop.f32.mrb[0].mxu0
        %2652 = vmatprep.mubr.f32.mxu0 0.0
        %2653 = vmatmul.mubr.f32.gmra.mrb[0].mxu0 %v2553
        %v2654 = vpop.f32.mrb[0].mxu0
        %v2655 = vadd.f32 0.0, %v2654
        %v2656 = vpop.f32.mrb[0].mxu0
        %2657 = vmatprep.mubr.f32.mxu0 0.0
        %2658 = vmatmul.mubr.f32.gmra.mrb[0].mxu0 %v2556
        %v2659 = vpop.f32.mrb[0].mxu0
        %v2660 = vadd.f32 0.0, %v2659
        %v2661 = vpop.f32.mrb[0].mxu0
        %2662 = vdwg.mxu0
        %v2663 = vadd.f32 %v2511, %v2625
        %v2664 = vadd.f32 %v2512, %v2630
        %v2665 = vadd.f32 %v2513, %v2635
        %v2666 = vadd.f32 %v2514, %v2640
        %v2667 = vadd.f32 %v2515, %v2645
        %v2668 = vadd.f32 %v2516, %v2650
        %v2669 = vadd.f32 %v2517, %v2655
        %v2670 = vadd.f32 %v2518, %v2660
        %v2671 = vld [vmem:[%s2519 + $0x1] sm:$0xff]
        %v2672 = vld [vmem:[%s2519 + $0x11] sm:$0xff]
        %v2673 = vld [vmem:[%s2519 + $0x21] sm:$0xff]
        %v2674 = vld [vmem:[%s2519 + $0x31] sm:$0xff]
        %v2675 = vld [vmem:[%s2519 + $0x41] sm:$0xff]
        %v2676 = vld [vmem:[%s2519 + $0x51] sm:$0xff]
        %v2677 = vld [vmem:[%s2519 + $0x61] sm:$0xff]
        %v2678 = vld [vmem:[%s2519 + $0x71] sm:$0xff]
        %s2679 = scalar_lea.vmem [#allocation3], 640
        %v2680 = vld [vmem:[%s2679] sm:$0xff]
        %v2681 = vld [vmem:[%s2679 + $0x8] sm:$0xff]
        %v2682 = vld [vmem:[%s2679 + $0x10] sm:$0xff]
        %v2683 = vld [vmem:[%s2679 + $0x18] sm:$0xff]
        %v2684 = vld [vmem:[%s2679 + $0x20] sm:$0xff]
        %v2686 = vsel %vm231, %v2671, 0
        %v2689 = vsel %vm231, %v2672, 0
        %v2692 = vsel %vm231, %v2673, 0
        %v2695 = vsel %vm231, %v2674, 0
        %v2698 = vsel %vm231, %v2675, 0
        %v2701 = vsel %vm231, %v2676, 0
        %v2704 = vsel %vm231, %v2677, 0
        %v2707 = vsel %vm231, %v2678, 0
        %2709 = vmatprep.subr.mxu0 0.0
        %2710 = vmatpush1.msra.mxu0 %v2680
        %2711 = vmatprep.subr.mxu0 0.0
        %2712 = vmatpush1.msra.mxu0 %v2681
        %2713 = vmatprep.subr.mxu0 0.0
        %2714 = vmatpush1.msra.mxu0 %v2682
        %2715 = vmatprep.subr.mxu0 0.0
        %2716 = vmatpush1.msra.mxu0 %v2683
        %2717 = vmatprep.subr.mxu0 0.0
        %2718 = vmatpush1.msra.mxu0 %v2684
        %2719 = vmatprep.subr.mxu0 0.0
        %2720 = vmatpush1.msra.mxu0 0.0
        %2721 = vmatprep.subr.mxu0 0.0
        %2722 = vmatpush1.msra.mxu0 0.0
        %2723 = vmatprep.subr.mxu0 0.0
        %2724 = vmatpush1.msra.mxu0 0.0
        %2725 = vmatprep.subr.mxu0 0.0
        %2726 = vmatpush1.msra.mxu0 0.0
        %2727 = vmatprep.subr.mxu0 0.0
        %2728 = vmatpush1.msra.mxu0 0.0
        %2729 = vmatprep.subr.mxu0 0.0
        %2730 = vmatpush1.msra.mxu0 0.0
        %2731 = vmatprep.subr.mxu0 0.0
        %2732 = vmatpush1.msra.mxu0 0.0
        %2733 = vmatprep.subr.mxu0 0.0
        %2734 = vmatpush1.msra.mxu0 0.0
        %2735 = vmatprep.subr.mxu0 0.0
        %2736 = vmatpush1.msra.mxu0 0.0
        %2737 = vmatprep.subr.mxu0 0.0
        %2738 = vmatpush1.msra.mxu0 0.0
        %2739 = vmatprep.subr.mxu0 0.0
        %2740 = vmatpush1.msra.mxu0 0.0
        %2741 = vmatprep.subr.mxu0 0.0
        %2742 = vmatpush1.msra.mxu0 0.0
        %2743 = vmatprep.subr.mxu0 0.0
        %2744 = vmatpush1.msra.mxu0 0.0
        %2745 = vmatprep.subr.mxu0 0.0
        %2746 = vmatpush1.msra.mxu0 0.0
        %2747 = vmatprep.subr.mxu0 0.0
        %2748 = vmatpush1.msra.mxu0 0.0
        %2749 = vmatprep.subr.mxu0 0.0
        %2750 = vmatpush1.msra.mxu0 0.0
        %2751 = vmatprep.subr.mxu0 0.0
        %2752 = vmatpush1.msra.mxu0 0.0
        %2753 = vmatprep.subr.mxu0 0.0
        %2754 = vmatpush1.msra.mxu0 0.0
        %2755 = vmatprep.subr.mxu0 0.0
        %2756 = vmatpush1.msra.mxu0 0.0
        %2757 = vmatprep.subr.mxu0 0.0
        %2758 = vmatpush1.msra.mxu0 0.0
        %2759 = vmatprep.subr.mxu0 0.0
        %2760 = vmatpush1.msra.mxu0 0.0
        %2761 = vmatprep.subr.mxu0 0.0
        %2762 = vmatpush1.msra.mxu0 0.0
        %2763 = vmatprep.subr.mxu0 0.0
        %2764 = vmatpush1.msra.mxu0 0.0
        %2765 = vmatprep.subr.mxu0 0.0
        %2766 = vmatpush1.msra.mxu0 0.0
        %2767 = vmatprep.subr.mxu0 0.0
        %2768 = vmatpush1.msra.mxu0 0.0
        %2769 = vmatprep.subr.mxu0 0.0
        %2770 = vmatpush1.msra.mxu0 0.0
        %2771 = vmatprep.subr.mxu0 0.0
        %2772 = vmatpush1.msra.mxu0 0.0
        %2773 = vmatprep.mubr.f32.mxu0 0.0
        %2774 = vmatmul.mubr.f32.gmra.mrb[0].mxu0 %v2686
        %v2775 = vpop.f32.mrb[0].mxu0
        %v2776 = vadd.f32 0.0, %v2775
        %v2777 = vpop.f32.mrb[0].mxu0
        %2778 = vmatprep.mubr.f32.mxu0 0.0
        %2779 = vmatmul.mubr.f32.gmra.mrb[0].mxu0 %v2689
        %v2780 = vpop.f32.mrb[0].mxu0
        %v2781 = vadd.f32 0.0, %v2780
        %v2782 = vpop.f32.mrb[0].mxu0
        %2783 = vmatprep.mubr.f32.mxu0 0.0
        %2784 = vmatmul.mubr.f32.gmra.mrb[0].mxu0 %v2692
        %v2785 = vpop.f32.mrb[0].mxu0
        %v2786 = vadd.f32 0.0, %v2785
        %v2787 = vpop.f32.mrb[0].mxu0
        %2788 = vmatprep.mubr.f32.mxu0 0.0
        %2789 = vmatmul.mubr.f32.gmra.mrb[0].mxu0 %v2695
        %v2790 = vpop.f32.mrb[0].mxu0
        %v2791 = vadd.f32 0.0, %v2790
        %v2792 = vpop.f32.mrb[0].mxu0
        %2793 = vmatprep.mubr.f32.mxu0 0.0
        %2794 = vmatmul.mubr.f32.gmra.mrb[0].mxu0 %v2698
        %v2795 = vpop.f32.mrb[0].mxu0
        %v2796 = vadd.f32 0.0, %v2795
        %v2797 = vpop.f32.mrb[0].mxu0
        %2798 = vmatprep.mubr.f32.mxu0 0.0
        %2799 = vmatmul.mubr.f32.gmra.mrb[0].mxu0 %v2701
        %v2800 = vpop.f32.mrb[0].mxu0
        %v2801 = vadd.f32 0.0, %v2800
        %v2802 = vpop.f32.mrb[0].mxu0
        %2803 = vmatprep.mubr.f32.mxu0 0.0
        %2804 = vmatmul.mubr.f32.gmra.mrb[0].mxu0 %v2704
        %v2805 = vpop.f32.mrb[0].mxu0
        %v2806 = vadd.f32 0.0, %v2805
        %v2807 = vpop.f32.mrb[0].mxu0
        %2808 = vmatprep.mubr.f32.mxu0 0.0
        %2809 = vmatmul.mubr.f32.gmra.mrb[0].mxu0 %v2707
        %v2810 = vpop.f32.mrb[0].mxu0
        %v2811 = vadd.f32 0.0, %v2810
        %v2812 = vpop.f32.mrb[0].mxu0
        %2813 = vdwg.mxu0
        %v2814 = vadd.f32 %v2663, %v2776
        %v2815 = vadd.f32 %v2664, %v2781
        %v2816 = vadd.f32 %v2665, %v2786
        %v2817 = vadd.f32 %v2666, %v2791
        %v2818 = vadd.f32 %v2667, %v2796
        %v2819 = vadd.f32 %v2668, %v2801
        %v2820 = vadd.f32 %v2669, %v2806
        %v2821 = vadd.f32 %v2670, %v2811
        %v2822 = vld [vmem:[%s2519 + $0x2] sm:$0xff]
        %v2823 = vld [vmem:[%s2519 + $0x12] sm:$0xff]
        %v2824 = vld [vmem:[%s2519 + $0x22] sm:$0xff]
        %v2825 = vld [vmem:[%s2519 + $0x32] sm:$0xff]
        %v2826 = vld [vmem:[%s2519 + $0x42] sm:$0xff]
        %v2827 = vld [vmem:[%s2519 + $0x52] sm:$0xff]
        %v2828 = vld [vmem:[%s2519 + $0x62] sm:$0xff]
        %v2829 = vld [vmem:[%s2519 + $0x72] sm:$0xff]
        %s2830 = scalar_lea.vmem [#allocation3], 680
        %v2831 = vld [vmem:[%s2830] sm:$0xff]
        %v2832 = vld [vmem:[%s2830 + $0x8] sm:$0xff]
        %v2833 = vld [vmem:[%s2830 + $0x10] sm:$0xff]
        %v2834 = vld [vmem:[%s2830 + $0x18] sm:$0xff]
        %v2835 = vld [vmem:[%s2830 + $0x20] sm:$0xff]
        %v2837 = vsel %vm231, %v2822, 0
        %v2840 = vsel %vm231, %v2823, 0
        %v2843 = vsel %vm231, %v2824, 0
        %v2846 = vsel %vm231, %v2825, 0
        %v2849 = vsel %vm231, %v2826, 0
        %v2852 = vsel %vm231, %v2827, 0
        %v2855 = vsel %vm231, %v2828, 0
        %v2858 = vsel %vm231, %v2829, 0
        %2860 = vmatprep.subr.mxu0 0.0
        %2861 = vmatpush1.msra.mxu0 %v2831
        %2862 = vmatprep.subr.mxu0 0.0
        %2863 = vmatpush1.msra.mxu0 %v2832
        %2864 = vmatprep.subr.mxu0 0.0
        %2865 = vmatpush1.msra.mxu0 %v2833
        %2866 = vmatprep.subr.mxu0 0.0
        %2867 = vmatpush1.msra.mxu0 %v2834
        %2868 = vmatprep.subr.mxu0 0.0
        %2869 = vmatpush1.msra.mxu0 %v2835
        %2870 = vmatprep.subr.mxu0 0.0
        %2871 = vmatpush1.msra.mxu0 0.0
        %2872 = vmatprep.subr.mxu0 0.0
        %2873 = vmatpush1.msra.mxu0 0.0
        %2874 = vmatprep.subr.mxu0 0.0
        %2875 = vmatpush1.msra.mxu0 0.0
        %2876 = vmatprep.subr.mxu0 0.0
        %2877 = vmatpush1.msra.mxu0 0.0
        %2878 = vmatprep.subr.mxu0 0.0
        %2879 = vmatpush1.msra.mxu0 0.0
        %2880 = vmatprep.subr.mxu0 0.0
        %2881 = vmatpush1.msra.mxu0 0.0
        %2882 = vmatprep.subr.mxu0 0.0
        %2883 = vmatpush1.msra.mxu0 0.0
        %2884 = vmatprep.subr.mxu0 0.0
        %2885 = vmatpush1.msra.mxu0 0.0
        %2886 = vmatprep.subr.mxu0 0.0
        %2887 = vmatpush1.msra.mxu0 0.0
        %2888 = vmatprep.subr.mxu0 0.0
        %2889 = vmatpush1.msra.mxu0 0.0
        %2890 = vmatprep.subr.mxu0 0.0
        %2891 = vmatpush1.msra.mxu0 0.0
        %2892 = vmatprep.subr.mxu0 0.0
        %2893 = vmatpush1.msra.mxu0 0.0
        %2894 = vmatprep.subr.mxu0 0.0
        %2895 = vmatpush1.msra.mxu0 0.0
        %2896 = vmatprep.subr.mxu0 0.0
        %2897 = vmatpush1.msra.mxu0 0.0
        %2898 = vmatprep.subr.mxu0 0.0
        %2899 = vmatpush1.msra.mxu0 0.0
        %2900 = vmatprep.subr.mxu0 0.0
        %2901 = vmatpush1.msra.mxu0 0.0
        %2902 = vmatprep.subr.mxu0 0.0
        %2903 = vmatpush1.msra.mxu0 0.0
        %2904 = vmatprep.subr.mxu0 0.0
        %2905 = vmatpush1.msra.mxu0 0.0
        %2906 = vmatprep.subr.mxu0 0.0
        %2907 = vmatpush1.msra.mxu0 0.0
        %2908 = vmatprep.subr.mxu0 0.0
        %2909 = vmatpush1.msra.mxu0 0.0
        %2910 = vmatprep.subr.mxu0 0.0
        %2911 = vmatpush1.msra.mxu0 0.0
        %2912 = vmatprep.subr.mxu0 0.0
        %2913 = vmatpush1.msra.mxu0 0.0
        %2914 = vmatprep.subr.mxu0 0.0
        %2915 = vmatpush1.msra.mxu0 0.0
        %2916 = vmatprep.subr.mxu0 0.0
        %2917 = vmatpush1.msra.mxu0 0.0
        %2918 = vmatprep.subr.mxu0 0.0
        %2919 = vmatpush1.msra.mxu0 0.0
        %2920 = vmatprep.subr.mxu0 0.0
        %2921 = vmatpush1.msra.mxu0 0.0
        %2922 = vmatprep.subr.mxu0 0.0
        %2923 = vmatpush1.msra.mxu0 0.0
        %2924 = vmatprep.mubr.f32.mxu0 0.0
        %2925 = vmatmul.mubr.f32.gmra.mrb[0].mxu0 %v2837
        %v2926 = vpop.f32.mrb[0].mxu0
        %v2927 = vadd.f32 0.0, %v2926
        %v2928 = vpop.f32.mrb[0].mxu0
        %2929 = vmatprep.mubr.f32.mxu0 0.0
        %2930 = vmatmul.mubr.f32.gmra.mrb[0].mxu0 %v2840
        %v2931 = vpop.f32.mrb[0].mxu0
        %v2932 = vadd.f32 0.0, %v2931
        %v2933 = vpop.f32.mrb[0].mxu0
        %2934 = vmatprep.mubr.f32.mxu0 0.0
        %2935 = vmatmul.mubr.f32.gmra.mrb[0].mxu0 %v2843
        %v2936 = vpop.f32.mrb[0].mxu0
        %v2937 = vadd.f32 0.0, %v2936
        %v2938 = vpop.f32.mrb[0].mxu0
        %2939 = vmatprep.mubr.f32.mxu0 0.0
        %2940 = vmatmul.mubr.f32.gmra.mrb[0].mxu0 %v2846
        %v2941 = vpop.f32.mrb[0].mxu0
        %v2942 = vadd.f32 0.0, %v2941
        %v2943 = vpop.f32.mrb[0].mxu0
        %2944 = vmatprep.mubr.f32.mxu0 0.0
        %2945 = vmatmul.mubr.f32.gmra.mrb[0].mxu0 %v2849
        %v2946 = vpop.f32.mrb[0].mxu0
        %v2947 = vadd.f32 0.0, %v2946
        %v2948 = vpop.f32.mrb[0].mxu0
        %2949 = vmatprep.mubr.f32.mxu0 0.0
        %2950 = vmatmul.mubr.f32.gmra.mrb[0].mxu0 %v2852
        %v2951 = vpop.f32.mrb[0].mxu0
        %v2952 = vadd.f32 0.0, %v2951
        %v2953 = vpop.f32.mrb[0].mxu0
        %2954 = vmatprep.mubr.f32.mxu0 0.0
        %2955 = vmatmul.mubr.f32.gmra.mrb[0].mxu0 %v2855
        %v2956 = vpop.f32.mrb[0].mxu0
        %v2957 = vadd.f32 0.0, %v2956
        %v2958 = vpop.f32.mrb[0].mxu0
        %2959 = vmatprep.mubr.f32.mxu0 0.0
        %2960 = vmatmul.mubr.f32.gmra.mrb[0].mxu0 %v2858
        %v2961 = vpop.f32.mrb[0].mxu0
        %v2962 = vadd.f32 0.0, %v2961
        %v2963 = vpop.f32.mrb[0].mxu0
        %2964 = vdwg.mxu0
        %v2965 = vadd.f32 %v2814, %v2927
        %v2966 = vadd.f32 %v2815, %v2932
        %v2967 = vadd.f32 %v2816, %v2937
        %v2968 = vadd.f32 %v2817, %v2942
        %v2969 = vadd.f32 %v2818, %v2947
        %v2970 = vadd.f32 %v2819, %v2952
        %v2971 = vadd.f32 %v2820, %v2957
        %v2972 = vadd.f32 %v2821, %v2962
        %v2973 = vld [vmem:[%s3 + $0x1] sm:$0x1]
        %v2974 = vlaneseq
        %v2975 = vshrl.u32 %v2974, 7
        %v2976 = vsub.s32 0, %v2975
        %v2977 = vrot.slane %v2973, %v2976
        %v2978 = vadd.f32 %v2965, %v2977
        %v2979 = vadd.f32 %v2966, %v2977
        %v2980 = vadd.f32 %v2967, %v2977
        %v2981 = vadd.f32 %v2968, %v2977
        %v2982 = vadd.f32 %v2969, %v2977
        %v2983 = vadd.f32 %v2970, %v2977
        %v2984 = vadd.f32 %v2971, %v2977
        %v2985 = vadd.f32 %v2972, %v2977
        %v2986 = vmax.f32 %v2978, 0.0
        %v2987 = vmax.f32 %v2979, 0.0
        %v2988 = vmax.f32 %v2980, 0.0
        %v2989 = vmax.f32 %v2981, 0.0
        %v2990 = vmax.f32 %v2982, 0.0
        %v2991 = vmax.f32 %v2983, 0.0
        %v2992 = vmax.f32 %v2984, 0.0
        %v2993 = vmax.f32 %v2985, 0.0
        %2994 = vst.msk [vmem:[%s238 + $0x1] sm:$0xff] %vm231, %v2986
        %2995 = vst.msk [vmem:[%s238 + $0x11] sm:$0xff] %vm231, %v2987
        %2996 = vst.msk [vmem:[%s238 + $0x21] sm:$0xff] %vm231, %v2988
        %2997 = vst.msk [vmem:[%s238 + $0x31] sm:$0xff] %vm231, %v2989
        %2998 = vst.msk [vmem:[%s238 + $0x41] sm:$0xff] %vm231, %v2990
        %2999 = vst.msk [vmem:[%s238 + $0x51] sm:$0xff] %vm231, %v2991
        %3000 = vst.msk [vmem:[%s238 + $0x61] sm:$0xff] %vm231, %v2992
        %3001 = vst.msk [vmem:[%s238 + $0x71] sm:$0xff] %vm231, %v2993
        %v3002 = vld [vmem:[#allocation2] sm:$0xff]
        %v3003 = vld [vmem:[#allocation2 + $0x10] sm:$0xff]
        %v3004 = vld [vmem:[#allocation2 + $0x20] sm:$0xff]
        %v3005 = vld [vmem:[#allocation2 + $0x30] sm:$0xff]
        %v3006 = vld [vmem:[#allocation2 + $0x40] sm:$0xff]
        %v3007 = vld [vmem:[#allocation2 + $0x50] sm:$0xff]
        %v3008 = vld [vmem:[#allocation2 + $0x60] sm:$0xff]
        %v3009 = vld [vmem:[#allocation2 + $0x70] sm:$0xff]
        %s3010 = scalar_lea.vmem [#allocation3], 720
        %v3011 = vld [vmem:[%s3010] sm:$0xff]
        %v3012 = vld [vmem:[%s3010 + $0x8] sm:$0xff]
        %v3013 = vld [vmem:[%s3010 + $0x10] sm:$0xff]
        %v3014 = vld [vmem:[%s3010 + $0x18] sm:$0xff]
        %v3015 = vld [vmem:[%s3010 + $0x20] sm:$0xff]
        %v3016 = vld [vmem:[#allocation2 + $0x1] sm:$0xff]
        %v3017 = vld [vmem:[#allocation2 + $0x11] sm:$0xff]
        %v3018 = vld [vmem:[#allocation2 + $0x21] sm:$0xff]
        %v3019 = vld [vmem:[#allocation2 + $0x31] sm:$0xff]
        %v3020 = vld [vmem:[#allocation2 + $0x41] sm:$0xff]
        %v3021 = vld [vmem:[#allocation2 + $0x51] sm:$0xff]
        %v3022 = vld [vmem:[#allocation2 + $0x61] sm:$0xff]
        %v3023 = vld [vmem:[#allocation2 + $0x71] sm:$0xff]
        %s3024 = scalar_lea.vmem [#allocation3], 760
        %v3025 = vld [vmem:[%s3024] sm:$0xff]
        %v3026 = vld [vmem:[%s3024 + $0x8] sm:$0xff]
        %v3027 = vld [vmem:[%s3024 + $0x10] sm:$0xff]
        %v3028 = vld [vmem:[%s3024 + $0x18] sm:$0xff]
        %v3029 = vld [vmem:[%s3024 + $0x20] sm:$0xff]
        %v3031 = vsel %vm231, %v3016, 0
        %v3034 = vsel %vm231, %v3017, 0
        %v3037 = vsel %vm231, %v3018, 0
        %v3040 = vsel %vm231, %v3019, 0
        %v3043 = vsel %vm231, %v3020, 0
        %v3046 = vsel %vm231, %v3021, 0
        %v3049 = vsel %vm231, %v3022, 0
        %v3052 = vsel %vm231, %v3023, 0
        %3054 = vmatprep.subr.mxu0 0.0
        %3055 = vmatpush1.msra.mxu0 %v3025
        %3056 = vmatprep.subr.mxu0 0.0
        %3057 = vmatpush1.msra.mxu0 %v3026
        %3058 = vmatprep.subr.mxu0 0.0
        %3059 = vmatpush1.msra.mxu0 %v3027
        %3060 = vmatprep.subr.mxu0 0.0
        %3061 = vmatpush1.msra.mxu0 %v3028
        %3062 = vmatprep.subr.mxu0 0.0
        %3063 = vmatpush1.msra.mxu0 %v3029
        %3064 = vmatprep.subr.mxu0 0.0
        %3065 = vmatpush1.msra.mxu0 0.0
        %3066 = vmatprep.subr.mxu0 0.0
        %3067 = vmatpush1.msra.mxu0 0.0
        %3068 = vmatprep.subr.mxu0 0.0
        %3069 = vmatpush1.msra.mxu0 0.0
        %3070 = vmatprep.subr.mxu0 0.0
        %3071 = vmatpush1.msra.mxu0 0.0
        %3072 = vmatprep.subr.mxu0 0.0
        %3073 = vmatpush1.msra.mxu0 0.0
        %3074 = vmatprep.subr.mxu0 0.0
        %3075 = vmatpush1.msra.mxu0 0.0
        %3076 = vmatprep.subr.mxu0 0.0
        %3077 = vmatpush1.msra.mxu0 0.0
        %3078 = vmatprep.subr.mxu0 0.0
        %3079 = vmatpush1.msra.mxu0 0.0
        %3080 = vmatprep.subr.mxu0 0.0
        %3081 = vmatpush1.msra.mxu0 0.0
        %3082 = vmatprep.subr.mxu0 0.0
        %3083 = vmatpush1.msra.mxu0 0.0
        %3084 = vmatprep.subr.mxu0 0.0
        %3085 = vmatpush1.msra.mxu0 0.0
        %3086 = vmatprep.subr.mxu0 0.0
        %3087 = vmatpush1.msra.mxu0 0.0
        %3088 = vmatprep.subr.mxu0 0.0
        %3089 = vmatpush1.msra.mxu0 0.0
        %3090 = vmatprep.subr.mxu0 0.0
        %3091 = vmatpush1.msra.mxu0 0.0
        %3092 = vmatprep.subr.mxu0 0.0
        %3093 = vmatpush1.msra.mxu0 0.0
        %3094 = vmatprep.subr.mxu0 0.0
        %3095 = vmatpush1.msra.mxu0 0.0
        %3096 = vmatprep.subr.mxu0 0.0
        %3097 = vmatpush1.msra.mxu0 0.0
        %3098 = vmatprep.subr.mxu0 0.0
        %3099 = vmatpush1.msra.mxu0 0.0
        %3100 = vmatprep.subr.mxu0 0.0
        %3101 = vmatpush1.msra.mxu0 0.0
        %3102 = vmatprep.subr.mxu0 0.0
        %3103 = vmatpush1.msra.mxu0 0.0
        %3104 = vmatprep.subr.mxu0 0.0
        %3105 = vmatpush1.msra.mxu0 0.0
        %3106 = vmatprep.subr.mxu0 0.0
        %3107 = vmatpush1.msra.mxu0 0.0
        %3108 = vmatprep.subr.mxu0 0.0
        %3109 = vmatpush1.msra.mxu0 0.0
        %3110 = vmatprep.subr.mxu0 0.0
        %3111 = vmatpush1.msra.mxu0 0.0
        %3112 = vmatprep.subr.mxu0 0.0
        %3113 = vmatpush1.msra.mxu0 0.0
        %3114 = vmatprep.subr.mxu0 0.0
        %3115 = vmatpush1.msra.mxu0 0.0
        %3116 = vmatprep.subr.mxu0 0.0
        %3117 = vmatpush1.msra.mxu0 0.0
        %3118 = vmatprep.mubr.f32.mxu0 0.0
        %3119 = vmatmul.mubr.f32.gmra.mrb[0].mxu0 %v3031
        %v3120 = vpop.f32.mrb[0].mxu0
        %v3121 = vadd.f32 0.0, %v3120
        %v3122 = vpop.f32.mrb[0].mxu0
        %3123 = vmatprep.mubr.f32.mxu0 0.0
        %3124 = vmatmul.mubr.f32.gmra.mrb[0].mxu0 %v3034
        %v3125 = vpop.f32.mrb[0].mxu0
        %v3126 = vadd.f32 0.0, %v3125
        %v3127 = vpop.f32.mrb[0].mxu0
        %3128 = vmatprep.mubr.f32.mxu0 0.0
        %3129 = vmatmul.mubr.f32.gmra.mrb[0].mxu0 %v3037
        %v3130 = vpop.f32.mrb[0].mxu0
        %v3131 = vadd.f32 0.0, %v3130
        %v3132 = vpop.f32.mrb[0].mxu0
        %3133 = vmatprep.mubr.f32.mxu0 0.0
        %3134 = vmatmul.mubr.f32.gmra.mrb[0].mxu0 %v3040
        %v3135 = vpop.f32.mrb[0].mxu0
        %v3136 = vadd.f32 0.0, %v3135
        %v3137 = vpop.f32.mrb[0].mxu0
        %3138 = vmatprep.mubr.f32.mxu0 0.0
        %3139 = vmatmul.mubr.f32.gmra.mrb[0].mxu0 %v3043
        %v3140 = vpop.f32.mrb[0].mxu0
        %v3141 = vadd.f32 0.0, %v3140
        %v3142 = vpop.f32.mrb[0].mxu0
        %3143 = vmatprep.mubr.f32.mxu0 0.0
        %3144 = vmatmul.mubr.f32.gmra.mrb[0].mxu0 %v3046
        %v3145 = vpop.f32.mrb[0].mxu0
        %v3146 = vadd.f32 0.0, %v3145
        %v3147 = vpop.f32.mrb[0].mxu0
        %3148 = vmatprep.mubr.f32.mxu0 0.0
        %3149 = vmatmul.mubr.f32.gmra.mrb[0].mxu0 %v3049
        %v3150 = vpop.f32.mrb[0].mxu0
        %v3151 = vadd.f32 0.0, %v3150
        %v3152 = vpop.f32.mrb[0].mxu0
        %3153 = vmatprep.mubr.f32.mxu0 0.0
        %3154 = vmatmul.mubr.f32.gmra.mrb[0].mxu0 %v3052
        %v3155 = vpop.f32.mrb[0].mxu0
        %v3156 = vadd.f32 0.0, %v3155
        %v3157 = vpop.f32.mrb[0].mxu0
        %3158 = vdwg.mxu0
        %v3160 = vsel %vm231, %v3002, 0
        %v3163 = vsel %vm231, %v3003, 0
        %v3166 = vsel %vm231, %v3004, 0
        %v3169 = vsel %vm231, %v3005, 0
        %v3172 = vsel %vm231, %v3006, 0
        %v3175 = vsel %vm231, %v3007, 0
        %v3178 = vsel %vm231, %v3008, 0
        %v3181 = vsel %vm231, %v3009, 0
        %3183 = vmatprep.subr.mxu0 0.0
        %3184 = vmatpush1.msra.mxu0 %v3011
        %3185 = vmatprep.subr.mxu0 0.0
        %3186 = vmatpush1.msra.mxu0 %v3012
        %3187 = vmatprep.subr.mxu0 0.0
        %3188 = vmatpush1.msra.mxu0 %v3013
        %3189 = vmatprep.subr.mxu0 0.0
        %3190 = vmatpush1.msra.mxu0 %v3014
        %3191 = vmatprep.subr.mxu0 0.0
        %3192 = vmatpush1.msra.mxu0 %v3015
        %3193 = vmatprep.subr.mxu0 0.0
        %3194 = vmatpush1.msra.mxu0 0.0
        %3195 = vmatprep.subr.mxu0 0.0
        %3196 = vmatpush1.msra.mxu0 0.0
        %3197 = vmatprep.subr.mxu0 0.0
        %3198 = vmatpush1.msra.mxu0 0.0
        %3199 = vmatprep.subr.mxu0 0.0
        %3200 = vmatpush1.msra.mxu0 0.0
        %3201 = vmatprep.subr.mxu0 0.0
        %3202 = vmatpush1.msra.mxu0 0.0
        %3203 = vmatprep.subr.mxu0 0.0
        %3204 = vmatpush1.msra.mxu0 0.0
        %3205 = vmatprep.subr.mxu0 0.0
        %3206 = vmatpush1.msra.mxu0 0.0
        %3207 = vmatprep.subr.mxu0 0.0
        %3208 = vmatpush1.msra.mxu0 0.0
        %3209 = vmatprep.subr.mxu0 0.0
        %3210 = vmatpush1.msra.mxu0 0.0
        %3211 = vmatprep.subr.mxu0 0.0
        %3212 = vmatpush1.msra.mxu0 0.0
        %3213 = vmatprep.subr.mxu0 0.0
        %3214 = vmatpush1.msra.mxu0 0.0
        %3215 = vmatprep.subr.mxu0 0.0
        %3216 = vmatpush1.msra.mxu0 0.0
        %3217 = vmatprep.subr.mxu0 0.0
        %3218 = vmatpush1.msra.mxu0 0.0
        %3219 = vmatprep.subr.mxu0 0.0
        %3220 = vmatpush1.msra.mxu0 0.0
        %3221 = vmatprep.subr.mxu0 0.0
        %3222 = vmatpush1.msra.mxu0 0.0
        %3223 = vmatprep.subr.mxu0 0.0
        %3224 = vmatpush1.msra.mxu0 0.0
        %3225 = vmatprep.subr.mxu0 0.0
        %3226 = vmatpush1.msra.mxu0 0.0
        %3227 = vmatprep.subr.mxu0 0.0
        %3228 = vmatpush1.msra.mxu0 0.0
        %3229 = vmatprep.subr.mxu0 0.0
        %3230 = vmatpush1.msra.mxu0 0.0
        %3231 = vmatprep.subr.mxu0 0.0
        %3232 = vmatpush1.msra.mxu0 0.0
        %3233 = vmatprep.subr.mxu0 0.0
        %3234 = vmatpush1.msra.mxu0 0.0
        %3235 = vmatprep.subr.mxu0 0.0
        %3236 = vmatpush1.msra.mxu0 0.0
        %3237 = vmatprep.subr.mxu0 0.0
        %3238 = vmatpush1.msra.mxu0 0.0
        %3239 = vmatprep.subr.mxu0 0.0
        %3240 = vmatpush1.msra.mxu0 0.0
        %3241 = vmatprep.subr.mxu0 0.0
        %3242 = vmatpush1.msra.mxu0 0.0
        %3243 = vmatprep.subr.mxu0 0.0
        %3244 = vmatpush1.msra.mxu0 0.0
        %3245 = vmatprep.subr.mxu0 0.0
        %3246 = vmatpush1.msra.mxu0 0.0
        %3247 = vmatprep.mubr.f32.mxu0 0.0
        %3248 = vmatmul.mubr.f32.gmra.mrb[0].mxu0 %v3160
        %v3249 = vpop.f32.mrb[0].mxu0
        %v3250 = vadd.f32 %v3121, %v3249
        %v3251 = vpop.f32.mrb[0].mxu0
        %3252 = vmatprep.mubr.f32.mxu0 0.0
        %3253 = vmatmul.mubr.f32.gmra.mrb[0].mxu0 %v3163
        %v3254 = vpop.f32.mrb[0].mxu0
        %v3255 = vadd.f32 %v3126, %v3254
        %v3256 = vpop.f32.mrb[0].mxu0
        %3257 = vmatprep.mubr.f32.mxu0 0.0
        %3258 = vmatmul.mubr.f32.gmra.mrb[0].mxu0 %v3166
        %v3259 = vpop.f32.mrb[0].mxu0
        %v3260 = vadd.f32 %v3131, %v3259
        %v3261 = vpop.f32.mrb[0].mxu0
        %3262 = vmatprep.mubr.f32.mxu0 0.0
        %3263 = vmatmul.mubr.f32.gmra.mrb[0].mxu0 %v3169
        %v3264 = vpop.f32.mrb[0].mxu0
        %v3265 = vadd.f32 %v3136, %v3264
        %v3266 = vpop.f32.mrb[0].mxu0
        %3267 = vmatprep.mubr.f32.mxu0 0.0
        %3268 = vmatmul.mubr.f32.gmra.mrb[0].mxu0 %v3172
        %v3269 = vpop.f32.mrb[0].mxu0
        %v3270 = vadd.f32 %v3141, %v3269
        %v3271 = vpop.f32.mrb[0].mxu0
        %3272 = vmatprep.mubr.f32.mxu0 0.0
        %3273 = vmatmul.mubr.f32.gmra.mrb[0].mxu0 %v3175
        %v3274 = vpop.f32.mrb[0].mxu0
        %v3275 = vadd.f32 %v3146, %v3274
        %v3276 = vpop.f32.mrb[0].mxu0
        %3277 = vmatprep.mubr.f32.mxu0 0.0
        %3278 = vmatmul.mubr.f32.gmra.mrb[0].mxu0 %v3178
        %v3279 = vpop.f32.mrb[0].mxu0
        %v3280 = vadd.f32 %v3151, %v3279
        %v3281 = vpop.f32.mrb[0].mxu0
        %3282 = vmatprep.mubr.f32.mxu0 0.0
        %3283 = vmatmul.mubr.f32.gmra.mrb[0].mxu0 %v3181
        %v3284 = vpop.f32.mrb[0].mxu0
        %v3285 = vadd.f32 %v3156, %v3284
        %v3286 = vpop.f32.mrb[0].mxu0
        %3287 = vdwg.mxu0
        %v3288 = vld [vmem:[#allocation2 + $0x2] sm:$0xff]
        %v3289 = vld [vmem:[#allocation2 + $0x12] sm:$0xff]
        %v3290 = vld [vmem:[#allocation2 + $0x22] sm:$0xff]
        %v3291 = vld [vmem:[#allocation2 + $0x32] sm:$0xff]
        %v3292 = vld [vmem:[#allocation2 + $0x42] sm:$0xff]
        %v3293 = vld [vmem:[#allocation2 + $0x52] sm:$0xff]
        %v3294 = vld [vmem:[#allocation2 + $0x62] sm:$0xff]
        %v3295 = vld [vmem:[#allocation2 + $0x72] sm:$0xff]
        %s3296 = scalar_lea.vmem [#allocation3], 800
        %v3297 = vld [vmem:[%s3296] sm:$0xff]
        %v3298 = vld [vmem:[%s3296 + $0x8] sm:$0xff]
        %v3299 = vld [vmem:[%s3296 + $0x10] sm:$0xff]
        %v3300 = vld [vmem:[%s3296 + $0x18] sm:$0xff]
        %v3301 = vld [vmem:[%s3296 + $0x20] sm:$0xff]
        %v3303 = vsel %vm231, %v3288, 0
        %v3306 = vsel %vm231, %v3289, 0
        %v3309 = vsel %vm231, %v3290, 0
        %v3312 = vsel %vm231, %v3291, 0
        %v3315 = vsel %vm231, %v3292, 0
        %v3318 = vsel %vm231, %v3293, 0
        %v3321 = vsel %vm231, %v3294, 0
        %v3324 = vsel %vm231, %v3295, 0
        %3326 = vmatprep.subr.mxu0 0.0
        %3327 = vmatpush1.msra.mxu0 %v3297
        %3328 = vmatprep.subr.mxu0 0.0
        %3329 = vmatpush1.msra.mxu0 %v3298
        %3330 = vmatprep.subr.mxu0 0.0
        %3331 = vmatpush1.msra.mxu0 %v3299
        %3332 = vmatprep.subr.mxu0 0.0
        %3333 = vmatpush1.msra.mxu0 %v3300
        %3334 = vmatprep.subr.mxu0 0.0
        %3335 = vmatpush1.msra.mxu0 %v3301
        %3336 = vmatprep.subr.mxu0 0.0
        %3337 = vmatpush1.msra.mxu0 0.0
        %3338 = vmatprep.subr.mxu0 0.0
        %3339 = vmatpush1.msra.mxu0 0.0
        %3340 = vmatprep.subr.mxu0 0.0
        %3341 = vmatpush1.msra.mxu0 0.0
        %3342 = vmatprep.subr.mxu0 0.0
        %3343 = vmatpush1.msra.mxu0 0.0
        %3344 = vmatprep.subr.mxu0 0.0
        %3345 = vmatpush1.msra.mxu0 0.0
        %3346 = vmatprep.subr.mxu0 0.0
        %3347 = vmatpush1.msra.mxu0 0.0
        %3348 = vmatprep.subr.mxu0 0.0
        %3349 = vmatpush1.msra.mxu0 0.0
        %3350 = vmatprep.subr.mxu0 0.0
        %3351 = vmatpush1.msra.mxu0 0.0
        %3352 = vmatprep.subr.mxu0 0.0
        %3353 = vmatpush1.msra.mxu0 0.0
        %3354 = vmatprep.subr.mxu0 0.0
        %3355 = vmatpush1.msra.mxu0 0.0
        %3356 = vmatprep.subr.mxu0 0.0
        %3357 = vmatpush1.msra.mxu0 0.0
        %3358 = vmatprep.subr.mxu0 0.0
        %3359 = vmatpush1.msra.mxu0 0.0
        %3360 = vmatprep.subr.mxu0 0.0
        %3361 = vmatpush1.msra.mxu0 0.0
        %3362 = vmatprep.subr.mxu0 0.0
        %3363 = vmatpush1.msra.mxu0 0.0
        %3364 = vmatprep.subr.mxu0 0.0
        %3365 = vmatpush1.msra.mxu0 0.0
        %3366 = vmatprep.subr.mxu0 0.0
        %3367 = vmatpush1.msra.mxu0 0.0
        %3368 = vmatprep.subr.mxu0 0.0
        %3369 = vmatpush1.msra.mxu0 0.0
        %3370 = vmatprep.subr.mxu0 0.0
        %3371 = vmatpush1.msra.mxu0 0.0
        %3372 = vmatprep.subr.mxu0 0.0
        %3373 = vmatpush1.msra.mxu0 0.0
        %3374 = vmatprep.subr.mxu0 0.0
        %3375 = vmatpush1.msra.mxu0 0.0
        %3376 = vmatprep.subr.mxu0 0.0
        %3377 = vmatpush1.msra.mxu0 0.0
        %3378 = vmatprep.subr.mxu0 0.0
        %3379 = vmatpush1.msra.mxu0 0.0
        %3380 = vmatprep.subr.mxu0 0.0
        %3381 = vmatpush1.msra.mxu0 0.0
        %3382 = vmatprep.subr.mxu0 0.0
        %3383 = vmatpush1.msra.mxu0 0.0
        %3384 = vmatprep.subr.mxu0 0.0
        %3385 = vmatpush1.msra.mxu0 0.0
        %3386 = vmatprep.subr.mxu0 0.0
        %3387 = vmatpush1.msra.mxu0 0.0
        %3388 = vmatprep.subr.mxu0 0.0
        %3389 = vmatpush1.msra.mxu0 0.0
        %3390 = vmatprep.mubr.f32.mxu0 0.0
        %3391 = vmatmul.mubr.f32.gmra.mrb[0].mxu0 %v3303
        %v3392 = vpop.f32.mrb[0].mxu0
        %v3393 = vadd.f32 0.0, %v3392
        %v3394 = vpop.f32.mrb[0].mxu0
        %3395 = vmatprep.mubr.f32.mxu0 0.0
        %3396 = vmatmul.mubr.f32.gmra.mrb[0].mxu0 %v3306
        %v3397 = vpop.f32.mrb[0].mxu0
        %v3398 = vadd.f32 0.0, %v3397
        %v3399 = vpop.f32.mrb[0].mxu0
        %3400 = vmatprep.mubr.f32.mxu0 0.0
        %3401 = vmatmul.mubr.f32.gmra.mrb[0].mxu0 %v3309
        %v3402 = vpop.f32.mrb[0].mxu0
        %v3403 = vadd.f32 0.0, %v3402
        %v3404 = vpop.f32.mrb[0].mxu0
        %3405 = vmatprep.mubr.f32.mxu0 0.0
        %3406 = vmatmul.mubr.f32.gmra.mrb[0].mxu0 %v3312
        %v3407 = vpop.f32.mrb[0].mxu0
        %v3408 = vadd.f32 0.0, %v3407
        %v3409 = vpop.f32.mrb[0].mxu0
        %3410 = vmatprep.mubr.f32.mxu0 0.0
        %3411 = vmatmul.mubr.f32.gmra.mrb[0].mxu0 %v3315
        %v3412 = vpop.f32.mrb[0].mxu0
        %v3413 = vadd.f32 0.0, %v3412
        %v3414 = vpop.f32.mrb[0].mxu0
        %3415 = vmatprep.mubr.f32.mxu0 0.0
        %3416 = vmatmul.mubr.f32.gmra.mrb[0].mxu0 %v3318
        %v3417 = vpop.f32.mrb[0].mxu0
        %v3418 = vadd.f32 0.0, %v3417
        %v3419 = vpop.f32.mrb[0].mxu0
        %3420 = vmatprep.mubr.f32.mxu0 0.0
        %3421 = vmatmul.mubr.f32.gmra.mrb[0].mxu0 %v3321
        %v3422 = vpop.f32.mrb[0].mxu0
        %v3423 = vadd.f32 0.0, %v3422
        %v3424 = vpop.f32.mrb[0].mxu0
        %3425 = vmatprep.mubr.f32.mxu0 0.0
        %3426 = vmatmul.mubr.f32.gmra.mrb[0].mxu0 %v3324
        %v3427 = vpop.f32.mrb[0].mxu0
        %v3428 = vadd.f32 0.0, %v3427
        %v3429 = vpop.f32.mrb[0].mxu0
        %3430 = vdwg.mxu0
        %v3431 = vadd.f32 %v3250, %v3393
        %v3432 = vadd.f32 %v3255, %v3398
        %v3433 = vadd.f32 %v3260, %v3403
        %v3434 = vadd.f32 %v3265, %v3408
        %v3435 = vadd.f32 %v3270, %v3413
        %v3436 = vadd.f32 %v3275, %v3418
        %v3437 = vadd.f32 %v3280, %v3423
        %v3438 = vadd.f32 %v3285, %v3428
        %v3439 = vld [vmem:[%s238] sm:$0xff]
        %v3440 = vld [vmem:[%s238 + $0x10] sm:$0xff]
        %v3441 = vld [vmem:[%s238 + $0x20] sm:$0xff]
        %v3442 = vld [vmem:[%s238 + $0x30] sm:$0xff]
        %v3443 = vld [vmem:[%s238 + $0x40] sm:$0xff]
        %v3444 = vld [vmem:[%s238 + $0x50] sm:$0xff]
        %v3445 = vld [vmem:[%s238 + $0x60] sm:$0xff]
        %v3446 = vld [vmem:[%s238 + $0x70] sm:$0xff]
        %s3447 = scalar_lea.vmem [#allocation3], 840
        %v3448 = vld [vmem:[%s3447] sm:$0xff]
        %v3449 = vld [vmem:[%s3447 + $0x8] sm:$0xff]
        %v3450 = vld [vmem:[%s3447 + $0x10] sm:$0xff]
        %v3451 = vld [vmem:[%s3447 + $0x18] sm:$0xff]
        %v3452 = vld [vmem:[%s3447 + $0x20] sm:$0xff]
        %v3454 = vsel %vm231, %v3439, 0
        %v3457 = vsel %vm231, %v3440, 0
        %v3460 = vsel %vm231, %v3441, 0
        %v3463 = vsel %vm231, %v3442, 0
        %v3466 = vsel %vm231, %v3443, 0
        %v3469 = vsel %vm231, %v3444, 0
        %v3472 = vsel %vm231, %v3445, 0
        %v3475 = vsel %vm231, %v3446, 0
        %3477 = vmatprep.subr.mxu0 0.0
        %3478 = vmatpush1.msra.mxu0 %v3448
        %3479 = vmatprep.subr.mxu0 0.0
        %3480 = vmatpush1.msra.mxu0 %v3449
        %3481 = vmatprep.subr.mxu0 0.0
        %3482 = vmatpush1.msra.mxu0 %v3450
        %3483 = vmatprep.subr.mxu0 0.0
        %3484 = vmatpush1.msra.mxu0 %v3451
        %3485 = vmatprep.subr.mxu0 0.0
        %3486 = vmatpush1.msra.mxu0 %v3452
        %3487 = vmatprep.subr.mxu0 0.0
        %3488 = vmatpush1.msra.mxu0 0.0
        %3489 = vmatprep.subr.mxu0 0.0
        %3490 = vmatpush1.msra.mxu0 0.0
        %3491 = vmatprep.subr.mxu0 0.0
        %3492 = vmatpush1.msra.mxu0 0.0
        %3493 = vmatprep.subr.mxu0 0.0
        %3494 = vmatpush1.msra.mxu0 0.0
        %3495 = vmatprep.subr.mxu0 0.0
        %3496 = vmatpush1.msra.mxu0 0.0
        %3497 = vmatprep.subr.mxu0 0.0
        %3498 = vmatpush1.msra.mxu0 0.0
        %3499 = vmatprep.subr.mxu0 0.0
        %3500 = vmatpush1.msra.mxu0 0.0
        %3501 = vmatprep.subr.mxu0 0.0
        %3502 = vmatpush1.msra.mxu0 0.0
        %3503 = vmatprep.subr.mxu0 0.0
        %3504 = vmatpush1.msra.mxu0 0.0
        %3505 = vmatprep.subr.mxu0 0.0
        %3506 = vmatpush1.msra.mxu0 0.0
        %3507 = vmatprep.subr.mxu0 0.0
        %3508 = vmatpush1.msra.mxu0 0.0
        %3509 = vmatprep.subr.mxu0 0.0
        %3510 = vmatpush1.msra.mxu0 0.0
        %3511 = vmatprep.subr.mxu0 0.0
        %3512 = vmatpush1.msra.mxu0 0.0
        %3513 = vmatprep.subr.mxu0 0.0
        %3514 = vmatpush1.msra.mxu0 0.0
        %3515 = vmatprep.subr.mxu0 0.0
        %3516 = vmatpush1.msra.mxu0 0.0
        %3517 = vmatprep.subr.mxu0 0.0
        %3518 = vmatpush1.msra.mxu0 0.0
        %3519 = vmatprep.subr.mxu0 0.0
        %3520 = vmatpush1.msra.mxu0 0.0
        %3521 = vmatprep.subr.mxu0 0.0
        %3522 = vmatpush1.msra.mxu0 0.0
        %3523 = vmatprep.subr.mxu0 0.0
        %3524 = vmatpush1.msra.mxu0 0.0
        %3525 = vmatprep.subr.mxu0 0.0
        %3526 = vmatpush1.msra.mxu0 0.0
        %3527 = vmatprep.subr.mxu0 0.0
        %3528 = vmatpush1.msra.mxu0 0.0
        %3529 = vmatprep.subr.mxu0 0.0
        %3530 = vmatpush1.msra.mxu0 0.0
        %3531 = vmatprep.subr.mxu0 0.0
        %3532 = vmatpush1.msra.mxu0 0.0
        %3533 = vmatprep.subr.mxu0 0.0
        %3534 = vmatpush1.msra.mxu0 0.0
        %3535 = vmatprep.subr.mxu0 0.0
        %3536 = vmatpush1.msra.mxu0 0.0
        %3537 = vmatprep.subr.mxu0 0.0
        %3538 = vmatpush1.msra.mxu0 0.0
        %3539 = vmatprep.subr.mxu0 0.0
        %3540 = vmatpush1.msra.mxu0 0.0
        %3541 = vmatprep.mubr.f32.mxu0 0.0
        %3542 = vmatmul.mubr.f32.gmra.mrb[0].mxu0 %v3454
        %v3543 = vpop.f32.mrb[0].mxu0
        %v3544 = vadd.f32 0.0, %v3543
        %v3545 = vpop.f32.mrb[0].mxu0
        %3546 = vmatprep.mubr.f32.mxu0 0.0
        %3547 = vmatmul.mubr.f32.gmra.mrb[0].mxu0 %v3457
        %v3548 = vpop.f32.mrb[0].mxu0
        %v3549 = vadd.f32 0.0, %v3548
        %v3550 = vpop.f32.mrb[0].mxu0
        %3551 = vmatprep.mubr.f32.mxu0 0.0
        %3552 = vmatmul.mubr.f32.gmra.mrb[0].mxu0 %v3460
        %v3553 = vpop.f32.mrb[0].mxu0
        %v3554 = vadd.f32 0.0, %v3553
        %v3555 = vpop.f32.mrb[0].mxu0
        %3556 = vmatprep.mubr.f32.mxu0 0.0
        %3557 = vmatmul.mubr.f32.gmra.mrb[0].mxu0 %v3463
        %v3558 = vpop.f32.mrb[0].mxu0
        %v3559 = vadd.f32 0.0, %v3558
        %v3560 = vpop.f32.mrb[0].mxu0
        %3561 = vmatprep.mubr.f32.mxu0 0.0
        %3562 = vmatmul.mubr.f32.gmra.mrb[0].mxu0 %v3466
        %v3563 = vpop.f32.mrb[0].mxu0
        %v3564 = vadd.f32 0.0, %v3563
        %v3565 = vpop.f32.mrb[0].mxu0
        %3566 = vmatprep.mubr.f32.mxu0 0.0
        %3567 = vmatmul.mubr.f32.gmra.mrb[0].mxu0 %v3469
        %v3568 = vpop.f32.mrb[0].mxu0
        %v3569 = vadd.f32 0.0, %v3568
        %v3570 = vpop.f32.mrb[0].mxu0
        %3571 = vmatprep.mubr.f32.mxu0 0.0
        %3572 = vmatmul.mubr.f32.gmra.mrb[0].mxu0 %v3472
        %v3573 = vpop.f32.mrb[0].mxu0
        %v3574 = vadd.f32 0.0, %v3573
        %v3575 = vpop.f32.mrb[0].mxu0
        %3576 = vmatprep.mubr.f32.mxu0 0.0
        %3577 = vmatmul.mubr.f32.gmra.mrb[0].mxu0 %v3475
        %v3578 = vpop.f32.mrb[0].mxu0
        %v3579 = vadd.f32 0.0, %v3578
        %v3580 = vpop.f32.mrb[0].mxu0
        %3581 = vdwg.mxu0
        %v3582 = vadd.f32 %v3431, %v3544
        %v3583 = vadd.f32 %v3432, %v3549
        %v3584 = vadd.f32 %v3433, %v3554
        %v3585 = vadd.f32 %v3434, %v3559
        %v3586 = vadd.f32 %v3435, %v3564
        %v3587 = vadd.f32 %v3436, %v3569
        %v3588 = vadd.f32 %v3437, %v3574
        %v3589 = vadd.f32 %v3438, %v3579
        %v3590 = vld [vmem:[%s238 + $0x1] sm:$0xff]
        %v3591 = vld [vmem:[%s238 + $0x11] sm:$0xff]
        %v3592 = vld [vmem:[%s238 + $0x21] sm:$0xff]
        %v3593 = vld [vmem:[%s238 + $0x31] sm:$0xff]
        %v3594 = vld [vmem:[%s238 + $0x41] sm:$0xff]
        %v3595 = vld [vmem:[%s238 + $0x51] sm:$0xff]
        %v3596 = vld [vmem:[%s238 + $0x61] sm:$0xff]
        %v3597 = vld [vmem:[%s238 + $0x71] sm:$0xff]
        %s3598 = scalar_lea.vmem [#allocation3], 880
        %v3599 = vld [vmem:[%s3598] sm:$0xff]
        %v3600 = vld [vmem:[%s3598 + $0x8] sm:$0xff]
        %v3601 = vld [vmem:[%s3598 + $0x10] sm:$0xff]
        %v3602 = vld [vmem:[%s3598 + $0x18] sm:$0xff]
        %v3603 = vld [vmem:[%s3598 + $0x20] sm:$0xff]
        %v3605 = vsel %vm231, %v3590, 0
        %v3608 = vsel %vm231, %v3591, 0
        %v3611 = vsel %vm231, %v3592, 0
        %v3614 = vsel %vm231, %v3593, 0
        %v3617 = vsel %vm231, %v3594, 0
        %v3620 = vsel %vm231, %v3595, 0
        %v3623 = vsel %vm231, %v3596, 0
        %v3626 = vsel %vm231, %v3597, 0
        %3628 = vmatprep.subr.mxu0 0.0
        %3629 = vmatpush1.msra.mxu0 %v3599
        %3630 = vmatprep.subr.mxu0 0.0
        %3631 = vmatpush1.msra.mxu0 %v3600
        %3632 = vmatprep.subr.mxu0 0.0
        %3633 = vmatpush1.msra.mxu0 %v3601
        %3634 = vmatprep.subr.mxu0 0.0
        %3635 = vmatpush1.msra.mxu0 %v3602
        %3636 = vmatprep.subr.mxu0 0.0
        %3637 = vmatpush1.msra.mxu0 %v3603
        %3638 = vmatprep.subr.mxu0 0.0
        %3639 = vmatpush1.msra.mxu0 0.0
        %3640 = vmatprep.subr.mxu0 0.0
        %3641 = vmatpush1.msra.mxu0 0.0
        %3642 = vmatprep.subr.mxu0 0.0
        %3643 = vmatpush1.msra.mxu0 0.0
        %3644 = vmatprep.subr.mxu0 0.0
        %3645 = vmatpush1.msra.mxu0 0.0
        %3646 = vmatprep.subr.mxu0 0.0
        %3647 = vmatpush1.msra.mxu0 0.0
        %3648 = vmatprep.subr.mxu0 0.0
        %3649 = vmatpush1.msra.mxu0 0.0
        %3650 = vmatprep.subr.mxu0 0.0
        %3651 = vmatpush1.msra.mxu0 0.0
        %3652 = vmatprep.subr.mxu0 0.0
        %3653 = vmatpush1.msra.mxu0 0.0
        %3654 = vmatprep.subr.mxu0 0.0
        %3655 = vmatpush1.msra.mxu0 0.0
        %3656 = vmatprep.subr.mxu0 0.0
        %3657 = vmatpush1.msra.mxu0 0.0
        %3658 = vmatprep.subr.mxu0 0.0
        %3659 = vmatpush1.msra.mxu0 0.0
        %3660 = vmatprep.subr.mxu0 0.0
        %3661 = vmatpush1.msra.mxu0 0.0
        %3662 = vmatprep.subr.mxu0 0.0
        %3663 = vmatpush1.msra.mxu0 0.0
        %3664 = vmatprep.subr.mxu0 0.0
        %3665 = vmatpush1.msra.mxu0 0.0
        %3666 = vmatprep.subr.mxu0 0.0
        %3667 = vmatpush1.msra.mxu0 0.0
        %3668 = vmatprep.subr.mxu0 0.0
        %3669 = vmatpush1.msra.mxu0 0.0
        %3670 = vmatprep.subr.mxu0 0.0
        %3671 = vmatpush1.msra.mxu0 0.0
        %3672 = vmatprep.subr.mxu0 0.0
        %3673 = vmatpush1.msra.mxu0 0.0
        %3674 = vmatprep.subr.mxu0 0.0
        %3675 = vmatpush1.msra.mxu0 0.0
        %3676 = vmatprep.subr.mxu0 0.0
        %3677 = vmatpush1.msra.mxu0 0.0
        %3678 = vmatprep.subr.mxu0 0.0
        %3679 = vmatpush1.msra.mxu0 0.0
        %3680 = vmatprep.subr.mxu0 0.0
        %3681 = vmatpush1.msra.mxu0 0.0
        %3682 = vmatprep.subr.mxu0 0.0
        %3683 = vmatpush1.msra.mxu0 0.0
        %3684 = vmatprep.subr.mxu0 0.0
        %3685 = vmatpush1.msra.mxu0 0.0
        %3686 = vmatprep.subr.mxu0 0.0
        %3687 = vmatpush1.msra.mxu0 0.0
        %3688 = vmatprep.subr.mxu0 0.0
        %3689 = vmatpush1.msra.mxu0 0.0
        %3690 = vmatprep.subr.mxu0 0.0
        %3691 = vmatpush1.msra.mxu0 0.0
        %3692 = vmatprep.mubr.f32.mxu0 0.0
        %3693 = vmatmul.mubr.f32.gmra.mrb[0].mxu0 %v3605
        %v3694 = vpop.f32.mrb[0].mxu0
        %v3695 = vadd.f32 0.0, %v3694
        %v3696 = vpop.f32.mrb[0].mxu0
        %3697 = vmatprep.mubr.f32.mxu0 0.0
        %3698 = vmatmul.mubr.f32.gmra.mrb[0].mxu0 %v3608
        %v3699 = vpop.f32.mrb[0].mxu0
        %v3700 = vadd.f32 0.0, %v3699
        %v3701 = vpop.f32.mrb[0].mxu0
        %3702 = vmatprep.mubr.f32.mxu0 0.0
        %3703 = vmatmul.mubr.f32.gmra.mrb[0].mxu0 %v3611
        %v3704 = vpop.f32.mrb[0].mxu0
        %v3705 = vadd.f32 0.0, %v3704
        %v3706 = vpop.f32.mrb[0].mxu0
        %3707 = vmatprep.mubr.f32.mxu0 0.0
        %3708 = vmatmul.mubr.f32.gmra.mrb[0].mxu0 %v3614
        %v3709 = vpop.f32.mrb[0].mxu0
        %v3710 = vadd.f32 0.0, %v3709
        %v3711 = vpop.f32.mrb[0].mxu0
        %3712 = vmatprep.mubr.f32.mxu0 0.0
        %3713 = vmatmul.mubr.f32.gmra.mrb[0].mxu0 %v3617
        %v3714 = vpop.f32.mrb[0].mxu0
        %v3715 = vadd.f32 0.0, %v3714
        %v3716 = vpop.f32.mrb[0].mxu0
        %3717 = vmatprep.mubr.f32.mxu0 0.0
        %3718 = vmatmul.mubr.f32.gmra.mrb[0].mxu0 %v3620
        %v3719 = vpop.f32.mrb[0].mxu0
        %v3720 = vadd.f32 0.0, %v3719
        %v3721 = vpop.f32.mrb[0].mxu0
        %3722 = vmatprep.mubr.f32.mxu0 0.0
        %3723 = vmatmul.mubr.f32.gmra.mrb[0].mxu0 %v3623
        %v3724 = vpop.f32.mrb[0].mxu0
        %v3725 = vadd.f32 0.0, %v3724
        %v3726 = vpop.f32.mrb[0].mxu0
        %3727 = vmatprep.mubr.f32.mxu0 0.0
        %3728 = vmatmul.mubr.f32.gmra.mrb[0].mxu0 %v3626
        %v3729 = vpop.f32.mrb[0].mxu0
        %v3730 = vadd.f32 0.0, %v3729
        %v3731 = vpop.f32.mrb[0].mxu0
        %3732 = vdwg.mxu0
        %v3733 = vadd.f32 %v3582, %v3695
        %v3734 = vadd.f32 %v3583, %v3700
        %v3735 = vadd.f32 %v3584, %v3705
        %v3736 = vadd.f32 %v3585, %v3710
        %v3737 = vadd.f32 %v3586, %v3715
        %v3738 = vadd.f32 %v3587, %v3720
        %v3739 = vadd.f32 %v3588, %v3725
        %v3740 = vadd.f32 %v3589, %v3730
        %v3741 = vld [vmem:[%s238 + $0x2] sm:$0xff]
        %v3742 = vld [vmem:[%s238 + $0x12] sm:$0xff]
        %v3743 = vld [vmem:[%s238 + $0x22] sm:$0xff]
        %v3744 = vld [vmem:[%s238 + $0x32] sm:$0xff]
        %v3745 = vld [vmem:[%s238 + $0x42] sm:$0xff]
        %v3746 = vld [vmem:[%s238 + $0x52] sm:$0xff]
        %v3747 = vld [vmem:[%s238 + $0x62] sm:$0xff]
        %v3748 = vld [vmem:[%s238 + $0x72] sm:$0xff]
        %s3749 = scalar_lea.vmem [#allocation3], 920
        %v3750 = vld [vmem:[%s3749] sm:$0xff]
        %v3751 = vld [vmem:[%s3749 + $0x8] sm:$0xff]
        %v3752 = vld [vmem:[%s3749 + $0x10] sm:$0xff]
        %v3753 = vld [vmem:[%s3749 + $0x18] sm:$0xff]
        %v3754 = vld [vmem:[%s3749 + $0x20] sm:$0xff]
        %v3756 = vsel %vm231, %v3741, 0
        %v3759 = vsel %vm231, %v3742, 0
        %v3762 = vsel %vm231, %v3743, 0
        %v3765 = vsel %vm231, %v3744, 0
        %v3768 = vsel %vm231, %v3745, 0
        %v3771 = vsel %vm231, %v3746, 0
        %v3774 = vsel %vm231, %v3747, 0
        %v3777 = vsel %vm231, %v3748, 0
        %3779 = vmatprep.subr.mxu0 0.0
        %3780 = vmatpush1.msra.mxu0 %v3750
        %3781 = vmatprep.subr.mxu0 0.0
        %3782 = vmatpush1.msra.mxu0 %v3751
        %3783 = vmatprep.subr.mxu0 0.0
        %3784 = vmatpush1.msra.mxu0 %v3752
        %3785 = vmatprep.subr.mxu0 0.0
        %3786 = vmatpush1.msra.mxu0 %v3753
        %3787 = vmatprep.subr.mxu0 0.0
        %3788 = vmatpush1.msra.mxu0 %v3754
        %3789 = vmatprep.subr.mxu0 0.0
        %3790 = vmatpush1.msra.mxu0 0.0
        %3791 = vmatprep.subr.mxu0 0.0
        %3792 = vmatpush1.msra.mxu0 0.0
        %3793 = vmatprep.subr.mxu0 0.0
        %3794 = vmatpush1.msra.mxu0 0.0
        %3795 = vmatprep.subr.mxu0 0.0
        %3796 = vmatpush1.msra.mxu0 0.0
        %3797 = vmatprep.subr.mxu0 0.0
        %3798 = vmatpush1.msra.mxu0 0.0
        %3799 = vmatprep.subr.mxu0 0.0
        %3800 = vmatpush1.msra.mxu0 0.0
        %3801 = vmatprep.subr.mxu0 0.0
        %3802 = vmatpush1.msra.mxu0 0.0
        %3803 = vmatprep.subr.mxu0 0.0
        %3804 = vmatpush1.msra.mxu0 0.0
        %3805 = vmatprep.subr.mxu0 0.0
        %3806 = vmatpush1.msra.mxu0 0.0
        %3807 = vmatprep.subr.mxu0 0.0
        %3808 = vmatpush1.msra.mxu0 0.0
        %3809 = vmatprep.subr.mxu0 0.0
        %3810 = vmatpush1.msra.mxu0 0.0
        %3811 = vmatprep.subr.mxu0 0.0
        %3812 = vmatpush1.msra.mxu0 0.0
        %3813 = vmatprep.subr.mxu0 0.0
        %3814 = vmatpush1.msra.mxu0 0.0
        %3815 = vmatprep.subr.mxu0 0.0
        %3816 = vmatpush1.msra.mxu0 0.0
        %3817 = vmatprep.subr.mxu0 0.0
        %3818 = vmatpush1.msra.mxu0 0.0
        %3819 = vmatprep.subr.mxu0 0.0
        %3820 = vmatpush1.msra.mxu0 0.0
        %3821 = vmatprep.subr.mxu0 0.0
        %3822 = vmatpush1.msra.mxu0 0.0
        %3823 = vmatprep.subr.mxu0 0.0
        %3824 = vmatpush1.msra.mxu0 0.0
        %3825 = vmatprep.subr.mxu0 0.0
        %3826 = vmatpush1.msra.mxu0 0.0
        %3827 = vmatprep.subr.mxu0 0.0
        %3828 = vmatpush1.msra.mxu0 0.0
        %3829 = vmatprep.subr.mxu0 0.0
        %3830 = vmatpush1.msra.mxu0 0.0
        %3831 = vmatprep.subr.mxu0 0.0
        %3832 = vmatpush1.msra.mxu0 0.0
        %3833 = vmatprep.subr.mxu0 0.0
        %3834 = vmatpush1.msra.mxu0 0.0
        %3835 = vmatprep.subr.mxu0 0.0
        %3836 = vmatpush1.msra.mxu0 0.0
        %3837 = vmatprep.subr.mxu0 0.0
        %3838 = vmatpush1.msra.mxu0 0.0
        %3839 = vmatprep.subr.mxu0 0.0
        %3840 = vmatpush1.msra.mxu0 0.0
        %3841 = vmatprep.subr.mxu0 0.0
        %3842 = vmatpush1.msra.mxu0 0.0
        %3843 = vmatprep.mubr.f32.mxu0 0.0
        %3844 = vmatmul.mubr.f32.gmra.mrb[0].mxu0 %v3756
        %v3845 = vpop.f32.mrb[0].mxu0
        %v3846 = vadd.f32 0.0, %v3845
        %v3847 = vpop.f32.mrb[0].mxu0
        %3848 = vmatprep.mubr.f32.mxu0 0.0
        %3849 = vmatmul.mubr.f32.gmra.mrb[0].mxu0 %v3759
        %v3850 = vpop.f32.mrb[0].mxu0
        %v3851 = vadd.f32 0.0, %v3850
        %v3852 = vpop.f32.mrb[0].mxu0
        %3853 = vmatprep.mubr.f32.mxu0 0.0
        %3854 = vmatmul.mubr.f32.gmra.mrb[0].mxu0 %v3762
        %v3855 = vpop.f32.mrb[0].mxu0
        %v3856 = vadd.f32 0.0, %v3855
        %v3857 = vpop.f32.mrb[0].mxu0
        %3858 = vmatprep.mubr.f32.mxu0 0.0
        %3859 = vmatmul.mubr.f32.gmra.mrb[0].mxu0 %v3765
        %v3860 = vpop.f32.mrb[0].mxu0
        %v3861 = vadd.f32 0.0, %v3860
        %v3862 = vpop.f32.mrb[0].mxu0
        %3863 = vmatprep.mubr.f32.mxu0 0.0
        %3864 = vmatmul.mubr.f32.gmra.mrb[0].mxu0 %v3768
        %v3865 = vpop.f32.mrb[0].mxu0
        %v3866 = vadd.f32 0.0, %v3865
        %v3867 = vpop.f32.mrb[0].mxu0
        %3868 = vmatprep.mubr.f32.mxu0 0.0
        %3869 = vmatmul.mubr.f32.gmra.mrb[0].mxu0 %v3771
        %v3870 = vpop.f32.mrb[0].mxu0
        %v3871 = vadd.f32 0.0, %v3870
        %v3872 = vpop.f32.mrb[0].mxu0
        %3873 = vmatprep.mubr.f32.mxu0 0.0
        %3874 = vmatmul.mubr.f32.gmra.mrb[0].mxu0 %v3774
        %v3875 = vpop.f32.mrb[0].mxu0
        %v3876 = vadd.f32 0.0, %v3875
        %v3877 = vpop.f32.mrb[0].mxu0
        %3878 = vmatprep.mubr.f32.mxu0 0.0
        %3879 = vmatmul.mubr.f32.gmra.mrb[0].mxu0 %v3777
        %v3880 = vpop.f32.mrb[0].mxu0
        %v3881 = vadd.f32 0.0, %v3880
        %v3882 = vpop.f32.mrb[0].mxu0
        %3883 = vdwg.mxu0
        %v3884 = vadd.f32 %v3733, %v3846
        %v3885 = vadd.f32 %v3734, %v3851
        %v3886 = vadd.f32 %v3735, %v3856
        %v3887 = vadd.f32 %v3736, %v3861
        %v3888 = vadd.f32 %v3737, %v3866
        %v3889 = vadd.f32 %v3738, %v3871
        %v3890 = vadd.f32 %v3739, %v3876
        %v3891 = vadd.f32 %v3740, %v3881
        %v3892 = vld [vmem:[%s2519] sm:$0xff]
        %v3893 = vld [vmem:[%s2519 + $0x10] sm:$0xff]
        %v3894 = vld [vmem:[%s2519 + $0x20] sm:$0xff]
        %v3895 = vld [vmem:[%s2519 + $0x30] sm:$0xff]
        %v3896 = vld [vmem:[%s2519 + $0x40] sm:$0xff]
        %v3897 = vld [vmem:[%s2519 + $0x50] sm:$0xff]
        %v3898 = vld [vmem:[%s2519 + $0x60] sm:$0xff]
        %v3899 = vld [vmem:[%s2519 + $0x70] sm:$0xff]
        %s3900 = scalar_lea.vmem [#allocation3], 960
        %v3901 = vld [vmem:[%s3900] sm:$0xff]
        %v3902 = vld [vmem:[%s3900 + $0x8] sm:$0xff]
        %v3903 = vld [vmem:[%s3900 + $0x10] sm:$0xff]
        %v3904 = vld [vmem:[%s3900 + $0x18] sm:$0xff]
        %v3905 = vld [vmem:[%s3900 + $0x20] sm:$0xff]
        %v3907 = vsel %vm231, %v3892, 0
        %v3910 = vsel %vm231, %v3893, 0
        %v3913 = vsel %vm231, %v3894, 0
        %v3916 = vsel %vm231, %v3895, 0
        %v3919 = vsel %vm231, %v3896, 0
        %v3922 = vsel %vm231, %v3897, 0
        %v3925 = vsel %vm231, %v3898, 0
        %v3928 = vsel %vm231, %v3899, 0
        %3930 = vmatprep.subr.mxu0 0.0
        %3931 = vmatpush1.msra.mxu0 %v3901
        %3932 = vmatprep.subr.mxu0 0.0
        %3933 = vmatpush1.msra.mxu0 %v3902
        %3934 = vmatprep.subr.mxu0 0.0
        %3935 = vmatpush1.msra.mxu0 %v3903
        %3936 = vmatprep.subr.mxu0 0.0
        %3937 = vmatpush1.msra.mxu0 %v3904
        %3938 = vmatprep.subr.mxu0 0.0
        %3939 = vmatpush1.msra.mxu0 %v3905
        %3940 = vmatprep.subr.mxu0 0.0
        %3941 = vmatpush1.msra.mxu0 0.0
        %3942 = vmatprep.subr.mxu0 0.0
        %3943 = vmatpush1.msra.mxu0 0.0
        %3944 = vmatprep.subr.mxu0 0.0
        %3945 = vmatpush1.msra.mxu0 0.0
        %3946 = vmatprep.subr.mxu0 0.0
        %3947 = vmatpush1.msra.mxu0 0.0
        %3948 = vmatprep.subr.mxu0 0.0
        %3949 = vmatpush1.msra.mxu0 0.0
        %3950 = vmatprep.subr.mxu0 0.0
        %3951 = vmatpush1.msra.mxu0 0.0
        %3952 = vmatprep.subr.mxu0 0.0
        %3953 = vmatpush1.msra.mxu0 0.0
        %3954 = vmatprep.subr.mxu0 0.0
        %3955 = vmatpush1.msra.mxu0 0.0
        %3956 = vmatprep.subr.mxu0 0.0
        %3957 = vmatpush1.msra.mxu0 0.0
        %3958 = vmatprep.subr.mxu0 0.0
        %3959 = vmatpush1.msra.mxu0 0.0
        %3960 = vmatprep.subr.mxu0 0.0
        %3961 = vmatpush1.msra.mxu0 0.0
        %3962 = vmatprep.subr.mxu0 0.0
        %3963 = vmatpush1.msra.mxu0 0.0
        %3964 = vmatprep.subr.mxu0 0.0
        %3965 = vmatpush1.msra.mxu0 0.0
        %3966 = vmatprep.subr.mxu0 0.0
        %3967 = vmatpush1.msra.mxu0 0.0
        %3968 = vmatprep.subr.mxu0 0.0
        %3969 = vmatpush1.msra.mxu0 0.0
        %3970 = vmatprep.subr.mxu0 0.0
        %3971 = vmatpush1.msra.mxu0 0.0
        %3972 = vmatprep.subr.mxu0 0.0
        %3973 = vmatpush1.msra.mxu0 0.0
        %3974 = vmatprep.subr.mxu0 0.0
        %3975 = vmatpush1.msra.mxu0 0.0
        %3976 = vmatprep.subr.mxu0 0.0
        %3977 = vmatpush1.msra.mxu0 0.0
        %3978 = vmatprep.subr.mxu0 0.0
        %3979 = vmatpush1.msra.mxu0 0.0
        %3980 = vmatprep.subr.mxu0 0.0
        %3981 = vmatpush1.msra.mxu0 0.0
        %3982 = vmatprep.subr.mxu0 0.0
        %3983 = vmatpush1.msra.mxu0 0.0
        %3984 = vmatprep.subr.mxu0 0.0
        %3985 = vmatpush1.msra.mxu0 0.0
        %3986 = vmatprep.subr.mxu0 0.0
        %3987 = vmatpush1.msra.mxu0 0.0
        %3988 = vmatprep.subr.mxu0 0.0
        %3989 = vmatpush1.msra.mxu0 0.0
        %3990 = vmatprep.subr.mxu0 0.0
        %3991 = vmatpush1.msra.mxu0 0.0
        %3992 = vmatprep.subr.mxu0 0.0
        %3993 = vmatpush1.msra.mxu0 0.0
        %3994 = vmatprep.mubr.f32.mxu0 0.0
        %3995 = vmatmul.mubr.f32.gmra.mrb[0].mxu0 %v3907
        %v3996 = vpop.f32.mrb[0].mxu0
        %v3997 = vadd.f32 0.0, %v3996
        %v3998 = vpop.f32.mrb[0].mxu0
        %3999 = vmatprep.mubr.f32.mxu0 0.0
        %4000 = vmatmul.mubr.f32.gmra.mrb[0].mxu0 %v3910
        %v4001 = vpop.f32.mrb[0].mxu0
        %v4002 = vadd.f32 0.0, %v4001
        %v4003 = vpop.f32.mrb[0].mxu0
        %4004 = vmatprep.mubr.f32.mxu0 0.0
        %4005 = vmatmul.mubr.f32.gmra.mrb[0].mxu0 %v3913
        %v4006 = vpop.f32.mrb[0].mxu0
        %v4007 = vadd.f32 0.0, %v4006
        %v4008 = vpop.f32.mrb[0].mxu0
        %4009 = vmatprep.mubr.f32.mxu0 0.0
        %4010 = vmatmul.mubr.f32.gmra.mrb[0].mxu0 %v3916
        %v4011 = vpop.f32.mrb[0].mxu0
        %v4012 = vadd.f32 0.0, %v4011
        %v4013 = vpop.f32.mrb[0].mxu0
        %4014 = vmatprep.mubr.f32.mxu0 0.0
        %4015 = vmatmul.mubr.f32.gmra.mrb[0].mxu0 %v3919
        %v4016 = vpop.f32.mrb[0].mxu0
        %v4017 = vadd.f32 0.0, %v4016
        %v4018 = vpop.f32.mrb[0].mxu0
        %4019 = vmatprep.mubr.f32.mxu0 0.0
        %4020 = vmatmul.mubr.f32.gmra.mrb[0].mxu0 %v3922
        %v4021 = vpop.f32.mrb[0].mxu0
        %v4022 = vadd.f32 0.0, %v4021
        %v4023 = vpop.f32.mrb[0].mxu0
        %4024 = vmatprep.mubr.f32.mxu0 0.0
        %4025 = vmatmul.mubr.f32.gmra.mrb[0].mxu0 %v3925
        %v4026 = vpop.f32.mrb[0].mxu0
        %v4027 = vadd.f32 0.0, %v4026
        %v4028 = vpop.f32.mrb[0].mxu0
        %4029 = vmatprep.mubr.f32.mxu0 0.0
        %4030 = vmatmul.mubr.f32.gmra.mrb[0].mxu0 %v3928
        %v4031 = vpop.f32.mrb[0].mxu0
        %v4032 = vadd.f32 0.0, %v4031
        %v4033 = vpop.f32.mrb[0].mxu0
        %4034 = vdwg.mxu0
        %v4035 = vadd.f32 %v3884, %v3997
        %v4036 = vadd.f32 %v3885, %v4002
        %v4037 = vadd.f32 %v3886, %v4007
        %v4038 = vadd.f32 %v3887, %v4012
        %v4039 = vadd.f32 %v3888, %v4017
        %v4040 = vadd.f32 %v3889, %v4022
        %v4041 = vadd.f32 %v3890, %v4027
        %v4042 = vadd.f32 %v3891, %v4032
        %v4043 = vld [vmem:[%s2519 + $0x1] sm:$0xff]
        %v4044 = vld [vmem:[%s2519 + $0x11] sm:$0xff]
        %v4045 = vld [vmem:[%s2519 + $0x21] sm:$0xff]
        %v4046 = vld [vmem:[%s2519 + $0x31] sm:$0xff]
        %v4047 = vld [vmem:[%s2519 + $0x41] sm:$0xff]
        %v4048 = vld [vmem:[%s2519 + $0x51] sm:$0xff]
        %v4049 = vld [vmem:[%s2519 + $0x61] sm:$0xff]
        %v4050 = vld [vmem:[%s2519 + $0x71] sm:$0xff]
        %s4051 = scalar_lea.vmem [#allocation3], 1000
        %v4052 = vld [vmem:[%s4051] sm:$0xff]
        %v4053 = vld [vmem:[%s4051 + $0x8] sm:$0xff]
        %v4054 = vld [vmem:[%s4051 + $0x10] sm:$0xff]
        %v4055 = vld [vmem:[%s4051 + $0x18] sm:$0xff]
        %v4056 = vld [vmem:[%s4051 + $0x20] sm:$0xff]
        %v4058 = vsel %vm231, %v4043, 0
        %v4061 = vsel %vm231, %v4044, 0
        %v4064 = vsel %vm231, %v4045, 0
        %v4067 = vsel %vm231, %v4046, 0
        %v4070 = vsel %vm231, %v4047, 0
        %v4073 = vsel %vm231, %v4048, 0
        %v4076 = vsel %vm231, %v4049, 0
        %v4079 = vsel %vm231, %v4050, 0
        %4081 = vmatprep.subr.mxu0 0.0
        %4082 = vmatpush1.msra.mxu0 %v4052
        %4083 = vmatprep.subr.mxu0 0.0
        %4084 = vmatpush1.msra.mxu0 %v4053
        %4085 = vmatprep.subr.mxu0 0.0
        %4086 = vmatpush1.msra.mxu0 %v4054
        %4087 = vmatprep.subr.mxu0 0.0
        %4088 = vmatpush1.msra.mxu0 %v4055
        %4089 = vmatprep.subr.mxu0 0.0
        %4090 = vmatpush1.msra.mxu0 %v4056
        %4091 = vmatprep.subr.mxu0 0.0
        %4092 = vmatpush1.msra.mxu0 0.0
        %4093 = vmatprep.subr.mxu0 0.0
        %4094 = vmatpush1.msra.mxu0 0.0
        %4095 = vmatprep.subr.mxu0 0.0
        %4096 = vmatpush1.msra.mxu0 0.0
        %4097 = vmatprep.subr.mxu0 0.0
        %4098 = vmatpush1.msra.mxu0 0.0
        %4099 = vmatprep.subr.mxu0 0.0
        %4100 = vmatpush1.msra.mxu0 0.0
        %4101 = vmatprep.subr.mxu0 0.0
        %4102 = vmatpush1.msra.mxu0 0.0
        %4103 = vmatprep.subr.mxu0 0.0
        %4104 = vmatpush1.msra.mxu0 0.0
        %4105 = vmatprep.subr.mxu0 0.0
        %4106 = vmatpush1.msra.mxu0 0.0
        %4107 = vmatprep.subr.mxu0 0.0
        %4108 = vmatpush1.msra.mxu0 0.0
        %4109 = vmatprep.subr.mxu0 0.0
        %4110 = vmatpush1.msra.mxu0 0.0
        %4111 = vmatprep.subr.mxu0 0.0
        %4112 = vmatpush1.msra.mxu0 0.0
        %4113 = vmatprep.subr.mxu0 0.0
        %4114 = vmatpush1.msra.mxu0 0.0
        %4115 = vmatprep.subr.mxu0 0.0
        %4116 = vmatpush1.msra.mxu0 0.0
        %4117 = vmatprep.subr.mxu0 0.0
        %4118 = vmatpush1.msra.mxu0 0.0
        %4119 = vmatprep.subr.mxu0 0.0
        %4120 = vmatpush1.msra.mxu0 0.0
        %4121 = vmatprep.subr.mxu0 0.0
        %4122 = vmatpush1.msra.mxu0 0.0
        %4123 = vmatprep.subr.mxu0 0.0
        %4124 = vmatpush1.msra.mxu0 0.0
        %4125 = vmatprep.subr.mxu0 0.0
        %4126 = vmatpush1.msra.mxu0 0.0
        %4127 = vmatprep.subr.mxu0 0.0
        %4128 = vmatpush1.msra.mxu0 0.0
        %4129 = vmatprep.subr.mxu0 0.0
        %4130 = vmatpush1.msra.mxu0 0.0
        %4131 = vmatprep.subr.mxu0 0.0
        %4132 = vmatpush1.msra.mxu0 0.0
        %4133 = vmatprep.subr.mxu0 0.0
        %4134 = vmatpush1.msra.mxu0 0.0
        %4135 = vmatprep.subr.mxu0 0.0
        %4136 = vmatpush1.msra.mxu0 0.0
        %4137 = vmatprep.subr.mxu0 0.0
        %4138 = vmatpush1.msra.mxu0 0.0
        %4139 = vmatprep.subr.mxu0 0.0
        %4140 = vmatpush1.msra.mxu0 0.0
        %4141 = vmatprep.subr.mxu0 0.0
        %4142 = vmatpush1.msra.mxu0 0.0
        %4143 = vmatprep.subr.mxu0 0.0
        %4144 = vmatpush1.msra.mxu0 0.0
        %4145 = vmatprep.mubr.f32.mxu0 0.0
        %4146 = vmatmul.mubr.f32.gmra.mrb[0].mxu0 %v4058
        %v4147 = vpop.f32.mrb[0].mxu0
        %v4148 = vadd.f32 0.0, %v4147
        %v4149 = vpop.f32.mrb[0].mxu0
        %4150 = vmatprep.mubr.f32.mxu0 0.0
        %4151 = vmatmul.mubr.f32.gmra.mrb[0].mxu0 %v4061
        %v4152 = vpop.f32.mrb[0].mxu0
        %v4153 = vadd.f32 0.0, %v4152
        %v4154 = vpop.f32.mrb[0].mxu0
        %4155 = vmatprep.mubr.f32.mxu0 0.0
        %4156 = vmatmul.mubr.f32.gmra.mrb[0].mxu0 %v4064
        %v4157 = vpop.f32.mrb[0].mxu0
        %v4158 = vadd.f32 0.0, %v4157
        %v4159 = vpop.f32.mrb[0].mxu0
        %4160 = vmatprep.mubr.f32.mxu0 0.0
        %4161 = vmatmul.mubr.f32.gmra.mrb[0].mxu0 %v4067
        %v4162 = vpop.f32.mrb[0].mxu0
        %v4163 = vadd.f32 0.0, %v4162
        %v4164 = vpop.f32.mrb[0].mxu0
        %4165 = vmatprep.mubr.f32.mxu0 0.0
        %4166 = vmatmul.mubr.f32.gmra.mrb[0].mxu0 %v4070
        %v4167 = vpop.f32.mrb[0].mxu0
        %v4168 = vadd.f32 0.0, %v4167
        %v4169 = vpop.f32.mrb[0].mxu0
        %4170 = vmatprep.mubr.f32.mxu0 0.0
        %4171 = vmatmul.mubr.f32.gmra.mrb[0].mxu0 %v4073
        %v4172 = vpop.f32.mrb[0].mxu0
        %v4173 = vadd.f32 0.0, %v4172
        %v4174 = vpop.f32.mrb[0].mxu0
        %4175 = vmatprep.mubr.f32.mxu0 0.0
        %4176 = vmatmul.mubr.f32.gmra.mrb[0].mxu0 %v4076
        %v4177 = vpop.f32.mrb[0].mxu0
        %v4178 = vadd.f32 0.0, %v4177
        %v4179 = vpop.f32.mrb[0].mxu0
        %4180 = vmatprep.mubr.f32.mxu0 0.0
        %4181 = vmatmul.mubr.f32.gmra.mrb[0].mxu0 %v4079
        %v4182 = vpop.f32.mrb[0].mxu0
        %v4183 = vadd.f32 0.0, %v4182
        %v4184 = vpop.f32.mrb[0].mxu0
        %4185 = vdwg.mxu0
        %v4186 = vadd.f32 %v4035, %v4148
        %v4187 = vadd.f32 %v4036, %v4153
        %v4188 = vadd.f32 %v4037, %v4158
        %v4189 = vadd.f32 %v4038, %v4163
        %v4190 = vadd.f32 %v4039, %v4168
        %v4191 = vadd.f32 %v4040, %v4173
        %v4192 = vadd.f32 %v4041, %v4178
        %v4193 = vadd.f32 %v4042, %v4183
        %v4194 = vld [vmem:[%s2519 + $0x2] sm:$0xff]
        %v4195 = vld [vmem:[%s2519 + $0x12] sm:$0xff]
        %v4196 = vld [vmem:[%s2519 + $0x22] sm:$0xff]
        %v4197 = vld [vmem:[%s2519 + $0x32] sm:$0xff]
        %v4198 = vld [vmem:[%s2519 + $0x42] sm:$0xff]
        %v4199 = vld [vmem:[%s2519 + $0x52] sm:$0xff]
        %v4200 = vld [vmem:[%s2519 + $0x62] sm:$0xff]
        %v4201 = vld [vmem:[%s2519 + $0x72] sm:$0xff]
        %s4202 = scalar_lea.vmem [#allocation3], 1040
        %v4203 = vld [vmem:[%s4202] sm:$0xff]
        %v4204 = vld [vmem:[%s4202 + $0x8] sm:$0xff]
        %v4205 = vld [vmem:[%s4202 + $0x10] sm:$0xff]
        %v4206 = vld [vmem:[%s4202 + $0x18] sm:$0xff]
        %v4207 = vld [vmem:[%s4202 + $0x20] sm:$0xff]
        %v4209 = vsel %vm231, %v4194, 0
        %v4212 = vsel %vm231, %v4195, 0
        %v4215 = vsel %vm231, %v4196, 0
        %v4218 = vsel %vm231, %v4197, 0
        %v4221 = vsel %vm231, %v4198, 0
        %v4224 = vsel %vm231, %v4199, 0
        %v4227 = vsel %vm231, %v4200, 0
        %v4230 = vsel %vm231, %v4201, 0
        %4232 = vmatprep.subr.mxu0 0.0
        %4233 = vmatpush1.msra.mxu0 %v4203
        %4234 = vmatprep.subr.mxu0 0.0
        %4235 = vmatpush1.msra.mxu0 %v4204
        %4236 = vmatprep.subr.mxu0 0.0
        %4237 = vmatpush1.msra.mxu0 %v4205
        %4238 = vmatprep.subr.mxu0 0.0
        %4239 = vmatpush1.msra.mxu0 %v4206
        %4240 = vmatprep.subr.mxu0 0.0
        %4241 = vmatpush1.msra.mxu0 %v4207
        %4242 = vmatprep.subr.mxu0 0.0
        %4243 = vmatpush1.msra.mxu0 0.0
        %4244 = vmatprep.subr.mxu0 0.0
        %4245 = vmatpush1.msra.mxu0 0.0
        %4246 = vmatprep.subr.mxu0 0.0
        %4247 = vmatpush1.msra.mxu0 0.0
        %4248 = vmatprep.subr.mxu0 0.0
        %4249 = vmatpush1.msra.mxu0 0.0
        %4250 = vmatprep.subr.mxu0 0.0
        %4251 = vmatpush1.msra.mxu0 0.0
        %4252 = vmatprep.subr.mxu0 0.0
        %4253 = vmatpush1.msra.mxu0 0.0
        %4254 = vmatprep.subr.mxu0 0.0
        %4255 = vmatpush1.msra.mxu0 0.0
        %4256 = vmatprep.subr.mxu0 0.0
        %4257 = vmatpush1.msra.mxu0 0.0
        %4258 = vmatprep.subr.mxu0 0.0
        %4259 = vmatpush1.msra.mxu0 0.0
        %4260 = vmatprep.subr.mxu0 0.0
        %4261 = vmatpush1.msra.mxu0 0.0
        %4262 = vmatprep.subr.mxu0 0.0
        %4263 = vmatpush1.msra.mxu0 0.0
        %4264 = vmatprep.subr.mxu0 0.0
        %4265 = vmatpush1.msra.mxu0 0.0
        %4266 = vmatprep.subr.mxu0 0.0
        %4267 = vmatpush1.msra.mxu0 0.0
        %4268 = vmatprep.subr.mxu0 0.0
        %4269 = vmatpush1.msra.mxu0 0.0
        %4270 = vmatprep.subr.mxu0 0.0
        %4271 = vmatpush1.msra.mxu0 0.0
        %4272 = vmatprep.subr.mxu0 0.0
        %4273 = vmatpush1.msra.mxu0 0.0
        %4274 = vmatprep.subr.mxu0 0.0
        %4275 = vmatpush1.msra.mxu0 0.0
        %4276 = vmatprep.subr.mxu0 0.0
        %4277 = vmatpush1.msra.mxu0 0.0
        %4278 = vmatprep.subr.mxu0 0.0
        %4279 = vmatpush1.msra.mxu0 0.0
        %4280 = vmatprep.subr.mxu0 0.0
        %4281 = vmatpush1.msra.mxu0 0.0
        %4282 = vmatprep.subr.mxu0 0.0
        %4283 = vmatpush1.msra.mxu0 0.0
        %4284 = vmatprep.subr.mxu0 0.0
        %4285 = vmatpush1.msra.mxu0 0.0
        %4286 = vmatprep.subr.mxu0 0.0
        %4287 = vmatpush1.msra.mxu0 0.0
        %4288 = vmatprep.subr.mxu0 0.0
        %4289 = vmatpush1.msra.mxu0 0.0
        %4290 = vmatprep.subr.mxu0 0.0
        %4291 = vmatpush1.msra.mxu0 0.0
        %4292 = vmatprep.subr.mxu0 0.0
        %4293 = vmatpush1.msra.mxu0 0.0
        %4294 = vmatprep.subr.mxu0 0.0
        %4295 = vmatpush1.msra.mxu0 0.0
        %4296 = vmatprep.mubr.f32.mxu0 0.0
        %4297 = vmatmul.mubr.f32.gmra.mrb[0].mxu0 %v4209
        %v4298 = vpop.f32.mrb[0].mxu0
        %v4299 = vadd.f32 0.0, %v4298
        %v4300 = vpop.f32.mrb[0].mxu0
        %4301 = vmatprep.mubr.f32.mxu0 0.0
        %4302 = vmatmul.mubr.f32.gmra.mrb[0].mxu0 %v4212
        %v4303 = vpop.f32.mrb[0].mxu0
        %v4304 = vadd.f32 0.0, %v4303
        %v4305 = vpop.f32.mrb[0].mxu0
        %4306 = vmatprep.mubr.f32.mxu0 0.0
        %4307 = vmatmul.mubr.f32.gmra.mrb[0].mxu0 %v4215
        %v4308 = vpop.f32.mrb[0].mxu0
        %v4309 = vadd.f32 0.0, %v4308
        %v4310 = vpop.f32.mrb[0].mxu0
        %4311 = vmatprep.mubr.f32.mxu0 0.0
        %4312 = vmatmul.mubr.f32.gmra.mrb[0].mxu0 %v4218
        %v4313 = vpop.f32.mrb[0].mxu0
        %v4314 = vadd.f32 0.0, %v4313
        %v4315 = vpop.f32.mrb[0].mxu0
        %4316 = vmatprep.mubr.f32.mxu0 0.0
        %4317 = vmatmul.mubr.f32.gmra.mrb[0].mxu0 %v4221
        %v4318 = vpop.f32.mrb[0].mxu0
        %v4319 = vadd.f32 0.0, %v4318
        %v4320 = vpop.f32.mrb[0].mxu0
        %4321 = vmatprep.mubr.f32.mxu0 0.0
        %4322 = vmatmul.mubr.f32.gmra.mrb[0].mxu0 %v4224
        %v4323 = vpop.f32.mrb[0].mxu0
        %v4324 = vadd.f32 0.0, %v4323
        %v4325 = vpop.f32.mrb[0].mxu0
        %4326 = vmatprep.mubr.f32.mxu0 0.0
        %4327 = vmatmul.mubr.f32.gmra.mrb[0].mxu0 %v4227
        %v4328 = vpop.f32.mrb[0].mxu0
        %v4329 = vadd.f32 0.0, %v4328
        %v4330 = vpop.f32.mrb[0].mxu0
        %4331 = vmatprep.mubr.f32.mxu0 0.0
        %4332 = vmatmul.mubr.f32.gmra.mrb[0].mxu0 %v4230
        %v4333 = vpop.f32.mrb[0].mxu0
        %v4334 = vadd.f32 0.0, %v4333
        %v4335 = vpop.f32.mrb[0].mxu0
        %4336 = vdwg.mxu0
        %v4337 = vadd.f32 %v4186, %v4299
        %v4338 = vadd.f32 %v4187, %v4304
        %v4339 = vadd.f32 %v4188, %v4309
        %v4340 = vadd.f32 %v4189, %v4314
        %v4341 = vadd.f32 %v4190, %v4319
        %v4342 = vadd.f32 %v4191, %v4324
        %v4343 = vadd.f32 %v4192, %v4329
        %v4344 = vadd.f32 %v4193, %v4334
        %v4345 = vld [vmem:[%s3 + $0x2] sm:$0x1]
        %v4346 = vlaneseq
        %v4347 = vshrl.u32 %v4346, 7
        %v4348 = vsub.s32 0, %v4347
        %v4349 = vrot.slane %v4345, %v4348
        %v4350 = vadd.f32 %v4337, %v4349
        %v4351 = vadd.f32 %v4338, %v4349
        %v4352 = vadd.f32 %v4339, %v4349
        %v4353 = vadd.f32 %v4340, %v4349
        %v4354 = vadd.f32 %v4341, %v4349
        %v4355 = vadd.f32 %v4342, %v4349
        %v4356 = vadd.f32 %v4343, %v4349
        %v4357 = vadd.f32 %v4344, %v4349
        %v4358 = vmax.f32 %v4350, 0.0
        %v4359 = vmax.f32 %v4351, 0.0
        %v4360 = vmax.f32 %v4352, 0.0
        %v4361 = vmax.f32 %v4353, 0.0
        %v4362 = vmax.f32 %v4354, 0.0
        %v4363 = vmax.f32 %v4355, 0.0
        %v4364 = vmax.f32 %v4356, 0.0
        %v4365 = vmax.f32 %v4357, 0.0
        %4366 = vst.msk [vmem:[%s238 + $0x1] sm:$0xff] %vm231, %v4358
        %4367 = vst.msk [vmem:[%s238 + $0x11] sm:$0xff] %vm231, %v4359
        %4368 = vst.msk [vmem:[%s238 + $0x21] sm:$0xff] %vm231, %v4360
        %4369 = vst.msk [vmem:[%s238 + $0x31] sm:$0xff] %vm231, %v4361
        %4370 = vst.msk [vmem:[%s238 + $0x41] sm:$0xff] %vm231, %v4362
        %4371 = vst.msk [vmem:[%s238 + $0x51] sm:$0xff] %vm231, %v4363
        %4372 = vst.msk [vmem:[%s238 + $0x61] sm:$0xff] %vm231, %v4364
        %4373 = vst.msk [vmem:[%s238 + $0x71] sm:$0xff] %vm231, %v4365
        %v4374 = vld [vmem:[#allocation2] sm:$0xff]
        %v4375 = vld [vmem:[#allocation2 + $0x10] sm:$0xff]
        %v4376 = vld [vmem:[#allocation2 + $0x20] sm:$0xff]
        %v4377 = vld [vmem:[#allocation2 + $0x30] sm:$0xff]
        %v4378 = vld [vmem:[#allocation2 + $0x40] sm:$0xff]
        %v4379 = vld [vmem:[#allocation2 + $0x50] sm:$0xff]
        %v4380 = vld [vmem:[#allocation2 + $0x60] sm:$0xff]
        %v4381 = vld [vmem:[#allocation2 + $0x70] sm:$0xff]
        %s4382 = scalar_lea.vmem [#allocation3], 1080
        %v4383 = vld [vmem:[%s4382] sm:$0xff]
        %v4384 = vld [vmem:[%s4382 + $0x8] sm:$0xff]
        %v4385 = vld [vmem:[%s4382 + $0x10] sm:$0xff]
        %v4386 = vld [vmem:[%s4382 + $0x18] sm:$0xff]
        %v4387 = vld [vmem:[%s4382 + $0x20] sm:$0xff]
        %v4388 = vld [vmem:[#allocation2 + $0x1] sm:$0xff]
        %v4389 = vld [vmem:[#allocation2 + $0x11] sm:$0xff]
        %v4390 = vld [vmem:[#allocation2 + $0x21] sm:$0xff]
        %v4391 = vld [vmem:[#allocation2 + $0x31] sm:$0xff]
        %v4392 = vld [vmem:[#allocation2 + $0x41] sm:$0xff]
        %v4393 = vld [vmem:[#allocation2 + $0x51] sm:$0xff]
        %v4394 = vld [vmem:[#allocation2 + $0x61] sm:$0xff]
        %v4395 = vld [vmem:[#allocation2 + $0x71] sm:$0xff]
        %s4396 = scalar_lea.vmem [#allocation3], 1120
        %v4397 = vld [vmem:[%s4396] sm:$0xff]
        %v4398 = vld [vmem:[%s4396 + $0x8] sm:$0xff]
        %v4399 = vld [vmem:[%s4396 + $0x10] sm:$0xff]
        %v4400 = vld [vmem:[%s4396 + $0x18] sm:$0xff]
        %v4401 = vld [vmem:[%s4396 + $0x20] sm:$0xff]
        %v4403 = vsel %vm231, %v4388, 0
        %v4406 = vsel %vm231, %v4389, 0
        %v4409 = vsel %vm231, %v4390, 0
        %v4412 = vsel %vm231, %v4391, 0
        %v4415 = vsel %vm231, %v4392, 0
        %v4418 = vsel %vm231, %v4393, 0
        %v4421 = vsel %vm231, %v4394, 0
        %v4424 = vsel %vm231, %v4395, 0
        %4426 = vmatprep.subr.mxu0 0.0
        %4427 = vmatpush1.msra.mxu0 %v4397
        %4428 = vmatprep.subr.mxu0 0.0
        %4429 = vmatpush1.msra.mxu0 %v4398
        %4430 = vmatprep.subr.mxu0 0.0
        %4431 = vmatpush1.msra.mxu0 %v4399
        %4432 = vmatprep.subr.mxu0 0.0
        %4433 = vmatpush1.msra.mxu0 %v4400
        %4434 = vmatprep.subr.mxu0 0.0
        %4435 = vmatpush1.msra.mxu0 %v4401
        %4436 = vmatprep.subr.mxu0 0.0
        %4437 = vmatpush1.msra.mxu0 0.0
        %4438 = vmatprep.subr.mxu0 0.0
        %4439 = vmatpush1.msra.mxu0 0.0
        %4440 = vmatprep.subr.mxu0 0.0
        %4441 = vmatpush1.msra.mxu0 0.0
        %4442 = vmatprep.subr.mxu0 0.0
        %4443 = vmatpush1.msra.mxu0 0.0
        %4444 = vmatprep.subr.mxu0 0.0
        %4445 = vmatpush1.msra.mxu0 0.0
        %4446 = vmatprep.subr.mxu0 0.0
        %4447 = vmatpush1.msra.mxu0 0.0
        %4448 = vmatprep.subr.mxu0 0.0
        %4449 = vmatpush1.msra.mxu0 0.0
        %4450 = vmatprep.subr.mxu0 0.0
        %4451 = vmatpush1.msra.mxu0 0.0
        %4452 = vmatprep.subr.mxu0 0.0
        %4453 = vmatpush1.msra.mxu0 0.0
        %4454 = vmatprep.subr.mxu0 0.0
        %4455 = vmatpush1.msra.mxu0 0.0
        %4456 = vmatprep.subr.mxu0 0.0
        %4457 = vmatpush1.msra.mxu0 0.0
        %4458 = vmatprep.subr.mxu0 0.0
        %4459 = vmatpush1.msra.mxu0 0.0
        %4460 = vmatprep.subr.mxu0 0.0
        %4461 = vmatpush1.msra.mxu0 0.0
        %4462 = vmatprep.subr.mxu0 0.0
        %4463 = vmatpush1.msra.mxu0 0.0
        %4464 = vmatprep.subr.mxu0 0.0
        %4465 = vmatpush1.msra.mxu0 0.0
        %4466 = vmatprep.subr.mxu0 0.0
        %4467 = vmatpush1.msra.mxu0 0.0
        %4468 = vmatprep.subr.mxu0 0.0
        %4469 = vmatpush1.msra.mxu0 0.0
        %4470 = vmatprep.subr.mxu0 0.0
        %4471 = vmatpush1.msra.mxu0 0.0
        %4472 = vmatprep.subr.mxu0 0.0
        %4473 = vmatpush1.msra.mxu0 0.0
        %4474 = vmatprep.subr.mxu0 0.0
        %4475 = vmatpush1.msra.mxu0 0.0
        %4476 = vmatprep.subr.mxu0 0.0
        %4477 = vmatpush1.msra.mxu0 0.0
        %4478 = vmatprep.subr.mxu0 0.0
        %4479 = vmatpush1.msra.mxu0 0.0
        %4480 = vmatprep.subr.mxu0 0.0
        %4481 = vmatpush1.msra.mxu0 0.0
        %4482 = vmatprep.subr.mxu0 0.0
        %4483 = vmatpush1.msra.mxu0 0.0
        %4484 = vmatprep.subr.mxu0 0.0
        %4485 = vmatpush1.msra.mxu0 0.0
        %4486 = vmatprep.subr.mxu0 0.0
        %4487 = vmatpush1.msra.mxu0 0.0
        %4488 = vmatprep.subr.mxu0 0.0
        %4489 = vmatpush1.msra.mxu0 0.0
        %4490 = vmatprep.mubr.f32.mxu0 0.0
        %4491 = vmatmul.mubr.f32.gmra.mrb[0].mxu0 %v4403
        %v4492 = vpop.f32.mrb[0].mxu0
        %v4493 = vadd.f32 0.0, %v4492
        %v4494 = vpop.f32.mrb[0].mxu0
        %4495 = vmatprep.mubr.f32.mxu0 0.0
        %4496 = vmatmul.mubr.f32.gmra.mrb[0].mxu0 %v4406
        %v4497 = vpop.f32.mrb[0].mxu0
        %v4498 = vadd.f32 0.0, %v4497
        %v4499 = vpop.f32.mrb[0].mxu0
        %4500 = vmatprep.mubr.f32.mxu0 0.0
        %4501 = vmatmul.mubr.f32.gmra.mrb[0].mxu0 %v4409
        %v4502 = vpop.f32.mrb[0].mxu0
        %v4503 = vadd.f32 0.0, %v4502
        %v4504 = vpop.f32.mrb[0].mxu0
        %4505 = vmatprep.mubr.f32.mxu0 0.0
        %4506 = vmatmul.mubr.f32.gmra.mrb[0].mxu0 %v4412
        %v4507 = vpop.f32.mrb[0].mxu0
        %v4508 = vadd.f32 0.0, %v4507
        %v4509 = vpop.f32.mrb[0].mxu0
        %4510 = vmatprep.mubr.f32.mxu0 0.0
        %4511 = vmatmul.mubr.f32.gmra.mrb[0].mxu0 %v4415
        %v4512 = vpop.f32.mrb[0].mxu0
        %v4513 = vadd.f32 0.0, %v4512
        %v4514 = vpop.f32.mrb[0].mxu0
        %4515 = vmatprep.mubr.f32.mxu0 0.0
        %4516 = vmatmul.mubr.f32.gmra.mrb[0].mxu0 %v4418
        %v4517 = vpop.f32.mrb[0].mxu0
        %v4518 = vadd.f32 0.0, %v4517
        %v4519 = vpop.f32.mrb[0].mxu0
        %4520 = vmatprep.mubr.f32.mxu0 0.0
        %4521 = vmatmul.mubr.f32.gmra.mrb[0].mxu0 %v4421
        %v4522 = vpop.f32.mrb[0].mxu0
        %v4523 = vadd.f32 0.0, %v4522
        %v4524 = vpop.f32.mrb[0].mxu0
        %4525 = vmatprep.mubr.f32.mxu0 0.0
        %4526 = vmatmul.mubr.f32.gmra.mrb[0].mxu0 %v4424
        %v4527 = vpop.f32.mrb[0].mxu0
        %v4528 = vadd.f32 0.0, %v4527
        %v4529 = vpop.f32.mrb[0].mxu0
        %4530 = vdwg.mxu0
        %v4532 = vsel %vm231, %v4374, 0
        %v4535 = vsel %vm231, %v4375, 0
        %v4538 = vsel %vm231, %v4376, 0
        %v4541 = vsel %vm231, %v4377, 0
        %v4544 = vsel %vm231, %v4378, 0
        %v4547 = vsel %vm231, %v4379, 0
        %v4550 = vsel %vm231, %v4380, 0
        %v4553 = vsel %vm231, %v4381, 0
        %4555 = vmatprep.subr.mxu0 0.0
        %4556 = vmatpush1.msra.mxu0 %v4383
        %4557 = vmatprep.subr.mxu0 0.0
        %4558 = vmatpush1.msra.mxu0 %v4384
        %4559 = vmatprep.subr.mxu0 0.0
        %4560 = vmatpush1.msra.mxu0 %v4385
        %4561 = vmatprep.subr.mxu0 0.0
        %4562 = vmatpush1.msra.mxu0 %v4386
        %4563 = vmatprep.subr.mxu0 0.0
        %4564 = vmatpush1.msra.mxu0 %v4387
        %4565 = vmatprep.subr.mxu0 0.0
        %4566 = vmatpush1.msra.mxu0 0.0
        %4567 = vmatprep.subr.mxu0 0.0
        %4568 = vmatpush1.msra.mxu0 0.0
        %4569 = vmatprep.subr.mxu0 0.0
        %4570 = vmatpush1.msra.mxu0 0.0
        %4571 = vmatprep.subr.mxu0 0.0
        %4572 = vmatpush1.msra.mxu0 0.0
        %4573 = vmatprep.subr.mxu0 0.0
        %4574 = vmatpush1.msra.mxu0 0.0
        %4575 = vmatprep.subr.mxu0 0.0
        %4576 = vmatpush1.msra.mxu0 0.0
        %4577 = vmatprep.subr.mxu0 0.0
        %4578 = vmatpush1.msra.mxu0 0.0
        %4579 = vmatprep.subr.mxu0 0.0
        %4580 = vmatpush1.msra.mxu0 0.0
        %4581 = vmatprep.subr.mxu0 0.0
        %4582 = vmatpush1.msra.mxu0 0.0
        %4583 = vmatprep.subr.mxu0 0.0
        %4584 = vmatpush1.msra.mxu0 0.0
        %4585 = vmatprep.subr.mxu0 0.0
        %4586 = vmatpush1.msra.mxu0 0.0
        %4587 = vmatprep.subr.mxu0 0.0
        %4588 = vmatpush1.msra.mxu0 0.0
        %4589 = vmatprep.subr.mxu0 0.0
        %4590 = vmatpush1.msra.mxu0 0.0
        %4591 = vmatprep.subr.mxu0 0.0
        %4592 = vmatpush1.msra.mxu0 0.0
        %4593 = vmatprep.subr.mxu0 0.0
        %4594 = vmatpush1.msra.mxu0 0.0
        %4595 = vmatprep.subr.mxu0 0.0
        %4596 = vmatpush1.msra.mxu0 0.0
        %4597 = vmatprep.subr.mxu0 0.0
        %4598 = vmatpush1.msra.mxu0 0.0
        %4599 = vmatprep.subr.mxu0 0.0
        %4600 = vmatpush1.msra.mxu0 0.0
        %4601 = vmatprep.subr.mxu0 0.0
        %4602 = vmatpush1.msra.mxu0 0.0
        %4603 = vmatprep.subr.mxu0 0.0
        %4604 = vmatpush1.msra.mxu0 0.0
        %4605 = vmatprep.subr.mxu0 0.0
        %4606 = vmatpush1.msra.mxu0 0.0
        %4607 = vmatprep.subr.mxu0 0.0
        %4608 = vmatpush1.msra.mxu0 0.0
        %4609 = vmatprep.subr.mxu0 0.0
        %4610 = vmatpush1.msra.mxu0 0.0
        %4611 = vmatprep.subr.mxu0 0.0
        %4612 = vmatpush1.msra.mxu0 0.0
        %4613 = vmatprep.subr.mxu0 0.0
        %4614 = vmatpush1.msra.mxu0 0.0
        %4615 = vmatprep.subr.mxu0 0.0
        %4616 = vmatpush1.msra.mxu0 0.0
        %4617 = vmatprep.subr.mxu0 0.0
        %4618 = vmatpush1.msra.mxu0 0.0
        %4619 = vmatprep.mubr.f32.mxu0 0.0
        %4620 = vmatmul.mubr.f32.gmra.mrb[0].mxu0 %v4532
        %v4621 = vpop.f32.mrb[0].mxu0
        %v4622 = vadd.f32 %v4493, %v4621
        %v4623 = vpop.f32.mrb[0].mxu0
        %4624 = vmatprep.mubr.f32.mxu0 0.0
        %4625 = vmatmul.mubr.f32.gmra.mrb[0].mxu0 %v4535
        %v4626 = vpop.f32.mrb[0].mxu0
        %v4627 = vadd.f32 %v4498, %v4626
        %v4628 = vpop.f32.mrb[0].mxu0
        %4629 = vmatprep.mubr.f32.mxu0 0.0
        %4630 = vmatmul.mubr.f32.gmra.mrb[0].mxu0 %v4538
        %v4631 = vpop.f32.mrb[0].mxu0
        %v4632 = vadd.f32 %v4503, %v4631
        %v4633 = vpop.f32.mrb[0].mxu0
        %4634 = vmatprep.mubr.f32.mxu0 0.0
        %4635 = vmatmul.mubr.f32.gmra.mrb[0].mxu0 %v4541
        %v4636 = vpop.f32.mrb[0].mxu0
        %v4637 = vadd.f32 %v4508, %v4636
        %v4638 = vpop.f32.mrb[0].mxu0
        %4639 = vmatprep.mubr.f32.mxu0 0.0
        %4640 = vmatmul.mubr.f32.gmra.mrb[0].mxu0 %v4544
        %v4641 = vpop.f32.mrb[0].mxu0
        %v4642 = vadd.f32 %v4513, %v4641
        %v4643 = vpop.f32.mrb[0].mxu0
        %4644 = vmatprep.mubr.f32.mxu0 0.0
        %4645 = vmatmul.mubr.f32.gmra.mrb[0].mxu0 %v4547
        %v4646 = vpop.f32.mrb[0].mxu0
        %v4647 = vadd.f32 %v4518, %v4646
        %v4648 = vpop.f32.mrb[0].mxu0
        %4649 = vmatprep.mubr.f32.mxu0 0.0
        %4650 = vmatmul.mubr.f32.gmra.mrb[0].mxu0 %v4550
        %v4651 = vpop.f32.mrb[0].mxu0
        %v4652 = vadd.f32 %v4523, %v4651
        %v4653 = vpop.f32.mrb[0].mxu0
        %4654 = vmatprep.mubr.f32.mxu0 0.0
        %4655 = vmatmul.mubr.f32.gmra.mrb[0].mxu0 %v4553
        %v4656 = vpop.f32.mrb[0].mxu0
        %v4657 = vadd.f32 %v4528, %v4656
        %v4658 = vpop.f32.mrb[0].mxu0
        %4659 = vdwg.mxu0
        %v4660 = vld [vmem:[#allocation2 + $0x2] sm:$0xff]
        %v4661 = vld [vmem:[#allocation2 + $0x12] sm:$0xff]
        %v4662 = vld [vmem:[#allocation2 + $0x22] sm:$0xff]
        %v4663 = vld [vmem:[#allocation2 + $0x32] sm:$0xff]
        %v4664 = vld [vmem:[#allocation2 + $0x42] sm:$0xff]
        %v4665 = vld [vmem:[#allocation2 + $0x52] sm:$0xff]
        %v4666 = vld [vmem:[#allocation2 + $0x62] sm:$0xff]
        %v4667 = vld [vmem:[#allocation2 + $0x72] sm:$0xff]
        %s4668 = scalar_lea.vmem [#allocation3], 1160
        %v4669 = vld [vmem:[%s4668] sm:$0xff]
        %v4670 = vld [vmem:[%s4668 + $0x8] sm:$0xff]
        %v4671 = vld [vmem:[%s4668 + $0x10] sm:$0xff]
        %v4672 = vld [vmem:[%s4668 + $0x18] sm:$0xff]
        %v4673 = vld [vmem:[%s4668 + $0x20] sm:$0xff]
        %v4675 = vsel %vm231, %v4660, 0
        %v4678 = vsel %vm231, %v4661, 0
        %v4681 = vsel %vm231, %v4662, 0
        %v4684 = vsel %vm231, %v4663, 0
        %v4687 = vsel %vm231, %v4664, 0
        %v4690 = vsel %vm231, %v4665, 0
        %v4693 = vsel %vm231, %v4666, 0
        %v4696 = vsel %vm231, %v4667, 0
        %4698 = vmatprep.subr.mxu0 0.0
        %4699 = vmatpush1.msra.mxu0 %v4669
        %4700 = vmatprep.subr.mxu0 0.0
        %4701 = vmatpush1.msra.mxu0 %v4670
        %4702 = vmatprep.subr.mxu0 0.0
        %4703 = vmatpush1.msra.mxu0 %v4671
        %4704 = vmatprep.subr.mxu0 0.0
        %4705 = vmatpush1.msra.mxu0 %v4672
        %4706 = vmatprep.subr.mxu0 0.0
        %4707 = vmatpush1.msra.mxu0 %v4673
        %4708 = vmatprep.subr.mxu0 0.0
        %4709 = vmatpush1.msra.mxu0 0.0
        %4710 = vmatprep.subr.mxu0 0.0
        %4711 = vmatpush1.msra.mxu0 0.0
        %4712 = vmatprep.subr.mxu0 0.0
        %4713 = vmatpush1.msra.mxu0 0.0
        %4714 = vmatprep.subr.mxu0 0.0
        %4715 = vmatpush1.msra.mxu0 0.0
        %4716 = vmatprep.subr.mxu0 0.0
        %4717 = vmatpush1.msra.mxu0 0.0
        %4718 = vmatprep.subr.mxu0 0.0
        %4719 = vmatpush1.msra.mxu0 0.0
        %4720 = vmatprep.subr.mxu0 0.0
        %4721 = vmatpush1.msra.mxu0 0.0
        %4722 = vmatprep.subr.mxu0 0.0
        %4723 = vmatpush1.msra.mxu0 0.0
        %4724 = vmatprep.subr.mxu0 0.0
        %4725 = vmatpush1.msra.mxu0 0.0
        %4726 = vmatprep.subr.mxu0 0.0
        %4727 = vmatpush1.msra.mxu0 0.0
        %4728 = vmatprep.subr.mxu0 0.0
        %4729 = vmatpush1.msra.mxu0 0.0
        %4730 = vmatprep.subr.mxu0 0.0
        %4731 = vmatpush1.msra.mxu0 0.0
        %4732 = vmatprep.subr.mxu0 0.0
        %4733 = vmatpush1.msra.mxu0 0.0
        %4734 = vmatprep.subr.mxu0 0.0
        %4735 = vmatpush1.msra.mxu0 0.0
        %4736 = vmatprep.subr.mxu0 0.0
        %4737 = vmatpush1.msra.mxu0 0.0
        %4738 = vmatprep.subr.mxu0 0.0
        %4739 = vmatpush1.msra.mxu0 0.0
        %4740 = vmatprep.subr.mxu0 0.0
        %4741 = vmatpush1.msra.mxu0 0.0
        %4742 = vmatprep.subr.mxu0 0.0
        %4743 = vmatpush1.msra.mxu0 0.0
        %4744 = vmatprep.subr.mxu0 0.0
        %4745 = vmatpush1.msra.mxu0 0.0
        %4746 = vmatprep.subr.mxu0 0.0
        %4747 = vmatpush1.msra.mxu0 0.0
        %4748 = vmatprep.subr.mxu0 0.0
        %4749 = vmatpush1.msra.mxu0 0.0
        %4750 = vmatprep.subr.mxu0 0.0
        %4751 = vmatpush1.msra.mxu0 0.0
        %4752 = vmatprep.subr.mxu0 0.0
        %4753 = vmatpush1.msra.mxu0 0.0
        %4754 = vmatprep.subr.mxu0 0.0
        %4755 = vmatpush1.msra.mxu0 0.0
        %4756 = vmatprep.subr.mxu0 0.0
        %4757 = vmatpush1.msra.mxu0 0.0
        %4758 = vmatprep.subr.mxu0 0.0
        %4759 = vmatpush1.msra.mxu0 0.0
        %4760 = vmatprep.subr.mxu0 0.0
        %4761 = vmatpush1.msra.mxu0 0.0
        %4762 = vmatprep.mubr.f32.mxu0 0.0
        %4763 = vmatmul.mubr.f32.gmra.mrb[0].mxu0 %v4675
        %v4764 = vpop.f32.mrb[0].mxu0
        %v4765 = vadd.f32 0.0, %v4764
        %v4766 = vpop.f32.mrb[0].mxu0
        %4767 = vmatprep.mubr.f32.mxu0 0.0
        %4768 = vmatmul.mubr.f32.gmra.mrb[0].mxu0 %v4678
        %v4769 = vpop.f32.mrb[0].mxu0
        %v4770 = vadd.f32 0.0, %v4769
        %v4771 = vpop.f32.mrb[0].mxu0
        %4772 = vmatprep.mubr.f32.mxu0 0.0
        %4773 = vmatmul.mubr.f32.gmra.mrb[0].mxu0 %v4681
        %v4774 = vpop.f32.mrb[0].mxu0
        %v4775 = vadd.f32 0.0, %v4774
        %v4776 = vpop.f32.mrb[0].mxu0
        %4777 = vmatprep.mubr.f32.mxu0 0.0
        %4778 = vmatmul.mubr.f32.gmra.mrb[0].mxu0 %v4684
        %v4779 = vpop.f32.mrb[0].mxu0
        %v4780 = vadd.f32 0.0, %v4779
        %v4781 = vpop.f32.mrb[0].mxu0
        %4782 = vmatprep.mubr.f32.mxu0 0.0
        %4783 = vmatmul.mubr.f32.gmra.mrb[0].mxu0 %v4687
        %v4784 = vpop.f32.mrb[0].mxu0
        %v4785 = vadd.f32 0.0, %v4784
        %v4786 = vpop.f32.mrb[0].mxu0
        %4787 = vmatprep.mubr.f32.mxu0 0.0
        %4788 = vmatmul.mubr.f32.gmra.mrb[0].mxu0 %v4690
        %v4789 = vpop.f32.mrb[0].mxu0
        %v4790 = vadd.f32 0.0, %v4789
        %v4791 = vpop.f32.mrb[0].mxu0
        %4792 = vmatprep.mubr.f32.mxu0 0.0
        %4793 = vmatmul.mubr.f32.gmra.mrb[0].mxu0 %v4693
        %v4794 = vpop.f32.mrb[0].mxu0
        %v4795 = vadd.f32 0.0, %v4794
        %v4796 = vpop.f32.mrb[0].mxu0
        %4797 = vmatprep.mubr.f32.mxu0 0.0
        %4798 = vmatmul.mubr.f32.gmra.mrb[0].mxu0 %v4696
        %v4799 = vpop.f32.mrb[0].mxu0
        %v4800 = vadd.f32 0.0, %v4799
        %v4801 = vpop.f32.mrb[0].mxu0
        %4802 = vdwg.mxu0
        %v4803 = vadd.f32 %v4622, %v4765
        %v4804 = vadd.f32 %v4627, %v4770
        %v4805 = vadd.f32 %v4632, %v4775
        %v4806 = vadd.f32 %v4637, %v4780
        %v4807 = vadd.f32 %v4642, %v4785
        %v4808 = vadd.f32 %v4647, %v4790
        %v4809 = vadd.f32 %v4652, %v4795
        %v4810 = vadd.f32 %v4657, %v4800
        %v4811 = vld [vmem:[%s238] sm:$0xff]
        %v4812 = vld [vmem:[%s238 + $0x10] sm:$0xff]
        %v4813 = vld [vmem:[%s238 + $0x20] sm:$0xff]
        %v4814 = vld [vmem:[%s238 + $0x30] sm:$0xff]
        %v4815 = vld [vmem:[%s238 + $0x40] sm:$0xff]
        %v4816 = vld [vmem:[%s238 + $0x50] sm:$0xff]
        %v4817 = vld [vmem:[%s238 + $0x60] sm:$0xff]
        %v4818 = vld [vmem:[%s238 + $0x70] sm:$0xff]
        %s4819 = scalar_lea.vmem [#allocation3], 1200
        %v4820 = vld [vmem:[%s4819] sm:$0xff]
        %v4821 = vld [vmem:[%s4819 + $0x8] sm:$0xff]
        %v4822 = vld [vmem:[%s4819 + $0x10] sm:$0xff]
        %v4823 = vld [vmem:[%s4819 + $0x18] sm:$0xff]
        %v4824 = vld [vmem:[%s4819 + $0x20] sm:$0xff]
        %v4826 = vsel %vm231, %v4811, 0
        %v4829 = vsel %vm231, %v4812, 0
        %v4832 = vsel %vm231, %v4813, 0
        %v4835 = vsel %vm231, %v4814, 0
        %v4838 = vsel %vm231, %v4815, 0
        %v4841 = vsel %vm231, %v4816, 0
        %v4844 = vsel %vm231, %v4817, 0
        %v4847 = vsel %vm231, %v4818, 0
        %4849 = vmatprep.subr.mxu0 0.0
        %4850 = vmatpush1.msra.mxu0 %v4820
        %4851 = vmatprep.subr.mxu0 0.0
        %4852 = vmatpush1.msra.mxu0 %v4821
        %4853 = vmatprep.subr.mxu0 0.0
        %4854 = vmatpush1.msra.mxu0 %v4822
        %4855 = vmatprep.subr.mxu0 0.0
        %4856 = vmatpush1.msra.mxu0 %v4823
        %4857 = vmatprep.subr.mxu0 0.0
        %4858 = vmatpush1.msra.mxu0 %v4824
        %4859 = vmatprep.subr.mxu0 0.0
        %4860 = vmatpush1.msra.mxu0 0.0
        %4861 = vmatprep.subr.mxu0 0.0
        %4862 = vmatpush1.msra.mxu0 0.0
        %4863 = vmatprep.subr.mxu0 0.0
        %4864 = vmatpush1.msra.mxu0 0.0
        %4865 = vmatprep.subr.mxu0 0.0
        %4866 = vmatpush1.msra.mxu0 0.0
        %4867 = vmatprep.subr.mxu0 0.0
        %4868 = vmatpush1.msra.mxu0 0.0
        %4869 = vmatprep.subr.mxu0 0.0
        %4870 = vmatpush1.msra.mxu0 0.0
        %4871 = vmatprep.subr.mxu0 0.0
        %4872 = vmatpush1.msra.mxu0 0.0
        %4873 = vmatprep.subr.mxu0 0.0
        %4874 = vmatpush1.msra.mxu0 0.0
        %4875 = vmatprep.subr.mxu0 0.0
        %4876 = vmatpush1.msra.mxu0 0.0
        %4877 = vmatprep.subr.mxu0 0.0
        %4878 = vmatpush1.msra.mxu0 0.0
        %4879 = vmatprep.subr.mxu0 0.0
        %4880 = vmatpush1.msra.mxu0 0.0
        %4881 = vmatprep.subr.mxu0 0.0
        %4882 = vmatpush1.msra.mxu0 0.0
        %4883 = vmatprep.subr.mxu0 0.0
        %4884 = vmatpush1.msra.mxu0 0.0
        %4885 = vmatprep.subr.mxu0 0.0
        %4886 = vmatpush1.msra.mxu0 0.0
        %4887 = vmatprep.subr.mxu0 0.0
        %4888 = vmatpush1.msra.mxu0 0.0
        %4889 = vmatprep.subr.mxu0 0.0
        %4890 = vmatpush1.msra.mxu0 0.0
        %4891 = vmatprep.subr.mxu0 0.0
        %4892 = vmatpush1.msra.mxu0 0.0
        %4893 = vmatprep.subr.mxu0 0.0
        %4894 = vmatpush1.msra.mxu0 0.0
        %4895 = vmatprep.subr.mxu0 0.0
        %4896 = vmatpush1.msra.mxu0 0.0
        %4897 = vmatprep.subr.mxu0 0.0
        %4898 = vmatpush1.msra.mxu0 0.0
        %4899 = vmatprep.subr.mxu0 0.0
        %4900 = vmatpush1.msra.mxu0 0.0
        %4901 = vmatprep.subr.mxu0 0.0
        %4902 = vmatpush1.msra.mxu0 0.0
        %4903 = vmatprep.subr.mxu0 0.0
        %4904 = vmatpush1.msra.mxu0 0.0
        %4905 = vmatprep.subr.mxu0 0.0
        %4906 = vmatpush1.msra.mxu0 0.0
        %4907 = vmatprep.subr.mxu0 0.0
        %4908 = vmatpush1.msra.mxu0 0.0
        %4909 = vmatprep.subr.mxu0 0.0
        %4910 = vmatpush1.msra.mxu0 0.0
        %4911 = vmatprep.subr.mxu0 0.0
        %4912 = vmatpush1.msra.mxu0 0.0
        %4913 = vmatprep.mubr.f32.mxu0 0.0
        %4914 = vmatmul.mubr.f32.gmra.mrb[0].mxu0 %v4826
        %v4915 = vpop.f32.mrb[0].mxu0
        %v4916 = vadd.f32 0.0, %v4915
        %v4917 = vpop.f32.mrb[0].mxu0
        %4918 = vmatprep.mubr.f32.mxu0 0.0
        %4919 = vmatmul.mubr.f32.gmra.mrb[0].mxu0 %v4829
        %v4920 = vpop.f32.mrb[0].mxu0
        %v4921 = vadd.f32 0.0, %v4920
        %v4922 = vpop.f32.mrb[0].mxu0
        %4923 = vmatprep.mubr.f32.mxu0 0.0
        %4924 = vmatmul.mubr.f32.gmra.mrb[0].mxu0 %v4832
        %v4925 = vpop.f32.mrb[0].mxu0
        %v4926 = vadd.f32 0.0, %v4925
        %v4927 = vpop.f32.mrb[0].mxu0
        %4928 = vmatprep.mubr.f32.mxu0 0.0
        %4929 = vmatmul.mubr.f32.gmra.mrb[0].mxu0 %v4835
        %v4930 = vpop.f32.mrb[0].mxu0
        %v4931 = vadd.f32 0.0, %v4930
        %v4932 = vpop.f32.mrb[0].mxu0
        %4933 = vmatprep.mubr.f32.mxu0 0.0
        %4934 = vmatmul.mubr.f32.gmra.mrb[0].mxu0 %v4838
        %v4935 = vpop.f32.mrb[0].mxu0
        %v4936 = vadd.f32 0.0, %v4935
        %v4937 = vpop.f32.mrb[0].mxu0
        %4938 = vmatprep.mubr.f32.mxu0 0.0
        %4939 = vmatmul.mubr.f32.gmra.mrb[0].mxu0 %v4841
        %v4940 = vpop.f32.mrb[0].mxu0
        %v4941 = vadd.f32 0.0, %v4940
        %v4942 = vpop.f32.mrb[0].mxu0
        %4943 = vmatprep.mubr.f32.mxu0 0.0
        %4944 = vmatmul.mubr.f32.gmra.mrb[0].mxu0 %v4844
        %v4945 = vpop.f32.mrb[0].mxu0
        %v4946 = vadd.f32 0.0, %v4945
        %v4947 = vpop.f32.mrb[0].mxu0
        %4948 = vmatprep.mubr.f32.mxu0 0.0
        %4949 = vmatmul.mubr.f32.gmra.mrb[0].mxu0 %v4847
        %v4950 = vpop.f32.mrb[0].mxu0
        %v4951 = vadd.f32 0.0, %v4950
        %v4952 = vpop.f32.mrb[0].mxu0
        %4953 = vdwg.mxu0
        %v4954 = vadd.f32 %v4803, %v4916
        %v4955 = vadd.f32 %v4804, %v4921
        %v4956 = vadd.f32 %v4805, %v4926
        %v4957 = vadd.f32 %v4806, %v4931
        %v4958 = vadd.f32 %v4807, %v4936
        %v4959 = vadd.f32 %v4808, %v4941
        %v4960 = vadd.f32 %v4809, %v4946
        %v4961 = vadd.f32 %v4810, %v4951
        %v4962 = vld [vmem:[%s238 + $0x1] sm:$0xff]
        %v4963 = vld [vmem:[%s238 + $0x11] sm:$0xff]
        %v4964 = vld [vmem:[%s238 + $0x21] sm:$0xff]
        %v4965 = vld [vmem:[%s238 + $0x31] sm:$0xff]
        %v4966 = vld [vmem:[%s238 + $0x41] sm:$0xff]
        %v4967 = vld [vmem:[%s238 + $0x51] sm:$0xff]
        %v4968 = vld [vmem:[%s238 + $0x61] sm:$0xff]
        %v4969 = vld [vmem:[%s238 + $0x71] sm:$0xff]
        %s4970 = scalar_lea.vmem [#allocation3], 1240
        %v4971 = vld [vmem:[%s4970] sm:$0xff]
        %v4972 = vld [vmem:[%s4970 + $0x8] sm:$0xff]
        %v4973 = vld [vmem:[%s4970 + $0x10] sm:$0xff]
        %v4974 = vld [vmem:[%s4970 + $0x18] sm:$0xff]
        %v4975 = vld [vmem:[%s4970 + $0x20] sm:$0xff]
        %v4977 = vsel %vm231, %v4962, 0
        %v4980 = vsel %vm231, %v4963, 0
        %v4983 = vsel %vm231, %v4964, 0
        %v4986 = vsel %vm231, %v4965, 0
        %v4989 = vsel %vm231, %v4966, 0
        %v4992 = vsel %vm231, %v4967, 0
        %v4995 = vsel %vm231, %v4968, 0
        %v4998 = vsel %vm231, %v4969, 0
        %5000 = vmatprep.subr.mxu0 0.0
        %5001 = vmatpush1.msra.mxu0 %v4971
        %5002 = vmatprep.subr.mxu0 0.0
        %5003 = vmatpush1.msra.mxu0 %v4972
        %5004 = vmatprep.subr.mxu0 0.0
        %5005 = vmatpush1.msra.mxu0 %v4973
        %5006 = vmatprep.subr.mxu0 0.0
        %5007 = vmatpush1.msra.mxu0 %v4974
        %5008 = vmatprep.subr.mxu0 0.0
        %5009 = vmatpush1.msra.mxu0 %v4975
        %5010 = vmatprep.subr.mxu0 0.0
        %5011 = vmatpush1.msra.mxu0 0.0
        %5012 = vmatprep.subr.mxu0 0.0
        %5013 = vmatpush1.msra.mxu0 0.0
        %5014 = vmatprep.subr.mxu0 0.0
        %5015 = vmatpush1.msra.mxu0 0.0
        %5016 = vmatprep.subr.mxu0 0.0
        %5017 = vmatpush1.msra.mxu0 0.0
        %5018 = vmatprep.subr.mxu0 0.0
        %5019 = vmatpush1.msra.mxu0 0.0
        %5020 = vmatprep.subr.mxu0 0.0
        %5021 = vmatpush1.msra.mxu0 0.0
        %5022 = vmatprep.subr.mxu0 0.0
        %5023 = vmatpush1.msra.mxu0 0.0
        %5024 = vmatprep.subr.mxu0 0.0
        %5025 = vmatpush1.msra.mxu0 0.0
        %5026 = vmatprep.subr.mxu0 0.0
        %5027 = vmatpush1.msra.mxu0 0.0
        %5028 = vmatprep.subr.mxu0 0.0
        %5029 = vmatpush1.msra.mxu0 0.0
        %5030 = vmatprep.subr.mxu0 0.0
        %5031 = vmatpush1.msra.mxu0 0.0
        %5032 = vmatprep.subr.mxu0 0.0
        %5033 = vmatpush1.msra.mxu0 0.0
        %5034 = vmatprep.subr.mxu0 0.0
        %5035 = vmatpush1.msra.mxu0 0.0
        %5036 = vmatprep.subr.mxu0 0.0
        %5037 = vmatpush1.msra.mxu0 0.0
        %5038 = vmatprep.subr.mxu0 0.0
        %5039 = vmatpush1.msra.mxu0 0.0
        %5040 = vmatprep.subr.mxu0 0.0
        %5041 = vmatpush1.msra.mxu0 0.0
        %5042 = vmatprep.subr.mxu0 0.0
        %5043 = vmatpush1.msra.mxu0 0.0
        %5044 = vmatprep.subr.mxu0 0.0
        %5045 = vmatpush1.msra.mxu0 0.0
        %5046 = vmatprep.subr.mxu0 0.0
        %5047 = vmatpush1.msra.mxu0 0.0
        %5048 = vmatprep.subr.mxu0 0.0
        %5049 = vmatpush1.msra.mxu0 0.0
        %5050 = vmatprep.subr.mxu0 0.0
        %5051 = vmatpush1.msra.mxu0 0.0
        %5052 = vmatprep.subr.mxu0 0.0
        %5053 = vmatpush1.msra.mxu0 0.0
        %5054 = vmatprep.subr.mxu0 0.0
        %5055 = vmatpush1.msra.mxu0 0.0
        %5056 = vmatprep.subr.mxu0 0.0
        %5057 = vmatpush1.msra.mxu0 0.0
        %5058 = vmatprep.subr.mxu0 0.0
        %5059 = vmatpush1.msra.mxu0 0.0
        %5060 = vmatprep.subr.mxu0 0.0
        %5061 = vmatpush1.msra.mxu0 0.0
        %5062 = vmatprep.subr.mxu0 0.0
        %5063 = vmatpush1.msra.mxu0 0.0
        %5064 = vmatprep.mubr.f32.mxu0 0.0
        %5065 = vmatmul.mubr.f32.gmra.mrb[0].mxu0 %v4977
        %v5066 = vpop.f32.mrb[0].mxu0
        %v5067 = vadd.f32 0.0, %v5066
        %v5068 = vpop.f32.mrb[0].mxu0
        %5069 = vmatprep.mubr.f32.mxu0 0.0
        %5070 = vmatmul.mubr.f32.gmra.mrb[0].mxu0 %v4980
        %v5071 = vpop.f32.mrb[0].mxu0
        %v5072 = vadd.f32 0.0, %v5071
        %v5073 = vpop.f32.mrb[0].mxu0
        %5074 = vmatprep.mubr.f32.mxu0 0.0
        %5075 = vmatmul.mubr.f32.gmra.mrb[0].mxu0 %v4983
        %v5076 = vpop.f32.mrb[0].mxu0
        %v5077 = vadd.f32 0.0, %v5076
        %v5078 = vpop.f32.mrb[0].mxu0
        %5079 = vmatprep.mubr.f32.mxu0 0.0
        %5080 = vmatmul.mubr.f32.gmra.mrb[0].mxu0 %v4986
        %v5081 = vpop.f32.mrb[0].mxu0
        %v5082 = vadd.f32 0.0, %v5081
        %v5083 = vpop.f32.mrb[0].mxu0
        %5084 = vmatprep.mubr.f32.mxu0 0.0
        %5085 = vmatmul.mubr.f32.gmra.mrb[0].mxu0 %v4989
        %v5086 = vpop.f32.mrb[0].mxu0
        %v5087 = vadd.f32 0.0, %v5086
        %v5088 = vpop.f32.mrb[0].mxu0
        %5089 = vmatprep.mubr.f32.mxu0 0.0
        %5090 = vmatmul.mubr.f32.gmra.mrb[0].mxu0 %v4992
        %v5091 = vpop.f32.mrb[0].mxu0
        %v5092 = vadd.f32 0.0, %v5091
        %v5093 = vpop.f32.mrb[0].mxu0
        %5094 = vmatprep.mubr.f32.mxu0 0.0
        %5095 = vmatmul.mubr.f32.gmra.mrb[0].mxu0 %v4995
        %v5096 = vpop.f32.mrb[0].mxu0
        %v5097 = vadd.f32 0.0, %v5096
        %v5098 = vpop.f32.mrb[0].mxu0
        %5099 = vmatprep.mubr.f32.mxu0 0.0
        %5100 = vmatmul.mubr.f32.gmra.mrb[0].mxu0 %v4998
        %v5101 = vpop.f32.mrb[0].mxu0
        %v5102 = vadd.f32 0.0, %v5101
        %v5103 = vpop.f32.mrb[0].mxu0
        %5104 = vdwg.mxu0
        %v5105 = vadd.f32 %v4954, %v5067
        %v5106 = vadd.f32 %v4955, %v5072
        %v5107 = vadd.f32 %v4956, %v5077
        %v5108 = vadd.f32 %v4957, %v5082
        %v5109 = vadd.f32 %v4958, %v5087
        %v5110 = vadd.f32 %v4959, %v5092
        %v5111 = vadd.f32 %v4960, %v5097
        %v5112 = vadd.f32 %v4961, %v5102
        %v5113 = vld [vmem:[%s238 + $0x2] sm:$0xff]
        %v5114 = vld [vmem:[%s238 + $0x12] sm:$0xff]
        %v5115 = vld [vmem:[%s238 + $0x22] sm:$0xff]
        %v5116 = vld [vmem:[%s238 + $0x32] sm:$0xff]
        %v5117 = vld [vmem:[%s238 + $0x42] sm:$0xff]
        %v5118 = vld [vmem:[%s238 + $0x52] sm:$0xff]
        %v5119 = vld [vmem:[%s238 + $0x62] sm:$0xff]
        %v5120 = vld [vmem:[%s238 + $0x72] sm:$0xff]
        %s5121 = scalar_lea.vmem [#allocation3], 1280
        %v5122 = vld [vmem:[%s5121] sm:$0xff]
        %v5123 = vld [vmem:[%s5121 + $0x8] sm:$0xff]
        %v5124 = vld [vmem:[%s5121 + $0x10] sm:$0xff]
        %v5125 = vld [vmem:[%s5121 + $0x18] sm:$0xff]
        %v5126 = vld [vmem:[%s5121 + $0x20] sm:$0xff]
        %v5128 = vsel %vm231, %v5113, 0
        %v5131 = vsel %vm231, %v5114, 0
        %v5134 = vsel %vm231, %v5115, 0
        %v5137 = vsel %vm231, %v5116, 0
        %v5140 = vsel %vm231, %v5117, 0
        %v5143 = vsel %vm231, %v5118, 0
        %v5146 = vsel %vm231, %v5119, 0
        %v5149 = vsel %vm231, %v5120, 0
        %5151 = vmatprep.subr.mxu0 0.0
        %5152 = vmatpush1.msra.mxu0 %v5122
        %5153 = vmatprep.subr.mxu0 0.0
        %5154 = vmatpush1.msra.mxu0 %v5123
        %5155 = vmatprep.subr.mxu0 0.0
        %5156 = vmatpush1.msra.mxu0 %v5124
        %5157 = vmatprep.subr.mxu0 0.0
        %5158 = vmatpush1.msra.mxu0 %v5125
        %5159 = vmatprep.subr.mxu0 0.0
        %5160 = vmatpush1.msra.mxu0 %v5126
        %5161 = vmatprep.subr.mxu0 0.0
        %5162 = vmatpush1.msra.mxu0 0.0
        %5163 = vmatprep.subr.mxu0 0.0
        %5164 = vmatpush1.msra.mxu0 0.0
        %5165 = vmatprep.subr.mxu0 0.0
        %5166 = vmatpush1.msra.mxu0 0.0
        %5167 = vmatprep.subr.mxu0 0.0
        %5168 = vmatpush1.msra.mxu0 0.0
        %5169 = vmatprep.subr.mxu0 0.0
        %5170 = vmatpush1.msra.mxu0 0.0
        %5171 = vmatprep.subr.mxu0 0.0
        %5172 = vmatpush1.msra.mxu0 0.0
        %5173 = vmatprep.subr.mxu0 0.0
        %5174 = vmatpush1.msra.mxu0 0.0
        %5175 = vmatprep.subr.mxu0 0.0
        %5176 = vmatpush1.msra.mxu0 0.0
        %5177 = vmatprep.subr.mxu0 0.0
        %5178 = vmatpush1.msra.mxu0 0.0
        %5179 = vmatprep.subr.mxu0 0.0
        %5180 = vmatpush1.msra.mxu0 0.0
        %5181 = vmatprep.subr.mxu0 0.0
        %5182 = vmatpush1.msra.mxu0 0.0
        %5183 = vmatprep.subr.mxu0 0.0
        %5184 = vmatpush1.msra.mxu0 0.0
        %5185 = vmatprep.subr.mxu0 0.0
        %5186 = vmatpush1.msra.mxu0 0.0
        %5187 = vmatprep.subr.mxu0 0.0
        %5188 = vmatpush1.msra.mxu0 0.0
        %5189 = vmatprep.subr.mxu0 0.0
        %5190 = vmatpush1.msra.mxu0 0.0
        %5191 = vmatprep.subr.mxu0 0.0
        %5192 = vmatpush1.msra.mxu0 0.0
        %5193 = vmatprep.subr.mxu0 0.0
        %5194 = vmatpush1.msra.mxu0 0.0
        %5195 = vmatprep.subr.mxu0 0.0
        %5196 = vmatpush1.msra.mxu0 0.0
        %5197 = vmatprep.subr.mxu0 0.0
        %5198 = vmatpush1.msra.mxu0 0.0
        %5199 = vmatprep.subr.mxu0 0.0
        %5200 = vmatpush1.msra.mxu0 0.0
        %5201 = vmatprep.subr.mxu0 0.0
        %5202 = vmatpush1.msra.mxu0 0.0
        %5203 = vmatprep.subr.mxu0 0.0
        %5204 = vmatpush1.msra.mxu0 0.0
        %5205 = vmatprep.subr.mxu0 0.0
        %5206 = vmatpush1.msra.mxu0 0.0
        %5207 = vmatprep.subr.mxu0 0.0
        %5208 = vmatpush1.msra.mxu0 0.0
        %5209 = vmatprep.subr.mxu0 0.0
        %5210 = vmatpush1.msra.mxu0 0.0
        %5211 = vmatprep.subr.mxu0 0.0
        %5212 = vmatpush1.msra.mxu0 0.0
        %5213 = vmatprep.subr.mxu0 0.0
        %5214 = vmatpush1.msra.mxu0 0.0
        %5215 = vmatprep.mubr.f32.mxu0 0.0
        %5216 = vmatmul.mubr.f32.gmra.mrb[0].mxu0 %v5128
        %v5217 = vpop.f32.mrb[0].mxu0
        %v5218 = vadd.f32 0.0, %v5217
        %v5219 = vpop.f32.mrb[0].mxu0
        %5220 = vmatprep.mubr.f32.mxu0 0.0
        %5221 = vmatmul.mubr.f32.gmra.mrb[0].mxu0 %v5131
        %v5222 = vpop.f32.mrb[0].mxu0
        %v5223 = vadd.f32 0.0, %v5222
        %v5224 = vpop.f32.mrb[0].mxu0
        %5225 = vmatprep.mubr.f32.mxu0 0.0
        %5226 = vmatmul.mubr.f32.gmra.mrb[0].mxu0 %v5134
        %v5227 = vpop.f32.mrb[0].mxu0
        %v5228 = vadd.f32 0.0, %v5227
        %v5229 = vpop.f32.mrb[0].mxu0
        %5230 = vmatprep.mubr.f32.mxu0 0.0
        %5231 = vmatmul.mubr.f32.gmra.mrb[0].mxu0 %v5137
        %v5232 = vpop.f32.mrb[0].mxu0
        %v5233 = vadd.f32 0.0, %v5232
        %v5234 = vpop.f32.mrb[0].mxu0
        %5235 = vmatprep.mubr.f32.mxu0 0.0
        %5236 = vmatmul.mubr.f32.gmra.mrb[0].mxu0 %v5140
        %v5237 = vpop.f32.mrb[0].mxu0
        %v5238 = vadd.f32 0.0, %v5237
        %v5239 = vpop.f32.mrb[0].mxu0
        %5240 = vmatprep.mubr.f32.mxu0 0.0
        %5241 = vmatmul.mubr.f32.gmra.mrb[0].mxu0 %v5143
        %v5242 = vpop.f32.mrb[0].mxu0
        %v5243 = vadd.f32 0.0, %v5242
        %v5244 = vpop.f32.mrb[0].mxu0
        %5245 = vmatprep.mubr.f32.mxu0 0.0
        %5246 = vmatmul.mubr.f32.gmra.mrb[0].mxu0 %v5146
        %v5247 = vpop.f32.mrb[0].mxu0
        %v5248 = vadd.f32 0.0, %v5247
        %v5249 = vpop.f32.mrb[0].mxu0
        %5250 = vmatprep.mubr.f32.mxu0 0.0
        %5251 = vmatmul.mubr.f32.gmra.mrb[0].mxu0 %v5149
        %v5252 = vpop.f32.mrb[0].mxu0
        %v5253 = vadd.f32 0.0, %v5252
        %v5254 = vpop.f32.mrb[0].mxu0
        %5255 = vdwg.mxu0
        %v5256 = vadd.f32 %v5105, %v5218
        %v5257 = vadd.f32 %v5106, %v5223
        %v5258 = vadd.f32 %v5107, %v5228
        %v5259 = vadd.f32 %v5108, %v5233
        %v5260 = vadd.f32 %v5109, %v5238
        %v5261 = vadd.f32 %v5110, %v5243
        %v5262 = vadd.f32 %v5111, %v5248
        %v5263 = vadd.f32 %v5112, %v5253
        %v5264 = vld [vmem:[%s2519] sm:$0xff]
        %v5265 = vld [vmem:[%s2519 + $0x10] sm:$0xff]
        %v5266 = vld [vmem:[%s2519 + $0x20] sm:$0xff]
        %v5267 = vld [vmem:[%s2519 + $0x30] sm:$0xff]
        %v5268 = vld [vmem:[%s2519 + $0x40] sm:$0xff]
        %v5269 = vld [vmem:[%s2519 + $0x50] sm:$0xff]
        %v5270 = vld [vmem:[%s2519 + $0x60] sm:$0xff]
        %v5271 = vld [vmem:[%s2519 + $0x70] sm:$0xff]
        %s5272 = scalar_lea.vmem [#allocation3], 1320
        %v5273 = vld [vmem:[%s5272] sm:$0xff]
        %v5274 = vld [vmem:[%s5272 + $0x8] sm:$0xff]
        %v5275 = vld [vmem:[%s5272 + $0x10] sm:$0xff]
        %v5276 = vld [vmem:[%s5272 + $0x18] sm:$0xff]
        %v5277 = vld [vmem:[%s5272 + $0x20] sm:$0xff]
        %v5279 = vsel %vm231, %v5264, 0
        %v5282 = vsel %vm231, %v5265, 0
        %v5285 = vsel %vm231, %v5266, 0
        %v5288 = vsel %vm231, %v5267, 0
        %v5291 = vsel %vm231, %v5268, 0
        %v5294 = vsel %vm231, %v5269, 0
        %v5297 = vsel %vm231, %v5270, 0
        %v5300 = vsel %vm231, %v5271, 0
        %5302 = vmatprep.subr.mxu0 0.0
        %5303 = vmatpush1.msra.mxu0 %v5273
        %5304 = vmatprep.subr.mxu0 0.0
        %5305 = vmatpush1.msra.mxu0 %v5274
        %5306 = vmatprep.subr.mxu0 0.0
        %5307 = vmatpush1.msra.mxu0 %v5275
        %5308 = vmatprep.subr.mxu0 0.0
        %5309 = vmatpush1.msra.mxu0 %v5276
        %5310 = vmatprep.subr.mxu0 0.0
        %5311 = vmatpush1.msra.mxu0 %v5277
        %5312 = vmatprep.subr.mxu0 0.0
        %5313 = vmatpush1.msra.mxu0 0.0
        %5314 = vmatprep.subr.mxu0 0.0
        %5315 = vmatpush1.msra.mxu0 0.0
        %5316 = vmatprep.subr.mxu0 0.0
        %5317 = vmatpush1.msra.mxu0 0.0
        %5318 = vmatprep.subr.mxu0 0.0
        %5319 = vmatpush1.msra.mxu0 0.0
        %5320 = vmatprep.subr.mxu0 0.0
        %5321 = vmatpush1.msra.mxu0 0.0
        %5322 = vmatprep.subr.mxu0 0.0
        %5323 = vmatpush1.msra.mxu0 0.0
        %5324 = vmatprep.subr.mxu0 0.0
        %5325 = vmatpush1.msra.mxu0 0.0
        %5326 = vmatprep.subr.mxu0 0.0
        %5327 = vmatpush1.msra.mxu0 0.0
        %5328 = vmatprep.subr.mxu0 0.0
        %5329 = vmatpush1.msra.mxu0 0.0
        %5330 = vmatprep.subr.mxu0 0.0
        %5331 = vmatpush1.msra.mxu0 0.0
        %5332 = vmatprep.subr.mxu0 0.0
        %5333 = vmatpush1.msra.mxu0 0.0
        %5334 = vmatprep.subr.mxu0 0.0
        %5335 = vmatpush1.msra.mxu0 0.0
        %5336 = vmatprep.subr.mxu0 0.0
        %5337 = vmatpush1.msra.mxu0 0.0
        %5338 = vmatprep.subr.mxu0 0.0
        %5339 = vmatpush1.msra.mxu0 0.0
        %5340 = vmatprep.subr.mxu0 0.0
        %5341 = vmatpush1.msra.mxu0 0.0
        %5342 = vmatprep.subr.mxu0 0.0
        %5343 = vmatpush1.msra.mxu0 0.0
        %5344 = vmatprep.subr.mxu0 0.0
        %5345 = vmatpush1.msra.mxu0 0.0
        %5346 = vmatprep.subr.mxu0 0.0
        %5347 = vmatpush1.msra.mxu0 0.0
        %5348 = vmatprep.subr.mxu0 0.0
        %5349 = vmatpush1.msra.mxu0 0.0
        %5350 = vmatprep.subr.mxu0 0.0
        %5351 = vmatpush1.msra.mxu0 0.0
        %5352 = vmatprep.subr.mxu0 0.0
        %5353 = vmatpush1.msra.mxu0 0.0
        %5354 = vmatprep.subr.mxu0 0.0
        %5355 = vmatpush1.msra.mxu0 0.0
        %5356 = vmatprep.subr.mxu0 0.0
        %5357 = vmatpush1.msra.mxu0 0.0
        %5358 = vmatprep.subr.mxu0 0.0
        %5359 = vmatpush1.msra.mxu0 0.0
        %5360 = vmatprep.subr.mxu0 0.0
        %5361 = vmatpush1.msra.mxu0 0.0
        %5362 = vmatprep.subr.mxu0 0.0
        %5363 = vmatpush1.msra.mxu0 0.0
        %5364 = vmatprep.subr.mxu0 0.0
        %5365 = vmatpush1.msra.mxu0 0.0
        %5366 = vmatprep.mubr.f32.mxu0 0.0
        %5367 = vmatmul.mubr.f32.gmra.mrb[0].mxu0 %v5279
        %v5368 = vpop.f32.mrb[0].mxu0
        %v5369 = vadd.f32 0.0, %v5368
        %v5370 = vpop.f32.mrb[0].mxu0
        %5371 = vmatprep.mubr.f32.mxu0 0.0
        %5372 = vmatmul.mubr.f32.gmra.mrb[0].mxu0 %v5282
        %v5373 = vpop.f32.mrb[0].mxu0
        %v5374 = vadd.f32 0.0, %v5373
        %v5375 = vpop.f32.mrb[0].mxu0
        %5376 = vmatprep.mubr.f32.mxu0 0.0
        %5377 = vmatmul.mubr.f32.gmra.mrb[0].mxu0 %v5285
        %v5378 = vpop.f32.mrb[0].mxu0
        %v5379 = vadd.f32 0.0, %v5378
        %v5380 = vpop.f32.mrb[0].mxu0
        %5381 = vmatprep.mubr.f32.mxu0 0.0
        %5382 = vmatmul.mubr.f32.gmra.mrb[0].mxu0 %v5288
        %v5383 = vpop.f32.mrb[0].mxu0
        %v5384 = vadd.f32 0.0, %v5383
        %v5385 = vpop.f32.mrb[0].mxu0
        %5386 = vmatprep.mubr.f32.mxu0 0.0
        %5387 = vmatmul.mubr.f32.gmra.mrb[0].mxu0 %v5291
        %v5388 = vpop.f32.mrb[0].mxu0
        %v5389 = vadd.f32 0.0, %v5388
        %v5390 = vpop.f32.mrb[0].mxu0
        %5391 = vmatprep.mubr.f32.mxu0 0.0
        %5392 = vmatmul.mubr.f32.gmra.mrb[0].mxu0 %v5294
        %v5393 = vpop.f32.mrb[0].mxu0
        %v5394 = vadd.f32 0.0, %v5393
        %v5395 = vpop.f32.mrb[0].mxu0
        %5396 = vmatprep.mubr.f32.mxu0 0.0
        %5397 = vmatmul.mubr.f32.gmra.mrb[0].mxu0 %v5297
        %v5398 = vpop.f32.mrb[0].mxu0
        %v5399 = vadd.f32 0.0, %v5398
        %v5400 = vpop.f32.mrb[0].mxu0
        %5401 = vmatprep.mubr.f32.mxu0 0.0
        %5402 = vmatmul.mubr.f32.gmra.mrb[0].mxu0 %v5300
        %v5403 = vpop.f32.mrb[0].mxu0
        %v5404 = vadd.f32 0.0, %v5403
        %v5405 = vpop.f32.mrb[0].mxu0
        %5406 = vdwg.mxu0
        %v5407 = vadd.f32 %v5256, %v5369
        %v5408 = vadd.f32 %v5257, %v5374
        %v5409 = vadd.f32 %v5258, %v5379
        %v5410 = vadd.f32 %v5259, %v5384
        %v5411 = vadd.f32 %v5260, %v5389
        %v5412 = vadd.f32 %v5261, %v5394
        %v5413 = vadd.f32 %v5262, %v5399
        %v5414 = vadd.f32 %v5263, %v5404
        %v5415 = vld [vmem:[%s2519 + $0x1] sm:$0xff]
        %v5416 = vld [vmem:[%s2519 + $0x11] sm:$0xff]
        %v5417 = vld [vmem:[%s2519 + $0x21] sm:$0xff]
        %v5418 = vld [vmem:[%s2519 + $0x31] sm:$0xff]
        %v5419 = vld [vmem:[%s2519 + $0x41] sm:$0xff]
        %v5420 = vld [vmem:[%s2519 + $0x51] sm:$0xff]
        %v5421 = vld [vmem:[%s2519 + $0x61] sm:$0xff]
        %v5422 = vld [vmem:[%s2519 + $0x71] sm:$0xff]
        %s5423 = scalar_lea.vmem [#allocation3], 1360
        %v5424 = vld [vmem:[%s5423] sm:$0xff]
        %v5425 = vld [vmem:[%s5423 + $0x8] sm:$0xff]
        %v5426 = vld [vmem:[%s5423 + $0x10] sm:$0xff]
        %v5427 = vld [vmem:[%s5423 + $0x18] sm:$0xff]
        %v5428 = vld [vmem:[%s5423 + $0x20] sm:$0xff]
        %v5430 = vsel %vm231, %v5415, 0
        %v5433 = vsel %vm231, %v5416, 0
        %v5436 = vsel %vm231, %v5417, 0
        %v5439 = vsel %vm231, %v5418, 0
        %v5442 = vsel %vm231, %v5419, 0
        %v5445 = vsel %vm231, %v5420, 0
        %v5448 = vsel %vm231, %v5421, 0
        %v5451 = vsel %vm231, %v5422, 0
        %5453 = vmatprep.subr.mxu0 0.0
        %5454 = vmatpush1.msra.mxu0 %v5424
        %5455 = vmatprep.subr.mxu0 0.0
        %5456 = vmatpush1.msra.mxu0 %v5425
        %5457 = vmatprep.subr.mxu0 0.0
        %5458 = vmatpush1.msra.mxu0 %v5426
        %5459 = vmatprep.subr.mxu0 0.0
        %5460 = vmatpush1.msra.mxu0 %v5427
        %5461 = vmatprep.subr.mxu0 0.0
        %5462 = vmatpush1.msra.mxu0 %v5428
        %5463 = vmatprep.subr.mxu0 0.0
        %5464 = vmatpush1.msra.mxu0 0.0
        %5465 = vmatprep.subr.mxu0 0.0
        %5466 = vmatpush1.msra.mxu0 0.0
        %5467 = vmatprep.subr.mxu0 0.0
        %5468 = vmatpush1.msra.mxu0 0.0
        %5469 = vmatprep.subr.mxu0 0.0
        %5470 = vmatpush1.msra.mxu0 0.0
        %5471 = vmatprep.subr.mxu0 0.0
        %5472 = vmatpush1.msra.mxu0 0.0
        %5473 = vmatprep.subr.mxu0 0.0
        %5474 = vmatpush1.msra.mxu0 0.0
        %5475 = vmatprep.subr.mxu0 0.0
        %5476 = vmatpush1.msra.mxu0 0.0
        %5477 = vmatprep.subr.mxu0 0.0
        %5478 = vmatpush1.msra.mxu0 0.0
        %5479 = vmatprep.subr.mxu0 0.0
        %5480 = vmatpush1.msra.mxu0 0.0
        %5481 = vmatprep.subr.mxu0 0.0
        %5482 = vmatpush1.msra.mxu0 0.0
        %5483 = vmatprep.subr.mxu0 0.0
        %5484 = vmatpush1.msra.mxu0 0.0
        %5485 = vmatprep.subr.mxu0 0.0
        %5486 = vmatpush1.msra.mxu0 0.0
        %5487 = vmatprep.subr.mxu0 0.0
        %5488 = vmatpush1.msra.mxu0 0.0
        %5489 = vmatprep.subr.mxu0 0.0
        %5490 = vmatpush1.msra.mxu0 0.0
        %5491 = vmatprep.subr.mxu0 0.0
        %5492 = vmatpush1.msra.mxu0 0.0
        %5493 = vmatprep.subr.mxu0 0.0
        %5494 = vmatpush1.msra.mxu0 0.0
        %5495 = vmatprep.subr.mxu0 0.0
        %5496 = vmatpush1.msra.mxu0 0.0
        %5497 = vmatprep.subr.mxu0 0.0
        %5498 = vmatpush1.msra.mxu0 0.0
        %5499 = vmatprep.subr.mxu0 0.0
        %5500 = vmatpush1.msra.mxu0 0.0
        %5501 = vmatprep.subr.mxu0 0.0
        %5502 = vmatpush1.msra.mxu0 0.0
        %5503 = vmatprep.subr.mxu0 0.0
        %5504 = vmatpush1.msra.mxu0 0.0
        %5505 = vmatprep.subr.mxu0 0.0
        %5506 = vmatpush1.msra.mxu0 0.0
        %5507 = vmatprep.subr.mxu0 0.0
        %5508 = vmatpush1.msra.mxu0 0.0
        %5509 = vmatprep.subr.mxu0 0.0
        %5510 = vmatpush1.msra.mxu0 0.0
        %5511 = vmatprep.subr.mxu0 0.0
        %5512 = vmatpush1.msra.mxu0 0.0
        %5513 = vmatprep.subr.mxu0 0.0
        %5514 = vmatpush1.msra.mxu0 0.0
        %5515 = vmatprep.subr.mxu0 0.0
        %5516 = vmatpush1.msra.mxu0 0.0
        %5517 = vmatprep.mubr.f32.mxu0 0.0
        %5518 = vmatmul.mubr.f32.gmra.mrb[0].mxu0 %v5430
        %v5519 = vpop.f32.mrb[0].mxu0
        %v5520 = vadd.f32 0.0, %v5519
        %v5521 = vpop.f32.mrb[0].mxu0
        %5522 = vmatprep.mubr.f32.mxu0 0.0
        %5523 = vmatmul.mubr.f32.gmra.mrb[0].mxu0 %v5433
        %v5524 = vpop.f32.mrb[0].mxu0
        %v5525 = vadd.f32 0.0, %v5524
        %v5526 = vpop.f32.mrb[0].mxu0
        %5527 = vmatprep.mubr.f32.mxu0 0.0
        %5528 = vmatmul.mubr.f32.gmra.mrb[0].mxu0 %v5436
        %v5529 = vpop.f32.mrb[0].mxu0
        %v5530 = vadd.f32 0.0, %v5529
        %v5531 = vpop.f32.mrb[0].mxu0
        %5532 = vmatprep.mubr.f32.mxu0 0.0
        %5533 = vmatmul.mubr.f32.gmra.mrb[0].mxu0 %v5439
        %v5534 = vpop.f32.mrb[0].mxu0
        %v5535 = vadd.f32 0.0, %v5534
        %v5536 = vpop.f32.mrb[0].mxu0
        %5537 = vmatprep.mubr.f32.mxu0 0.0
        %5538 = vmatmul.mubr.f32.gmra.mrb[0].mxu0 %v5442
        %v5539 = vpop.f32.mrb[0].mxu0
        %v5540 = vadd.f32 0.0, %v5539
        %v5541 = vpop.f32.mrb[0].mxu0
        %5542 = vmatprep.mubr.f32.mxu0 0.0
        %5543 = vmatmul.mubr.f32.gmra.mrb[0].mxu0 %v5445
        %v5544 = vpop.f32.mrb[0].mxu0
        %v5545 = vadd.f32 0.0, %v5544
        %v5546 = vpop.f32.mrb[0].mxu0
        %5547 = vmatprep.mubr.f32.mxu0 0.0
        %5548 = vmatmul.mubr.f32.gmra.mrb[0].mxu0 %v5448
        %v5549 = vpop.f32.mrb[0].mxu0
        %v5550 = vadd.f32 0.0, %v5549
        %v5551 = vpop.f32.mrb[0].mxu0
        %5552 = vmatprep.mubr.f32.mxu0 0.0
        %5553 = vmatmul.mubr.f32.gmra.mrb[0].mxu0 %v5451
        %v5554 = vpop.f32.mrb[0].mxu0
        %v5555 = vadd.f32 0.0, %v5554
        %v5556 = vpop.f32.mrb[0].mxu0
        %5557 = vdwg.mxu0
        %v5558 = vadd.f32 %v5407, %v5520
        %v5559 = vadd.f32 %v5408, %v5525
        %v5560 = vadd.f32 %v5409, %v5530
        %v5561 = vadd.f32 %v5410, %v5535
        %v5562 = vadd.f32 %v5411, %v5540
        %v5563 = vadd.f32 %v5412, %v5545
        %v5564 = vadd.f32 %v5413, %v5550
        %v5565 = vadd.f32 %v5414, %v5555
        %v5566 = vld [vmem:[%s2519 + $0x2] sm:$0xff]
        %v5567 = vld [vmem:[%s2519 + $0x12] sm:$0xff]
        %v5568 = vld [vmem:[%s2519 + $0x22] sm:$0xff]
        %v5569 = vld [vmem:[%s2519 + $0x32] sm:$0xff]
        %v5570 = vld [vmem:[%s2519 + $0x42] sm:$0xff]
        %v5571 = vld [vmem:[%s2519 + $0x52] sm:$0xff]
        %v5572 = vld [vmem:[%s2519 + $0x62] sm:$0xff]
        %v5573 = vld [vmem:[%s2519 + $0x72] sm:$0xff]
        %s5574 = scalar_lea.vmem [#allocation3], 1400
        %v5575 = vld [vmem:[%s5574] sm:$0xff]
        %v5576 = vld [vmem:[%s5574 + $0x8] sm:$0xff]
        %v5577 = vld [vmem:[%s5574 + $0x10] sm:$0xff]
        %v5578 = vld [vmem:[%s5574 + $0x18] sm:$0xff]
        %v5579 = vld [vmem:[%s5574 + $0x20] sm:$0xff]
        %v5581 = vsel %vm231, %v5566, 0
        %v5584 = vsel %vm231, %v5567, 0
        %v5587 = vsel %vm231, %v5568, 0
        %v5590 = vsel %vm231, %v5569, 0
        %v5593 = vsel %vm231, %v5570, 0
        %v5596 = vsel %vm231, %v5571, 0
        %v5599 = vsel %vm231, %v5572, 0
        %v5602 = vsel %vm231, %v5573, 0
        %5604 = vmatprep.subr.mxu0 0.0
        %5605 = vmatpush1.msra.mxu0 %v5575
        %5606 = vmatprep.subr.mxu0 0.0
        %5607 = vmatpush1.msra.mxu0 %v5576
        %5608 = vmatprep.subr.mxu0 0.0
        %5609 = vmatpush1.msra.mxu0 %v5577
        %5610 = vmatprep.subr.mxu0 0.0
        %5611 = vmatpush1.msra.mxu0 %v5578
        %5612 = vmatprep.subr.mxu0 0.0
        %5613 = vmatpush1.msra.mxu0 %v5579
        %5614 = vmatprep.subr.mxu0 0.0
        %5615 = vmatpush1.msra.mxu0 0.0
        %5616 = vmatprep.subr.mxu0 0.0
        %5617 = vmatpush1.msra.mxu0 0.0
        %5618 = vmatprep.subr.mxu0 0.0
        %5619 = vmatpush1.msra.mxu0 0.0
        %5620 = vmatprep.subr.mxu0 0.0
        %5621 = vmatpush1.msra.mxu0 0.0
        %5622 = vmatprep.subr.mxu0 0.0
        %5623 = vmatpush1.msra.mxu0 0.0
        %5624 = vmatprep.subr.mxu0 0.0
        %5625 = vmatpush1.msra.mxu0 0.0
        %5626 = vmatprep.subr.mxu0 0.0
        %5627 = vmatpush1.msra.mxu0 0.0
        %5628 = vmatprep.subr.mxu0 0.0
        %5629 = vmatpush1.msra.mxu0 0.0
        %5630 = vmatprep.subr.mxu0 0.0
        %5631 = vmatpush1.msra.mxu0 0.0
        %5632 = vmatprep.subr.mxu0 0.0
        %5633 = vmatpush1.msra.mxu0 0.0
        %5634 = vmatprep.subr.mxu0 0.0
        %5635 = vmatpush1.msra.mxu0 0.0
        %5636 = vmatprep.subr.mxu0 0.0
        %5637 = vmatpush1.msra.mxu0 0.0
        %5638 = vmatprep.subr.mxu0 0.0
        %5639 = vmatpush1.msra.mxu0 0.0
        %5640 = vmatprep.subr.mxu0 0.0
        %5641 = vmatpush1.msra.mxu0 0.0
        %5642 = vmatprep.subr.mxu0 0.0
        %5643 = vmatpush1.msra.mxu0 0.0
        %5644 = vmatprep.subr.mxu0 0.0
        %5645 = vmatpush1.msra.mxu0 0.0
        %5646 = vmatprep.subr.mxu0 0.0
        %5647 = vmatpush1.msra.mxu0 0.0
        %5648 = vmatprep.subr.mxu0 0.0
        %5649 = vmatpush1.msra.mxu0 0.0
        %5650 = vmatprep.subr.mxu0 0.0
        %5651 = vmatpush1.msra.mxu0 0.0
        %5652 = vmatprep.subr.mxu0 0.0
        %5653 = vmatpush1.msra.mxu0 0.0
        %5654 = vmatprep.subr.mxu0 0.0
        %5655 = vmatpush1.msra.mxu0 0.0
        %5656 = vmatprep.subr.mxu0 0.0
        %5657 = vmatpush1.msra.mxu0 0.0
        %5658 = vmatprep.subr.mxu0 0.0
        %5659 = vmatpush1.msra.mxu0 0.0
        %5660 = vmatprep.subr.mxu0 0.0
        %5661 = vmatpush1.msra.mxu0 0.0
        %5662 = vmatprep.subr.mxu0 0.0
        %5663 = vmatpush1.msra.mxu0 0.0
        %5664 = vmatprep.subr.mxu0 0.0
        %5665 = vmatpush1.msra.mxu0 0.0
        %5666 = vmatprep.subr.mxu0 0.0
        %5667 = vmatpush1.msra.mxu0 0.0
        %5668 = vmatprep.mubr.f32.mxu0 0.0
        %5669 = vmatmul.mubr.f32.gmra.mrb[0].mxu0 %v5581
        %v5670 = vpop.f32.mrb[0].mxu0
        %v5671 = vadd.f32 0.0, %v5670
        %v5672 = vpop.f32.mrb[0].mxu0
        %5673 = vmatprep.mubr.f32.mxu0 0.0
        %5674 = vmatmul.mubr.f32.gmra.mrb[0].mxu0 %v5584
        %v5675 = vpop.f32.mrb[0].mxu0
        %v5676 = vadd.f32 0.0, %v5675
        %v5677 = vpop.f32.mrb[0].mxu0
        %5678 = vmatprep.mubr.f32.mxu0 0.0
        %5679 = vmatmul.mubr.f32.gmra.mrb[0].mxu0 %v5587
        %v5680 = vpop.f32.mrb[0].mxu0
        %v5681 = vadd.f32 0.0, %v5680
        %v5682 = vpop.f32.mrb[0].mxu0
        %5683 = vmatprep.mubr.f32.mxu0 0.0
        %5684 = vmatmul.mubr.f32.gmra.mrb[0].mxu0 %v5590
        %v5685 = vpop.f32.mrb[0].mxu0
        %v5686 = vadd.f32 0.0, %v5685
        %v5687 = vpop.f32.mrb[0].mxu0
        %5688 = vmatprep.mubr.f32.mxu0 0.0
        %5689 = vmatmul.mubr.f32.gmra.mrb[0].mxu0 %v5593
        %v5690 = vpop.f32.mrb[0].mxu0
        %v5691 = vadd.f32 0.0, %v5690
        %v5692 = vpop.f32.mrb[0].mxu0
        %5693 = vmatprep.mubr.f32.mxu0 0.0
        %5694 = vmatmul.mubr.f32.gmra.mrb[0].mxu0 %v5596
        %v5695 = vpop.f32.mrb[0].mxu0
        %v5696 = vadd.f32 0.0, %v5695
        %v5697 = vpop.f32.mrb[0].mxu0
        %5698 = vmatprep.mubr.f32.mxu0 0.0
        %5699 = vmatmul.mubr.f32.gmra.mrb[0].mxu0 %v5599
        %v5700 = vpop.f32.mrb[0].mxu0
        %v5701 = vadd.f32 0.0, %v5700
        %v5702 = vpop.f32.mrb[0].mxu0
        %5703 = vmatprep.mubr.f32.mxu0 0.0
        %5704 = vmatmul.mubr.f32.gmra.mrb[0].mxu0 %v5602
        %v5705 = vpop.f32.mrb[0].mxu0
        %v5706 = vadd.f32 0.0, %v5705
        %v5707 = vpop.f32.mrb[0].mxu0
        %5708 = vdwg.mxu0
        %v5709 = vadd.f32 %v5558, %v5671
        %v5710 = vadd.f32 %v5559, %v5676
        %v5711 = vadd.f32 %v5560, %v5681
        %v5712 = vadd.f32 %v5561, %v5686
        %v5713 = vadd.f32 %v5562, %v5691
        %v5714 = vadd.f32 %v5563, %v5696
        %v5715 = vadd.f32 %v5564, %v5701
        %v5716 = vadd.f32 %v5565, %v5706
        %v5717 = vld [vmem:[%s3 + $0x3] sm:$0x1]
        %v5718 = vlaneseq
        %v5719 = vshrl.u32 %v5718, 7
        %v5720 = vsub.s32 0, %v5719
        %v5721 = vrot.slane %v5717, %v5720
        %v5722 = vadd.f32 %v5709, %v5721
        %v5723 = vadd.f32 %v5710, %v5721
        %v5724 = vadd.f32 %v5711, %v5721
        %v5725 = vadd.f32 %v5712, %v5721
        %v5726 = vadd.f32 %v5713, %v5721
        %v5727 = vadd.f32 %v5714, %v5721
        %v5728 = vadd.f32 %v5715, %v5721
        %v5729 = vadd.f32 %v5716, %v5721
        %v5730 = vmax.f32 %v5722, 0.0
        %v5731 = vmax.f32 %v5723, 0.0
        %v5732 = vmax.f32 %v5724, 0.0
        %v5733 = vmax.f32 %v5725, 0.0
        %v5734 = vmax.f32 %v5726, 0.0
        %v5735 = vmax.f32 %v5727, 0.0
        %v5736 = vmax.f32 %v5728, 0.0
        %v5737 = vmax.f32 %v5729, 0.0
        %v5738 = vld [vmem:[%s230] sm:$0xff]
        %v5739 = vld [vmem:[%s230 + $0x8] sm:$0xff]
        %v5740 = vld [vmem:[%s230 + $0x10] sm:$0xff]
        %v5741 = vld [vmem:[%s230 + $0x18] sm:$0xff]
        %v5742 = vld [vmem:[%s230 + $0x20] sm:$0xff]
        %v5743 = vld [vmem:[%s230 + $0x28] sm:$0xff]
        %v5744 = vld [vmem:[%s230 + $0x30] sm:$0xff]
        %v5745 = vld [vmem:[%s230 + $0x38] sm:$0xff]
        %5754 = vrot.lane.b32.xlu0 %v5738, 4
        %v5755 = vpop.permute.xlu0 %5754
        %5756 = vrot.lane.b32.xlu0 %v5739, 4
        %v5757 = vpop.permute.xlu0 %5756
        %5758 = vrot.lane.b32.xlu0 %v5740, 4
        %v5759 = vpop.permute.xlu0 %5758
        %5760 = vrot.lane.b32.xlu0 %v5741, 4
        %v5761 = vpop.permute.xlu0 %5760
        %5762 = vrot.lane.b32.xlu0 %v5742, 4
        %v5763 = vpop.permute.xlu0 %5762
        %5764 = vrot.lane.b32.xlu0 %v5743, 4
        %v5765 = vpop.permute.xlu0 %5764
        %5766 = vrot.lane.b32.xlu0 %v5744, 4
        %v5767 = vpop.permute.xlu0 %5766
        %5768 = vrot.lane.b32.xlu0 %v5745, 4
        %v5769 = vpop.permute.xlu0 %5768
        %v5778 = vadd.f32 %v5730, %v5755
        %v5779 = vadd.f32 %v5731, %v5757
        %v5780 = vadd.f32 %v5732, %v5759
        %v5781 = vadd.f32 %v5733, %v5761
        %v5782 = vadd.f32 %v5734, %v5763
        %v5783 = vadd.f32 %v5735, %v5765
        %v5784 = vadd.f32 %v5736, %v5767
        %v5785 = vadd.f32 %v5737, %v5769
        %5794 = vrot.lane.b32.xlu0 %v5778, 124
        %v5795 = vpop.permute.xlu0 %5794
        %5796 = vrot.lane.b32.xlu0 %v5779, 124
        %v5797 = vpop.permute.xlu0 %5796
        %5798 = vrot.lane.b32.xlu0 %v5780, 124
        %v5799 = vpop.permute.xlu0 %5798
        %5800 = vrot.lane.b32.xlu0 %v5781, 124
        %v5801 = vpop.permute.xlu0 %5800
        %5802 = vrot.lane.b32.xlu0 %v5782, 124
        %v5803 = vpop.permute.xlu0 %5802
        %5804 = vrot.lane.b32.xlu0 %v5783, 124
        %v5805 = vpop.permute.xlu0 %5804
        %5806 = vrot.lane.b32.xlu0 %v5784, 124
        %v5807 = vpop.permute.xlu0 %5806
        %5808 = vrot.lane.b32.xlu0 %v5785, 124
        %v5809 = vpop.permute.xlu0 %5808
        %vm5818 = vcmask 261120
        %5819 = vst.msk [vmem:[%s220] sm:$0xff] %vm5818, %v5795
        %5820 = vst.msk [vmem:[%s220 + $0x8] sm:$0xff] %vm5818, %v5797
        %5821 = vst.msk [vmem:[%s220 + $0x10] sm:$0xff] %vm5818, %v5799
        %5822 = vst.msk [vmem:[%s220 + $0x18] sm:$0xff] %vm5818, %v5801
        %5823 = vst.msk [vmem:[%s220 + $0x20] sm:$0xff] %vm5818, %v5803
        %5824 = vst.msk [vmem:[%s220 + $0x28] sm:$0xff] %vm5818, %v5805
        %5825 = vst.msk [vmem:[%s220 + $0x30] sm:$0xff] %vm5818, %v5807
        %5826 = vst.msk [vmem:[%s220 + $0x38] sm:$0xff] %vm5818, %v5809
        %s5827 = sand.u32 %s121, 1
        %s5828 = scalar_lea.sflag [#allocation5], %s5827
        %s5829 = sand.u32 %s121, 1
        %s5830 = smul.addr %s5829, 64
        %s5831 = scalar_lea.vmem [#allocation6], %s5830
        // Predicated region
        $region41: #{tpu_custom_call.1} parent=35 // pred_check
          %p5832 = pneg %p131
        $region42: #{tpu_custom_call.1} parent=35 // pred_check_branch
          %5834 = sbr.rel (%p5832) target = $region44
        $region43: #{tpu_custom_call.1} parent=35 // pred_region
          %s5836 = ssub.s32 1024, 1024
          %5837 = vsyncadd %s5828, %s5836
          %s5838 = smul.addr %s19, 8
          %s5839 = smul.addr %s5838, 128
          %s5840 = scalar_lea.hbm %s4, %s5839
          %s5841 = sshll.u32 %s5831, 4
          %s5842 = int_to_ptr.vmem [resolvable:$true] %s5841
          %5847 = dma.vmem_to_hbm [thread:$0]  %s5842, 1024, %s5840, %s5828, 128, 128, 8
        $region44: #{tpu_custom_call.1} parent=35 // pred_fallthru
          _
      $region36: #{tpu_custom_call.1} parent=5 // pred_fallthru
        _
      %p5848 = scmp.le.s32.totalorder 2, %s14
      // Predicated region
      $region45: #{tpu_custom_call.1} parent=5 // pred_check
        %p5849 = pneg %p5848
      $region46: #{tpu_custom_call.1} parent=5 // pred_check_branch
        %5851 = sbr.rel (%p5849) target = $region48
      $region47: #{tpu_custom_call.1} parent=5 // pred_region
        %s5852 = ssub.s32 %s14, 2
        // Predicated region
        $region49: #{tpu_custom_call.1} parent=47 // pred_check
          %p5853 = pneg %p137
        $region50: #{tpu_custom_call.1} parent=47 // pred_check_branch
          %5855 = sbr.rel (%p5853) target = $region52
        $region51: #{tpu_custom_call.1} parent=47 // pred_region
          %s5856 = sand.u32 %s122, 1
          %s5857 = scalar_lea.sflag [#allocation5], %s5856
          %s5858 = sand.u32 %s122, 1
          %s5859 = smul.addr %s5858, 64
          %s5860 = scalar_lea.vmem [#allocation6], %s5859
          %5861 = dma.done %s5857, 1024
        $region52: #{tpu_custom_call.1} parent=47 // pred_fallthru
          _
      $region48: #{tpu_custom_call.1} parent=5 // pred_fallthru
        _
    $region6: #{tpu_custom_call.1} parent=1 // loop_footer
      %s18 = sadd.s32 1, %s14
    $region7: #{tpu_custom_call.1} parent=1 // loop_footer_branch
      %13 = sbr.rel target = $region3
    $region8: #{tpu_custom_call.1} parent=1 // loop_exit
      _
    %5862 = vsyncpa [#allocation4], 1
    %s5863 = scalar_lea.sflag [#allocation4], 1
    %5864 = vsyncpa %s5863, 1
    %5865 = vsyncpa [#allocation5], 1
    %s5866 = scalar_lea.sflag [#allocation5], 1
    %5867 = vsyncpa %s5866, 1

</llo_original>
